<compile_context>
chip_gen: v5e
topology: v5e:2x2
jax: 0.10.0
libtpu: 0.0.40
codegen_flags: <defaults>
</compile_context>

<pallas_src>
import functools
import math

import jax
import jax.numpy as jnp
from jax.experimental import pallas as pl
from jax.experimental.pallas import tpu as pltpu


# ----------------------------------------------------------------------------
# Feature probe: single-buffering of grid-invariant operands via pl.Buffered(1)
# ----------------------------------------------------------------------------

_SINGLE_BUF_OK = None


def _single_buffer_ok():
    """True iff this JAX supports pipeline_mode=pl.Buffered(1) on pallas_call BlockSpecs."""
    global _SINGLE_BUF_OK
    if _SINGLE_BUF_OK is None:
        try:
            x = jnp.arange(8 * 128, dtype=jnp.float32).reshape(8, 128)

            def k(x_ref, o_ref):
                o_ref[...] = x_ref[...] + 1.0

            y = pl.pallas_call(
                k,
                out_shape=jax.ShapeDtypeStruct((16, 128), jnp.float32),
                grid=(2,),
                in_specs=[pl.BlockSpec((8, 128), lambda i: (0, 0),
                                       pipeline_mode=pl.Buffered(1))],
                out_specs=pl.BlockSpec((8, 128), lambda i: (i, 0)),
            )(x)
            _SINGLE_BUF_OK = bool(jnp.allclose(y[:8], x + 1.0)) and \
                             bool(jnp.allclose(y[8:], x + 1.0))
        except Exception:
            _SINGLE_BUF_OK = False
    return _SINGLE_BUF_OK


def _wspec(shape, index_map):
    """BlockSpec for a grid-invariant (weight) operand; single-buffered when supported."""
    if _single_buffer_ok():
        return pl.BlockSpec(shape, index_map, pipeline_mode=pl.Buffered(1))
    return pl.BlockSpec(shape, index_map)


def _round_up(x, m):
    return ((x + m - 1) // m) * m


# ----------------------------------------------------------------------------
# In-kernel helpers
# ----------------------------------------------------------------------------

def _ln(x, g, b, eps=1e-5):
    """LayerNorm over the last axis. x: (N, D) f32; g, b: (1, D) f32."""
    mu = jnp.mean(x, axis=-1, keepdims=True)
    xc = x - mu
    var = jnp.mean(xc * xc, axis=-1, keepdims=True)
    return xc * jax.lax.rsqrt(var + eps) * g + b


def _mha(xq, xkv, wq, wkv, wo, bq, bk, bv, bo, nhead):
    """Multi-head attention with MXU-dense projections.

    xq: (Nq, D) f32 (already LayerNormed); xkv: (Nk, D) (cast to compute dtype inside).
    wq: (D, D), wkv: (D, 2D) packed K|V (split at D), wo: (D, D)  [compute dtype, e.g. bf16]
    bq/bk/bv/bo: (1, D) f32.   Returns (Nq, D) f32.
    """
    cdt = wq.dtype
    nq, d = xq.shape
    dh = d // nhead
    scale = 1.0 / math.sqrt(dh)

    q = jnp.dot(xq.astype(cdt), wq, preferred_element_type=jnp.float32) + bq       # (Nq, D)
    kv = jnp.dot(xkv.astype(cdt), wkv, preferred_element_type=jnp.float32)         # (Nk, 2D)
    k = kv[:, :d] + bk                                                              # (Nk, D)
    v = kv[:, d:] + bv                                                              # (Nk, D)

    # One head-major relayout per attention: lane slices + leading-axis stack (robust lowering).
    def heads(t):
        t = t.astype(cdt)
        return jnp.stack([t[:, h * dh:(h + 1) * dh] for h in range(nhead)], axis=0)  # (H,N,dh)

    qh, kh, vh = heads(q), heads(k), heads(v)

    s = jnp.einsum("hqc,hkc->hqk", qh, kh,
                   preferred_element_type=jnp.float32) * scale                     # (H, Nq, Nk)
    s = s - jnp.max(s, axis=-1, keepdims=True)                                      # stable softmax
    p = jnp.exp(s)
    p = p * pl.reciprocal(jnp.sum(p, axis=-1, keepdims=True), approx=True)

    o = jnp.einsum("hqk,hkc->hqc", p.astype(cdt), vh,
                   preferred_element_type=jnp.float32)                              # (H, Nq, dh)
    o = jnp.concatenate([o[h] for h in range(nhead)], axis=-1)                      # (Nq, D) f32
    return jnp.dot(o.astype(cdt), wo, preferred_element_type=jnp.float32) + bo      # (Nq, D)


# Packed per-block parameter slab rows (f32, width W = max(D, dff)):
#   0 g1 | 1 b1 | 2 g2 | 3 b2 | 4 bq | 5 bk | 6 bv | 7 bo | 8 b_ffn2 | 9 b_ffn1
_SLAB_ROWS = 10


def _block(x, kv, wq, wkv, wo, w1, w2, slab, nhead):
    """Pre-norm sub-layer pair: y = x + MHA(LN1(x), kv);  return y + FFN(LN2(y)).
    kv=None -> self-attention on LN1(x)."""
    d = x.shape[-1]
    dff = w1.shape[-1]
    g1, b1 = slab[0:1, :d], slab[1:2, :d]
    g2, b2 = slab[2:3, :d], slab[3:4, :d]
    bq, bk = slab[4:5, :d], slab[5:6, :d]
    bv, bo = slab[6:7, :d], slab[7:8, :d]
    bf2, bf1 = slab[8:9, :d], slab[9:10, :dff]

    h = _ln(x, g1, b1)
    y = x + _mha(h, h if kv is None else kv, wq, wkv, wo, bq, bk, bv, bo, nhead)

    h2 = _ln(y, g2, b2)
    cdt = w1.dtype
    f = jnp.maximum(jnp.dot(h2.astype(cdt), w1, preferred_element_type=jnp.float32) + bf1, 0.0)
    f = jnp.dot(f.astype(cdt), w2, preferred_element_type=jnp.float32) + bf2
    return y + f


# ----------------------------------------------------------------------------
# Encoder / decoder stacks: one pallas_call each, grid (B, num_layers)
# ----------------------------------------------------------------------------

_WKEYS = ("wq", "wkv", "wo", "w1", "w2", "slab")


def _make_encoder_kernel(nhead):
    def kernel(lat_ref, ctx_ref,
               cwq, cwkv, cwo, cw1, cw2, cslab,
               swq, swkv, swo, sw1, sw2, sslab,
               o_ref, x_scr):
        l = pl.program_id(1)

        @pl.when(l == 0)
        def _():
            x_scr[...] = lat_ref[...]            # start of a new batch element: load latents

        x = x_scr[...]                           # (Nl, D) f32 residual stream (carried across l)
        ctx = ctx_ref[0]                         # (Nc, D) compute-dtype context embeddings
        # cross-attention block (latents <- context), then self-attention block
        x = _block(x, ctx, cwq[0], cwkv[0], cwo[0], cw1[0], cw2[0], cslab[0], nhead)
        x = _block(x, None, swq[0], swkv[0], swo[0], sw1[0], sw2[0], sslab[0], nhead)
        x_scr[...] = x
        o_ref[0, 0] = x.astype(o_ref.dtype)      # per-layer context encoding (streamed bf16)
    return kernel


def encoder_forward(latents, ctx_emb, p, *, nhead, out_dtype):
    """Whole LBANP encoder stack in one pallas_call.  grid=(B, L): batch 'parallel' (megacore),
    layer 'arbitrary' (sequential carry in VMEM scratch); emits all per-layer encodings."""
    B, Nc, D = ctx_emb.shape
    Nl = latents.shape[0]
    cross, slf = p["cross"], p["self"]
    L = cross["wq"].shape[0]

    w_args = [cross[k] for k in _WKEYS] + [slf[k] for k in _WKEYS]
    w_specs = [pl.BlockSpec((1,) + a.shape[1:], lambda b, l: (l, 0, 0)) for a in w_args]

    return pl.pallas_call(
        _make_encoder_kernel(nhead),
        out_shape=jax.ShapeDtypeStruct((B, L, Nl, D), out_dtype),
        grid=(B, L),
        in_specs=[_wspec(latents.shape, lambda b, l: (0, 0)),          # grid-invariant
                  pl.BlockSpec((1, Nc, D), lambda b, l: (b, 0, 0))] + w_specs,
        out_specs=pl.BlockSpec((1, 1, Nl, D), lambda b, l: (b, l, 0, 0)),
        scratch_shapes=[pltpu.VMEM((Nl, D), jnp.float32)],
        compiler_params=pltpu.CompilerParams(
            dimension_semantics=("parallel", "arbitrary")),
    )(latents, ctx_emb, *w_args)


def _make_decoder_kernel(nhead):
    def kernel(q_ref, enc_ref, wq, wkv, wo, w1, w2, slab, o_ref):
        l = pl.program_id(1)

        @pl.when(l == 0)
        def _():
            o_ref[0] = q_ref[0]                  # init the carried query residual stream

        x = o_ref[0]                             # (Nt, D) f32, resident across the layer axis
        x = _block(x, enc_ref[0, 0], wq[0], wkv[0], wo[0], w1[0], w2[0], slab[0], nhead)
        o_ref[0] = x
    return kernel


def decoder_forward(q_emb, enc, p, *, nhead):
    """Whole NP decoder stack in one pallas_call.  grid=(B, L); the query stream is carried in
    the revisited output block; decoder layer l cross-attends to encoder encoding l."""
    B, Nt, D = q_emb.shape
    L, Nl = enc.shape[1], enc.shape[2]

    w_args = [p[k] for k in _WKEYS]
    w_specs = [pl.BlockSpec((1,) + a.shape[1:], lambda b, l: (l, 0, 0)) for a in w_args]

    return pl.pallas_call(
        _make_decoder_kernel(nhead),
        out_shape=jax.ShapeDtypeStruct((B, Nt, D), jnp.float32),
        grid=(B, L),
        in_specs=[pl.BlockSpec((1, Nt, D), lambda b, l: (b, 0, 0)),
                  pl.BlockSpec((1, 1, Nl, D), lambda b, l: (b, l, 0, 0))] + w_specs,
        out_specs=pl.BlockSpec((1, Nt, D), lambda b, l: (b, 0, 0)),
        compiler_params=pltpu.CompilerParams(
            dimension_semantics=("parallel", "arbitrary")),
    )(q_emb, enc, *w_args)


# ----------------------------------------------------------------------------
# Row-tiled fused MLP (embedder / query embedder)
# ----------------------------------------------------------------------------

_ROW_TILE = 512   # large enough for ~HBM roofline; pl.cdiv grid handles ragged tails


def _mlp_kernel(x_ref, slab_ref, *rest):
    *w_refs, o_ref = rest
    slab = slab_ref[...]
    h = x_ref[...]
    n = len(w_refs)
    for i, w_ref in enumerate(w_refs):
        w = w_ref[...]
        h = jnp.dot(h.astype(w.dtype), w, preferred_element_type=jnp.float32) \
            + slab[i:i + 1, :w.shape[-1]]
        if i < n - 1:
            h = jnp.maximum(h, 0.0)
    o_ref[...] = h.astype(o_ref.dtype)


def fused_mlp(x, p, *, out_dtype=jnp.float32):
    """Whole MLP (ReLU between layers) in one pallas_call, gridded over row blocks."""
    lead, din = x.shape[:-1], x.shape[-1]
    ws, slab = p["ws"], p["slab"]
    dout = ws[-1].shape[-1]
    x2 = x.reshape(-1, din)
    m = x2.shape[0]
    tm = m if m <= _ROW_TILE else _ROW_TILE

    in_specs = ([pl.BlockSpec((tm, din), lambda i: (i, 0)),
                 _wspec(slab.shape, lambda i: (0, 0))]
                + [_wspec(w.shape, lambda i: (0, 0)) for w in ws])
    out = pl.pallas_call(
        _mlp_kernel,
        out_shape=jax.ShapeDtypeStruct((m, dout), out_dtype),
        grid=(pl.cdiv(m, tm),),
        in_specs=in_specs,
        out_specs=pl.BlockSpec((tm, dout), lambda i: (i, 0)),
        compiler_params=pltpu.CompilerParams(dimension_semantics=("parallel",)),
    )(x2, slab, *ws)
    return out.reshape(lead + (dout,))


# ----------------------------------------------------------------------------
# Final LayerNorm + predictor + Gaussian log-likelihood, lane-dense output slab
# ----------------------------------------------------------------------------

def _tail_kernel(x_ref, y_ref, slab_ref, w1_ref, w2_ref, o_ref):
    d = x_ref.shape[-1]
    dy = y_ref.shape[-1]
    dff = w1_ref.shape[-1]
    out_w = w2_ref.shape[-1]
    slab = slab_ref[...]
    g, b = slab[0:1, :d], slab[1:2, :d]
    b1, b2 = slab[2:3, :dff], slab[3:4, :out_w]

    h = _ln(x_ref[...], g, b)                                   # final norm (norm_first=True)
    cdt = w1_ref.dtype
    f = jnp.maximum(jnp.dot(h.astype(cdt), w1_ref[...],
                            preferred_element_type=jnp.float32) + b1, 0.0)
    out = jnp.dot(f.astype(cdt), w2_ref[...],
                  preferred_element_type=jnp.float32) + b2      # (tm, out_w), 128-lane padded

    mean = out[:, :dy]
    raw = out[:, dy:2 * dy]                                     # log-std (bound_std=False)
    std = jnp.exp(raw)
    z = (y_ref[...] - mean) * jnp.exp(-raw)
    lp = -0.5 * z * z - raw - 0.5 * math.log(2.0 * math.pi)     # Normal(mean, std).log_prob(yt)
    lp_sum = jnp.sum(lp, axis=-1, keepdims=True)                # (tm, 1)
    pad = jnp.zeros((mean.shape[0], out_w - 2 * dy - 1), jnp.float32)
    # 128-lane-dense output slab: [ mean | std | per-row log-prob sum | zero pad ]
    o_ref[...] = jnp.concatenate([mean, std, lp_sum, pad], axis=-1)


def predict_tail(enc, yt, p):
    B, Nt, D = enc.shape
    dy = yt.shape[-1]
    out_w = p["w2"].shape[-1]
    m = B * Nt
    x2 = enc.reshape(m, D)
    y2 = yt.reshape(m, dy)
    tm = m if m <= _ROW_TILE else _ROW_TILE

    out = pl.pallas_call(
        _tail_kernel,
        out_shape=jax.ShapeDtypeStruct((m, out_w), jnp.float32),
        grid=(pl.cdiv(m, tm),),
        in_specs=[pl.BlockSpec((tm, D), lambda i: (i, 0)),
                  pl.BlockSpec((tm, dy), lambda i: (i, 0)),
                  _wspec(p["slab"].shape, lambda i: (0, 0)),
                  _wspec(p["w1"].shape, lambda i: (0, 0)),
                  _wspec(p["w2"].shape, lambda i: (0, 0))],
        out_specs=pl.BlockSpec((tm, out_w), lambda i: (i, 0)),
        compiler_params=pltpu.CompilerParams(dimension_semantics=("parallel",)),
    )(x2, y2, p["slab"], p["w1"], p["w2"])
    return out.reshape(B, Nt, out_w)


# ----------------------------------------------------------------------------
# Model forward (use_ar=False, reduce_ll=True path)
# ----------------------------------------------------------------------------

def lbanp_forward(params, xc, yc, xt, yt, *, nhead):
    dim_y = yt.shape[-1]
    kv_dt = params["encoder"]["cross"]["wq"].dtype   # K/V-side activations stream in this dtype

    # get_context_encoding: embed (xc, yc); run the latent-bottleneck encoder stack
    x_y_ctx = jnp.concatenate([xc, yc], axis=-1)
    ctx_emb = fused_mlp(x_y_ctx, params["embedder"], out_dtype=kv_dt)         # (B, Nc, D)
    enc = encoder_forward(params["latents"], ctx_emb, params["encoder"],
                          nhead=nhead, out_dtype=kv_dt)                       # (B, L, Nl, D)

    # get_predict_encoding: embed xt; run the decoder stack against per-layer encodings
    q_emb = fused_mlp(xt, params["query_embedder"], out_dtype=jnp.float32)    # (B, Nt, D)
    dec = decoder_forward(q_emb, enc, params["decoder"], nhead=nhead)         # (B, Nt, D)

    # predict + Normal(mean, std).log_prob(yt).sum(-1): fused LN + MLP + log-prob tail
    slab = predict_tail(dec, yt, params["tail"])                              # (B, Nt, out_w)
    mean = slab[..., :dim_y]
    std = slab[..., dim_y:2 * dim_y]
    tar_ll = jnp.mean(slab[..., 2 * dim_y])                                   # .sum(-1).mean()
    return {"tar_ll": tar_ll, "loss": -tar_ll, "mean": mean, "std": std}


# ----------------------------------------------------------------------------
# Parameter initialization (raw, PyTorch-like f32 tensors) and kernel-ready packing
# ----------------------------------------------------------------------------

def init_params(key, *, num_latents, dim_x, dim_y, d_model, emb_depth,
                dim_feedforward, num_layers):
    keys = iter(jax.random.split(key, 512))

    def lin(din, dout):
        lim = 1.0 / math.sqrt(din)
        return {"w": jax.random.uniform(next(keys), (din, dout), jnp.float32, -lim, lim),
                "b": jax.random.uniform(next(keys), (dout,), jnp.float32, -lim, lim)}

    def ln(d):
        return {"g": jnp.ones((d,), jnp.float32), "b": jnp.zeros((d,), jnp.float32)}

    def mha(d):
        lim = 1.0 / math.sqrt(d)
        w = lambda: jax.random.uniform(next(keys), (d, d), jnp.float32, -lim, lim)
        z = lambda: jnp.zeros((d,), jnp.float32)
        return {"wq": w(), "wk": w(), "wv": w(), "bq": z(), "bk": z(), "bv": z(),
                "wo": w(), "bo": z()}

    def build_mlp(din, dhid, dout, depth):
        layers = [lin(din, dhid)]
        for _ in range(depth - 2):
            layers.append(lin(dhid, dhid))
        layers.append(lin(dhid, dout))
        return layers

    def ff(d, dff):
        return {"l1": lin(d, dff), "l2": lin(dff, d)}

    def enc_layer():
        return {"norm1": ln(d_model), "cross_attn": mha(d_model),
                "norm2": ln(d_model), "ffn1": ff(d_model, dim_feedforward),
                "norm3": ln(d_model), "self_attn": mha(d_model),
                "norm4": ln(d_model), "ffn2": ff(d_model, dim_feedforward)}

    def dec_layer():
        return {"norm1": ln(d_model), "cross_attn": mha(d_model),
                "norm2": ln(d_model), "ffn": ff(d_model, dim_feedforward)}

    return {
        "latents": jax.random.normal(next(keys), (num_latents, d_model), jnp.float32),
        "embedder": build_mlp(dim_x + dim_y, d_model, d_model, emb_depth),
        "query_embedder": build_mlp(dim_x, d_model, d_model, emb_depth),
        "encoder": [enc_layer() for _ in range(num_layers)],
        "decoder": [dec_layer() for _ in range(num_layers)],
        "norm": ln(d_model),
        "predictor": [lin(d_model, dim_feedforward), lin(dim_feedforward, 2 * dim_y)],
    }


def pack_params(raw, *, nhead, compute_dtype=jnp.bfloat16):
    """Kernel-ready packing: dense attention weights with K|V fused into one (D, 2D) matmul,
    per-block LN/bias vectors consolidated into one (10, W) f32 slab, per-layer weights stacked on
    a leading L axis (layer grid axis), MXU weights pre-cast to the compute dtype, and the
    predictor's last layer zero-padded to a 128-lane multiple for a lane-dense output store."""
    cdt = compute_dtype
    d = raw["latents"].shape[-1]
    assert d % nhead == 0, "d_model must be divisible by nhead"

    def pack_block(norm1, attn, norm2, ffn):
        dff = ffn["l1"]["w"].shape[1]
        w = max(d, dff)

        def row(v):
            v = v.reshape(1, -1).astype(jnp.float32)
            return jnp.pad(v, ((0, 0), (0, w - v.shape[1])))

        slab = jnp.concatenate([
            row(norm1["g"]), row(norm1["b"]), row(norm2["g"]), row(norm2["b"]),
            row(attn["bq"]), row(attn["bk"]), row(attn["bv"]), row(attn["bo"]),
            row(ffn["l2"]["b"]), row(ffn["l1"]["b"])], axis=0)            # (_SLAB_ROWS, W)
        return {"wq": attn["wq"].astype(cdt),
                "wkv": jnp.concatenate([attn["wk"], attn["wv"]], axis=1).astype(cdt),
                "wo": attn["wo"].astype(cdt),
                "w1": ffn["l1"]["w"].astype(cdt),
                "w2": ffn["l2"]["w"].astype(cdt),
                "slab": slab}

    def stack(blocks):
        return {k: jnp.stack([blk[k] for blk in blocks], axis=0) for k in blocks[0]}

    def pack_mlp(layers):
        w = max(l["w"].shape[1] for l in layers)
        slab = jnp.concatenate(
            [jnp.pad(l["b"].reshape(1, -1).astype(jnp.float32),
                     ((0, 0), (0, w - l["w"].shape[1]))) for l in layers], axis=0)
        ws = [l["w"].astype(cdt) if l["w"].shape[0] >= 8 else l["w"].astype(jnp.float32)
              for l in layers]   # keep degenerate contraction dims in f32
        return {"ws": ws, "slab": slab}

    # final LayerNorm + predictor tail
    p0, p1 = raw["predictor"]
    dff_p, dy2 = p0["w"].shape[1], p1["w"].shape[1]
    out_w = _round_up(dy2 + 1, 128)          # lanes: mean | std | per-row log-prob sum
    wt = max(d, dff_p, out_w)

    def trow(v):
        v = v.reshape(1, -1).astype(jnp.float32)
        return jnp.pad(v, ((0, 0), (0, wt - v.shape[1])))

    tail = {"w1": p0["w"].astype(cdt),
            "w2": jnp.pad(p1["w"], ((0, 0), (0, out_w - dy2))).astype(cdt),
            "slab": jnp.concatenate([trow(raw["norm"]["g"]), trow(raw["norm"]["b"]),
                                     trow(p0["b"]), trow(p1["b"])], axis=0)}

    return {
        "latents": raw["latents"].astype(jnp.float32),
        "embedder": pack_mlp(raw["embedder"]),
        "query_embedder": pack_mlp(raw["query_embedder"]),
        "encoder": {
            "cross": stack([pack_block(p["norm1"], p["cross_attn"], p["norm2"], p["ffn1"])
                            for p in raw["encoder"]]),
            "self": stack([pack_block(p["norm3"], p["self_attn"], p["norm4"], p["ffn2"])
                           for p in raw["encoder"]]),
        },
        "decoder": stack([pack_block(p["norm1"], p["cross_attn"], p["norm2"], p["ffn"])
                          for p in raw["decoder"]]),
        "tail": tail,
    }


# ----------------------------------------------------------------------------

if __name__ == "__main__":
    # Small, module-consistent hyperparameters.
    NUM_LATENTS = 8
    DIM_X, DIM_Y = 1, 1
    D_MODEL = 32
    EMB_DEPTH = 2
    DIM_FF = 64
    NHEAD = 4
    NUM_LAYERS = 2
    B, NC, NT = 2, 8, 8
    COMPUTE_DTYPE = jnp.bfloat16   # full-rate MXU dtype on v5e/v6e/v7x; f32 accumulation in-kernel

    _single_buffer_ok()            # prime the Buffered(1) feature probe outside of any jit trace

    key = jax.random.PRNGKey(0)
    kp, kxc, kyc, kxt, kyt = jax.random.split(key, 5)

    raw_params = init_params(
        kp, num_latents=NUM_LATENTS, dim_x=DIM_X, dim_y=DIM_Y, d_model=D_MODEL,
        emb_depth=EMB_DEPTH, dim_feedforward=DIM_FF, num_layers=NUM_LAYERS)
    params = pack_params(raw_params, nhead=NHEAD, compute_dtype=COMPUTE_DTYPE)

    xc = jax.random.normal(kxc, (B, NC, DIM_X), jnp.float32)
    yc = jax.random.normal(kyc, (B, NC, DIM_Y), jnp.float32)
    xt = jax.random.normal(kxt, (B, NT, DIM_X), jnp.float32)
    yt = jax.random.normal(kyt, (B, NT, DIM_Y), jnp.float32)

    fwd = jax.jit(functools.partial(lbanp_forward, nhead=NHEAD))
    outs = fwd(params, xc, yc, xt, yt)
    jax.block_until_ready(outs)

    loss = float(outs["loss"])
    assert math.isfinite(loss), "non-finite loss"
    assert outs["mean"].shape == (B, NT, DIM_Y)
    assert outs["std"].shape == (B, NT, DIM_Y)
    print("KERNEL_OK")
</pallas_src>

<mosaic_0001>
module attributes {stable_mosaic.version = 11 : i64} {
  func.func @k(%arg0: i32, %arg1: memref<8x128xf32, #tpu.memory_space<vmem>>, %arg2: memref<8x128xf32, #tpu.memory_space<vmem>>) attributes {dimension_semantics = [#tpu.dimension_semantics<arbitrary>], iteration_bounds = array<i64: 2>, scalar_prefetch = 0 : i64, scratch_operands = 0 : i64, tpu.core_type = #tpu.core_type<tc>, window_params = [{pipeline_mode = #tpu.pipeline_mode<synchronous>, transform_indices = @transform_0, window_bounds = array<i64: 8, 128>}, {transform_indices = @transform_1, window_bounds = array<i64: 8, 128>}]} {
    %c0 = arith.constant 0 : index
    %c0_0 = arith.constant 0 : index
    %0 = vector.load %arg1[%c0, %c0_0] : memref<8x128xf32, #tpu.memory_space<vmem>>, vector<8x128xf32>
    %cst = arith.constant 1.000000e+00 : f32
    %1 = vector.broadcast %cst : f32 to vector<8x128xf32>
    %2 = arith.addf %0, %1 : vector<8x128xf32>
    %c0_1 = arith.constant 0 : index
    %c0_2 = arith.constant 0 : index
    %3 = vector.load %arg2[%c0_1, %c0_2] : memref<8x128xf32, #tpu.memory_space<vmem>>, vector<8x128xf32>
    tpu.vector_store %arg2[%c0_1, %c0_2], %2 {strides = array<i32>} : memref<8x128xf32, #tpu.memory_space<vmem>>, vector<8x128xf32>,
    return
  }
  func.func @transform_0(%arg0: i32) -> (i32, i32) {
    %c0_i32 = arith.constant 0 : i32
    %c0_i32_0 = arith.constant 0 : i32
    %c0_i32_1 = arith.constant 0 : i32
    return %c0_i32, %c0_i32_0 : i32, i32
  }
  func.func @transform_1(%arg0: i32) -> (i32, i32) {
    %c0_i32 = arith.constant 0 : i32
    %c0_i32_0 = arith.constant 0 : i32
    return %arg0, %c0_i32 : i32, i32
  }
}

module attributes {stable_mosaic.version = 11 : i64} {
  func.func @_mlp_kernel(%arg0: i32, %arg1: memref<16x1xf32, #tpu.memory_space<vmem>>, %arg2: memref<2x32xf32, #tpu.memory_space<vmem>>, %arg3: memref<1x32xf32, #tpu.memory_space<vmem>>, %arg4: memref<32x32xbf16, #tpu.memory_space<vmem>>, %arg5: memref<16x32xf32, #tpu.memory_space<vmem>>) attributes {dimension_semantics = [#tpu.dimension_semantics<parallel>], iteration_bounds = array<i64: 1>, scalar_prefetch = 0 : i64, scratch_operands = 0 : i64, tpu.core_type = #tpu.core_type<tc>, window_params = [{transform_indices = @transform_0, window_bounds = array<i64: 16, 1>}, {pipeline_mode = #tpu.pipeline_mode<synchronous>, transform_indices = @transform_1, window_bounds = array<i64: 2, 32>}, {pipeline_mode = #tpu.pipeline_mode<synchronous>, transform_indices = @transform_2, window_bounds = array<i64: 1, 32>}, {pipeline_mode = #tpu.pipeline_mode<synchronous>, transform_indices = @transform_3, window_bounds = array<i64: 32, 32>}, {transform_indices = @transform_4, window_bounds = array<i64: 16, 32>}]} {
    %c0 = arith.constant 0 : index
    %c0_0 = arith.constant 0 : index
    %0 = vector.load %arg2[%c0, %c0_0] : memref<2x32xf32, #tpu.memory_space<vmem>>, vector<2x32xf32>
    %c0_1 = arith.constant 0 : index
    %c0_2 = arith.constant 0 : index
    %1 = vector.load %arg1[%c0_1, %c0_2] : memref<16x1xf32, #tpu.memory_space<vmem>>, vector<16x1xf32>
    %c0_3 = arith.constant 0 : index
    %c0_4 = arith.constant 0 : index
    %2 = vector.load %arg3[%c0_3, %c0_4] : memref<1x32xf32, #tpu.memory_space<vmem>>, vector<1x32xf32>
    %cst = arith.constant dense<0.000000e+00> : vector<16x32xf32>
    %3 = tpu.matmul %1, %2, %cst {dimension_numbers = #tpu.dot_dimension_numbers<[1], [0], [0], [1], [0, 0, 1, 1], [], []>} : vector<16x1xf32>, vector<1x32xf32>, vector<16x32xf32> -> vector<16x32xf32>
    %4 = vector.extract_strided_slice %0 {offsets = [0, 0], sizes = [1, 32], strides = [1, 1]} : vector<2x32xf32> to vector<1x32xf32>
    %5 = vector.broadcast %4 : vector<1x32xf32> to vector<16x32xf32>
    %6 = arith.addf %3, %5 : vector<16x32xf32>
    %cst_5 = arith.constant 0.000000e+00 : f32
    %7 = vector.broadcast %cst_5 : f32 to vector<16x32xf32>
    %8 = arith.maximumf %6, %7 : vector<16x32xf32>
    %c0_6 = arith.constant 0 : index
    %c0_7 = arith.constant 0 : index
    %9 = vector.load %arg4[%c0_6, %c0_7] : memref<32x32xbf16, #tpu.memory_space<vmem>>, vector<32x32xbf16>
    %10 = arith.truncf %8 : vector<16x32xf32> to vector<16x32xbf16>
    %cst_8 = arith.constant dense<0.000000e+00> : vector<16x32xf32>
    %11 = tpu.matmul %10, %9, %cst_8 {dimension_numbers = #tpu.dot_dimension_numbers<[1], [0], [0], [1], [0, 0, 1, 1], [], []>} : vector<16x32xbf16>, vector<32x32xbf16>, vector<16x32xf32> -> vector<16x32xf32>
    %12 = vector.extract_strided_slice %0 {offsets = [1, 0], sizes = [1, 32], strides = [1, 1]} : vector<2x32xf32> to vector<1x32xf32>
    %13 = vector.broadcast %12 : vector<1x32xf32> to vector<16x32xf32>
    %14 = arith.addf %11, %13 : vector<16x32xf32>
    %c0_9 = arith.constant 0 : index
    %c0_10 = arith.constant 0 : index
    %15 = vector.load %arg5[%c0_9, %c0_10] : memref<16x32xf32, #tpu.memory_space<vmem>>, vector<16x32xf32>
    tpu.vector_store %arg5[%c0_9, %c0_10], %14 {strides = array<i32>} : memref<16x32xf32, #tpu.memory_space<vmem>>, vector<16x32xf32>,
    return
  }
  func.func @transform_0(%arg0: i32) -> (i32, i32) {
    %c0_i32 = arith.constant 0 : i32
    %c0_i32_0 = arith.constant 0 : i32
    return %arg0, %c0_i32 : i32, i32
  }
  func.func @transform_1(%arg0: i32) -> (i32, i32) {
    %c0_i32 = arith.constant 0 : i32
    %c0_i32_0 = arith.constant 0 : i32
    %c0_i32_1 = arith.constant 0 : i32
    return %c0_i32, %c0_i32_0 : i32, i32
  }
  func.func @transform_2(%arg0: i32) -> (i32, i32) {
    %c0_i32 = arith.constant 0 : i32
    %c0_i32_0 = arith.constant 0 : i32
    %c0_i32_1 = arith.constant 0 : i32
    return %c0_i32, %c0_i32_0 : i32, i32
  }
  func.func @transform_3(%arg0: i32) -> (i32, i32) {
    %c0_i32 = arith.constant 0 : i32
    %c0_i32_0 = arith.constant 0 : i32
    %c0_i32_1 = arith.constant 0 : i32
    return %c0_i32, %c0_i32_0 : i32, i32
  }
  func.func @transform_4(%arg0: i32) -> (i32, i32) {
    %c0_i32 = arith.constant 0 : i32
    %c0_i32_0 = arith.constant 0 : i32
    return %arg0, %c0_i32 : i32, i32
  }
}

module attributes {stable_mosaic.version = 11 : i64} {
  func.func @_mlp_kernel(%arg0: i32, %arg1: memref<16x2xf32, #tpu.memory_space<vmem>>, %arg2: memref<2x32xf32, #tpu.memory_space<vmem>>, %arg3: memref<2x32xf32, #tpu.memory_space<vmem>>, %arg4: memref<32x32xbf16, #tpu.memory_space<vmem>>, %arg5: memref<16x32xbf16, #tpu.memory_space<vmem>>) attributes {dimension_semantics = [#tpu.dimension_semantics<parallel>], iteration_bounds = array<i64: 1>, scalar_prefetch = 0 : i64, scratch_operands = 0 : i64, tpu.core_type = #tpu.core_type<tc>, window_params = [{transform_indices = @transform_0, window_bounds = array<i64: 16, 2>}, {pipeline_mode = #tpu.pipeline_mode<synchronous>, transform_indices = @transform_1, window_bounds = array<i64: 2, 32>}, {pipeline_mode = #tpu.pipeline_mode<synchronous>, transform_indices = @transform_2, window_bounds = array<i64: 2, 32>}, {pipeline_mode = #tpu.pipeline_mode<synchronous>, transform_indices = @transform_3, window_bounds = array<i64: 32, 32>}, {transform_indices = @transform_4, window_bounds = array<i64: 16, 32>}]} {
    %c0 = arith.constant 0 : index
    %c0_0 = arith.constant 0 : index
    %0 = vector.load %arg2[%c0, %c0_0] : memref<2x32xf32, #tpu.memory_space<vmem>>, vector<2x32xf32>
    %c0_1 = arith.constant 0 : index
    %c0_2 = arith.constant 0 : index
    %1 = vector.load %arg1[%c0_1, %c0_2] : memref<16x2xf32, #tpu.memory_space<vmem>>, vector<16x2xf32>
    %c0_3 = arith.constant 0 : index
    %c0_4 = arith.constant 0 : index
    %2 = vector.load %arg3[%c0_3, %c0_4] : memref<2x32xf32, #tpu.memory_space<vmem>>, vector<2x32xf32>
    %cst = arith.constant dense<0.000000e+00> : vector<16x32xf32>
    %3 = tpu.matmul %1, %2, %cst {dimension_numbers = #tpu.dot_dimension_numbers<[1], [0], [0], [1], [0, 0, 1, 1], [], []>} : vector<16x2xf32>, vector<2x32xf32>, vector<16x32xf32> -> vector<16x32xf32>
    %4 = vector.extract_strided_slice %0 {offsets = [0, 0], sizes = [1, 32], strides = [1, 1]} : vector<2x32xf32> to vector<1x32xf32>
    %5 = vector.broadcast %4 : vector<1x32xf32> to vector<16x32xf32>
    %6 = arith.addf %3, %5 : vector<16x32xf32>
    %cst_5 = arith.constant 0.000000e+00 : f32
    %7 = vector.broadcast %cst_5 : f32 to vector<16x32xf32>
    %8 = arith.maximumf %6, %7 : vector<16x32xf32>
    %c0_6 = arith.constant 0 : index
    %c0_7 = arith.constant 0 : index
    %9 = vector.load %arg4[%c0_6, %c0_7] : memref<32x32xbf16, #tpu.memory_space<vmem>>, vector<32x32xbf16>
    %10 = arith.truncf %8 : vector<16x32xf32> to vector<16x32xbf16>
    %cst_8 = arith.constant dense<0.000000e+00> : vector<16x32xf32>
    %11 = tpu.matmul %10, %9, %cst_8 {dimension_numbers = #tpu.dot_dimension_numbers<[1], [0], [0], [1], [0, 0, 1, 1], [], []>} : vector<16x32xbf16>, vector<32x32xbf16>, vector<16x32xf32> -> vector<16x32xf32>
    %12 = vector.extract_strided_slice %0 {offsets = [1, 0], sizes = [1, 32], strides = [1, 1]} : vector<2x32xf32> to vector<1x32xf32>
    %13 = vector.broadcast %12 : vector<1x32xf32> to vector<16x32xf32>
    %14 = arith.addf %11, %13 : vector<16x32xf32>
    %15 = arith.truncf %14 : vector<16x32xf32> to vector<16x32xbf16>
    %c0_9 = arith.constant 0 : index
    %c0_10 = arith.constant 0 : index
    %16 = vector.load %arg5[%c0_9, %c0_10] : memref<16x32xbf16, #tpu.memory_space<vmem>>, vector<16x32xbf16>
    tpu.vector_store %arg5[%c0_9, %c0_10], %15 {strides = array<i32>} : memref<16x32xbf16, #tpu.memory_space<vmem>>, vector<16x32xbf16>,
    return
  }
  func.func @transform_0(%arg0: i32) -> (i32, i32) {
    %c0_i32 = arith.constant 0 : i32
    %c0_i32_0 = arith.constant 0 : i32
    return %arg0, %c0_i32 : i32, i32
  }
  func.func @transform_1(%arg0: i32) -> (i32, i32) {
    %c0_i32 = arith.constant 0 : i32
    %c0_i32_0 = arith.constant 0 : i32
    %c0_i32_1 = arith.constant 0 : i32
    return %c0_i32, %c0_i32_0 : i32, i32
  }
  func.func @transform_2(%arg0: i32) -> (i32, i32) {
    %c0_i32 = arith.constant 0 : i32
    %c0_i32_0 = arith.constant 0 : i32
    %c0_i32_1 = arith.constant 0 : i32
    return %c0_i32, %c0_i32_0 : i32, i32
  }
  func.func @transform_3(%arg0: i32) -> (i32, i32) {
    %c0_i32 = arith.constant 0 : i32
    %c0_i32_0 = arith.constant 0 : i32
    %c0_i32_1 = arith.constant 0 : i32
    return %c0_i32, %c0_i32_0 : i32, i32
  }
  func.func @transform_4(%arg0: i32) -> (i32, i32) {
    %c0_i32 = arith.constant 0 : i32
    %c0_i32_0 = arith.constant 0 : i32
    return %arg0, %c0_i32 : i32, i32
  }
}

module attributes {stable_mosaic.version = 11 : i64} {
  func.func @kernel(%arg0: i32, %arg1: i32, %arg2: memref<8x32xf32, #tpu.memory_space<vmem>>, %arg3: memref<1x8x32xbf16, #tpu.memory_space<vmem>>, %arg4: memref<1x32x32xbf16, #tpu.memory_space<vmem>>, %arg5: memref<1x32x64xbf16, #tpu.memory_space<vmem>>, %arg6: memref<1x32x32xbf16, #tpu.memory_space<vmem>>, %arg7: memref<1x32x64xbf16, #tpu.memory_space<vmem>>, %arg8: memref<1x64x32xbf16, #tpu.memory_space<vmem>>, %arg9: memref<1x10x64xf32, #tpu.memory_space<vmem>>, %arg10: memref<1x32x32xbf16, #tpu.memory_space<vmem>>, %arg11: memref<1x32x64xbf16, #tpu.memory_space<vmem>>, %arg12: memref<1x32x32xbf16, #tpu.memory_space<vmem>>, %arg13: memref<1x32x64xbf16, #tpu.memory_space<vmem>>, %arg14: memref<1x64x32xbf16, #tpu.memory_space<vmem>>, %arg15: memref<1x10x64xf32, #tpu.memory_space<vmem>>, %arg16: memref<1x1x8x32xbf16, #tpu.memory_space<vmem>>, %arg17: memref<8x32xf32, #tpu.memory_space<vmem>>) attributes {dimension_semantics = [#tpu.dimension_semantics<parallel>, #tpu.dimension_semantics<arbitrary>], iteration_bounds = array<i64: 2, 2>, scalar_prefetch = 0 : i64, scratch_operands = 1 : i64, tpu.core_type = #tpu.core_type<tc>, window_params = [{pipeline_mode = #tpu.pipeline_mode<synchronous>, transform_indices = @transform_0, window_bounds = array<i64: 8, 32>}, {transform_indices = @transform_1, window_bounds = array<i64: 1, 8, 32>}, {transform_indices = @transform_2, window_bounds = array<i64: 1, 32, 32>}, {transform_indices = @transform_3, window_bounds = array<i64: 1, 32, 64>}, {transform_indices = @transform_4, window_bounds = array<i64: 1, 32, 32>}, {transform_indices = @transform_5, window_bounds = array<i64: 1, 32, 64>}, {transform_indices = @transform_6, window_bounds = array<i64: 1, 64, 32>}, {transform_indices = @transform_7, window_bounds = array<i64: 1, 10, 64>}, {transform_indices = @transform_8, window_bounds = array<i64: 1, 32, 32>}, {transform_indices = @transform_9, window_bounds = array<i64: 1, 32, 64>}, {transform_indices = @transform_10, window_bounds = array<i64: 1, 32, 32>}, {transform_indices = @transform_11, window_bounds = array<i64: 1, 32, 64>}, {transform_indices = @transform_12, window_bounds = array<i64: 1, 64, 32>}, {transform_indices = @transform_13, window_bounds = array<i64: 1, 10, 64>}, {transform_indices = @transform_14, window_bounds = array<i64: 1, 1, 8, 32>}]} {
    %c0_i32 = arith.constant 0 : i32
    %0 = arith.cmpi eq, %arg1, %c0_i32 : i32
    %1 = arith.extui %0 : i1 to i32
    %c0_i32_0 = arith.constant 0 : i32
    %2 = arith.cmpi ne, %1, %c0_i32_0 : i32
    scf.if %2 {
      %c0_88 = arith.constant 0 : index
      %c0_89 = arith.constant 0 : index
      %298 = vector.load %arg2[%c0_88, %c0_89] : memref<8x32xf32, #tpu.memory_space<vmem>>, vector<8x32xf32>
      %c0_90 = arith.constant 0 : index
      %c0_91 = arith.constant 0 : index
      %299 = vector.load %arg17[%c0_90, %c0_91] : memref<8x32xf32, #tpu.memory_space<vmem>>, vector<8x32xf32>
      tpu.vector_store %arg17[%c0_90, %c0_91], %298 {strides = array<i32>} : memref<8x32xf32, #tpu.memory_space<vmem>>, vector<8x32xf32>,
    } else {
    }
    %c0 = arith.constant 0 : index
    %c0_1 = arith.constant 0 : index
    %3 = vector.load %arg17[%c0, %c0_1] : memref<8x32xf32, #tpu.memory_space<vmem>>, vector<8x32xf32>
    %c0_2 = arith.constant 0 : index
    %c0_3 = arith.constant 0 : index
    %c0_4 = arith.constant 0 : index
    %4 = vector.load %arg3[%c0_2, %c0_3, %c0_4] : memref<1x8x32xbf16, #tpu.memory_space<vmem>>, vector<1x8x32xbf16>
    %5 = vector.shape_cast %4 : vector<1x8x32xbf16> to vector<8x32xbf16>
    %c0_5 = arith.constant 0 : index
    %c0_6 = arith.constant 0 : index
    %c0_7 = arith.constant 0 : index
    %6 = vector.load %arg4[%c0_5, %c0_6, %c0_7] : memref<1x32x32xbf16, #tpu.memory_space<vmem>>, vector<1x32x32xbf16>
    %7 = vector.shape_cast %6 : vector<1x32x32xbf16> to vector<32x32xbf16>
    %c0_8 = arith.constant 0 : index
    %c0_9 = arith.constant 0 : index
    %c0_10 = arith.constant 0 : index
    %8 = vector.load %arg5[%c0_8, %c0_9, %c0_10] : memref<1x32x64xbf16, #tpu.memory_space<vmem>>, vector<1x32x64xbf16>
    %9 = vector.shape_cast %8 : vector<1x32x64xbf16> to vector<32x64xbf16>
    %c0_11 = arith.constant 0 : index
    %c0_12 = arith.constant 0 : index
    %c0_13 = arith.constant 0 : index
    %10 = vector.load %arg6[%c0_11, %c0_12, %c0_13] : memref<1x32x32xbf16, #tpu.memory_space<vmem>>, vector<1x32x32xbf16>
    %11 = vector.shape_cast %10 : vector<1x32x32xbf16> to vector<32x32xbf16>
    %c0_14 = arith.constant 0 : index
    %c0_15 = arith.constant 0 : index
    %c0_16 = arith.constant 0 : index
    %12 = vector.load %arg7[%c0_14, %c0_15, %c0_16] : memref<1x32x64xbf16, #tpu.memory_space<vmem>>, vector<1x32x64xbf16>
    %13 = vector.shape_cast %12 : vector<1x32x64xbf16> to vector<32x64xbf16>
    %c0_17 = arith.constant 0 : index
    %c0_18 = arith.constant 0 : index
    %c0_19 = arith.constant 0 : index
    %14 = vector.load %arg8[%c0_17, %c0_18, %c0_19] : memref<1x64x32xbf16, #tpu.memory_space<vmem>>, vector<1x64x32xbf16>
    %15 = vector.shape_cast %14 : vector<1x64x32xbf16> to vector<64x32xbf16>
    %c0_20 = arith.constant 0 : index
    %c0_21 = arith.constant 0 : index
    %c0_22 = arith.constant 0 : index
    %16 = vector.load %arg9[%c0_20, %c0_21, %c0_22] : memref<1x10x64xf32, #tpu.memory_space<vmem>>, vector<1x10x64xf32>
    %17 = vector.shape_cast %16 : vector<1x10x64xf32> to vector<10x64xf32>
    %18 = vector.extract_strided_slice %17 {offsets = [0, 0], sizes = [1, 32], strides = [1, 1]} : vector<10x64xf32> to vector<1x32xf32>
    %19 = vector.extract_strided_slice %17 {offsets = [1, 0], sizes = [1, 32], strides = [1, 1]} : vector<10x64xf32> to vector<1x32xf32>
    %20 = vector.extract_strided_slice %17 {offsets = [2, 0], sizes = [1, 32], strides = [1, 1]} : vector<10x64xf32> to vector<1x32xf32>
    %21 = vector.extract_strided_slice %17 {offsets = [3, 0], sizes = [1, 32], strides = [1, 1]} : vector<10x64xf32> to vector<1x32xf32>
    %22 = vector.extract_strided_slice %17 {offsets = [4, 0], sizes = [1, 32], strides = [1, 1]} : vector<10x64xf32> to vector<1x32xf32>
    %23 = vector.extract_strided_slice %17 {offsets = [5, 0], sizes = [1, 32], strides = [1, 1]} : vector<10x64xf32> to vector<1x32xf32>
    %24 = vector.extract_strided_slice %17 {offsets = [6, 0], sizes = [1, 32], strides = [1, 1]} : vector<10x64xf32> to vector<1x32xf32>
    %25 = vector.extract_strided_slice %17 {offsets = [7, 0], sizes = [1, 32], strides = [1, 1]} : vector<10x64xf32> to vector<1x32xf32>
    %26 = vector.extract_strided_slice %17 {offsets = [8, 0], sizes = [1, 32], strides = [1, 1]} : vector<10x64xf32> to vector<1x32xf32>
    %27 = vector.extract_strided_slice %17 {offsets = [9, 0], sizes = [1, 64], strides = [1, 1]} : vector<10x64xf32> to vector<1x64xf32>
    %cst = arith.constant dense<0.000000e+00> : vector<8xf32>
    %28 = vector.multi_reduction <add>, %3, %cst [1] : vector<8x32xf32> to vector<8xf32>
    %29 = vector.shape_cast %28 : vector<8xf32> to vector<8x1xf32>
    %cst_23 = arith.constant 3.200000e+01 : f32
    %30 = vector.broadcast %cst_23 : f32 to vector<8x1xf32>
    %31 = arith.divf %29, %30 : vector<8x1xf32>
    %32 = vector.broadcast %31 : vector<8x1xf32> to vector<8x32xf32>
    %33 = arith.subf %3, %32 : vector<8x32xf32>
    %34 = arith.mulf %33, %33 : vector<8x32xf32>
    %cst_24 = arith.constant dense<0.000000e+00> : vector<8xf32>
    %35 = vector.multi_reduction <add>, %34, %cst_24 [1] : vector<8x32xf32> to vector<8xf32>
    %36 = vector.shape_cast %35 : vector<8xf32> to vector<8x1xf32>
    %cst_25 = arith.constant 3.200000e+01 : f32
    %37 = vector.broadcast %cst_25 : f32 to vector<8x1xf32>
    %38 = arith.divf %36, %37 : vector<8x1xf32>
    %cst_26 = arith.constant 9.99999974E-6 : f32
    %39 = vector.broadcast %cst_26 : f32 to vector<8x1xf32>
    %40 = arith.addf %38, %39 : vector<8x1xf32>
    %41 = math.rsqrt %40 : vector<8x1xf32>
    %42 = vector.broadcast %41 : vector<8x1xf32> to vector<8x32xf32>
    %43 = arith.mulf %33, %42 : vector<8x32xf32>
    %44 = vector.broadcast %18 : vector<1x32xf32> to vector<8x32xf32>
    %45 = arith.mulf %43, %44 : vector<8x32xf32>
    %46 = vector.broadcast %19 : vector<1x32xf32> to vector<8x32xf32>
    %47 = arith.addf %45, %46 : vector<8x32xf32>
    %48 = arith.truncf %47 : vector<8x32xf32> to vector<8x32xbf16>
    %cst_27 = arith.constant dense<0.000000e+00> : vector<8x32xf32>
    %49 = tpu.matmul %48, %7, %cst_27 {dimension_numbers = #tpu.dot_dimension_numbers<[1], [0], [0], [1], [0, 0, 1, 1], [], []>} : vector<8x32xbf16>, vector<32x32xbf16>, vector<8x32xf32> -> vector<8x32xf32>
    %50 = vector.broadcast %22 : vector<1x32xf32> to vector<8x32xf32>
    %51 = arith.addf %49, %50 : vector<8x32xf32>
    %cst_28 = arith.constant dense<0.000000e+00> : vector<8x64xf32>
    %52 = tpu.matmul %5, %9, %cst_28 {dimension_numbers = #tpu.dot_dimension_numbers<[1], [0], [0], [1], [0, 0, 1, 1], [], []>} : vector<8x32xbf16>, vector<32x64xbf16>, vector<8x64xf32> -> vector<8x64xf32>
    %53 = vector.extract_strided_slice %52 {offsets = [0, 0], sizes = [8, 32], strides = [1, 1]} : vector<8x64xf32> to vector<8x32xf32>
    %54 = vector.broadcast %23 : vector<1x32xf32> to vector<8x32xf32>
    %55 = arith.addf %53, %54 : vector<8x32xf32>
    %56 = vector.extract_strided_slice %52 {offsets = [0, 32], sizes = [8, 32], strides = [1, 1]} : vector<8x64xf32> to vector<8x32xf32>
    %57 = vector.broadcast %24 : vector<1x32xf32> to vector<8x32xf32>
    %58 = arith.addf %56, %57 : vector<8x32xf32>
    %59 = arith.truncf %51 : vector<8x32xf32> to vector<8x32xbf16>
    %60 = vector.extract_strided_slice %59 {offsets = [0, 0], sizes = [8, 8], strides = [1, 1]} : vector<8x32xbf16> to vector<8x8xbf16>
    %61 = vector.extract_strided_slice %59 {offsets = [0, 8], sizes = [8, 8], strides = [1, 1]} : vector<8x32xbf16> to vector<8x8xbf16>
    %62 = vector.extract_strided_slice %59 {offsets = [0, 16], sizes = [8, 8], strides = [1, 1]} : vector<8x32xbf16> to vector<8x8xbf16>
    %63 = vector.extract_strided_slice %59 {offsets = [0, 24], sizes = [8, 8], strides = [1, 1]} : vector<8x32xbf16> to vector<8x8xbf16>
    %64 = vector.shape_cast %60 : vector<8x8xbf16> to vector<1x8x8xbf16>
    %65 = vector.shape_cast %61 : vector<8x8xbf16> to vector<1x8x8xbf16>
    %66 = vector.shape_cast %62 : vector<8x8xbf16> to vector<1x8x8xbf16>
    %67 = vector.shape_cast %63 : vector<8x8xbf16> to vector<1x8x8xbf16>
    %68 = tpu.concatenate %64, %65, %66, %67 in 0 : vector<1x8x8xbf16>, vector<1x8x8xbf16>, vector<1x8x8xbf16>, vector<1x8x8xbf16> -> vector<4x8x8xbf16>
    %69 = arith.truncf %55 : vector<8x32xf32> to vector<8x32xbf16>
    %70 = vector.extract_strided_slice %69 {offsets = [0, 0], sizes = [8, 8], strides = [1, 1]} : vector<8x32xbf16> to vector<8x8xbf16>
    %71 = vector.extract_strided_slice %69 {offsets = [0, 8], sizes = [8, 8], strides = [1, 1]} : vector<8x32xbf16> to vector<8x8xbf16>
    %72 = vector.extract_strided_slice %69 {offsets = [0, 16], sizes = [8, 8], strides = [1, 1]} : vector<8x32xbf16> to vector<8x8xbf16>
    %73 = vector.extract_strided_slice %69 {offsets = [0, 24], sizes = [8, 8], strides = [1, 1]} : vector<8x32xbf16> to vector<8x8xbf16>
    %74 = vector.shape_cast %70 : vector<8x8xbf16> to vector<1x8x8xbf16>
    %75 = vector.shape_cast %71 : vector<8x8xbf16> to vector<1x8x8xbf16>
    %76 = vector.shape_cast %72 : vector<8x8xbf16> to vector<1x8x8xbf16>
    %77 = vector.shape_cast %73 : vector<8x8xbf16> to vector<1x8x8xbf16>
    %78 = tpu.concatenate %74, %75, %76, %77 in 0 : vector<1x8x8xbf16>, vector<1x8x8xbf16>, vector<1x8x8xbf16>, vector<1x8x8xbf16> -> vector<4x8x8xbf16>
    %79 = arith.truncf %58 : vector<8x32xf32> to vector<8x32xbf16>
    %80 = vector.extract_strided_slice %79 {offsets = [0, 0], sizes = [8, 8], strides = [1, 1]} : vector<8x32xbf16> to vector<8x8xbf16>
    %81 = vector.extract_strided_slice %79 {offsets = [0, 8], sizes = [8, 8], strides = [1, 1]} : vector<8x32xbf16> to vector<8x8xbf16>
    %82 = vector.extract_strided_slice %79 {offsets = [0, 16], sizes = [8, 8], strides = [1, 1]} : vector<8x32xbf16> to vector<8x8xbf16>
    %83 = vector.extract_strided_slice %79 {offsets = [0, 24], sizes = [8, 8], strides = [1, 1]} : vector<8x32xbf16> to vector<8x8xbf16>
    %84 = vector.shape_cast %80 : vector<8x8xbf16> to vector<1x8x8xbf16>
    %85 = vector.shape_cast %81 : vector<8x8xbf16> to vector<1x8x8xbf16>
    %86 = vector.shape_cast %82 : vector<8x8xbf16> to vector<1x8x8xbf16>
    %87 = vector.shape_cast %83 : vector<8x8xbf16> to vector<1x8x8xbf16>
    %88 = tpu.concatenate %84, %85, %86, %87 in 0 : vector<1x8x8xbf16>, vector<1x8x8xbf16>, vector<1x8x8xbf16>, vector<1x8x8xbf16> -> vector<4x8x8xbf16>
    "tpu.trace_start"() <{level = 10 : i32, message = "hqc,hkc->hqk"}> : () -> ()
    %cst_29 = arith.constant dense<0.000000e+00> : vector<4x8x8xf32>
    %89 = tpu.matmul %68, %78, %cst_29 {dimension_numbers = #tpu.dot_dimension_numbers<[2], [2], [1], [1], [0, 0, 0, 1, 1, 1], [0], [0]>} : vector<4x8x8xbf16>, vector<4x8x8xbf16>, vector<4x8x8xf32> -> vector<4x8x8xf32>
    "tpu.trace_stop"() : () -> ()
    %cst_30 = arith.constant 0.353553385 : f32
    %90 = vector.broadcast %cst_30 : f32 to vector<4x8x8xf32>
    %91 = arith.mulf %89, %90 : vector<4x8x8xf32>
    %cst_31 = arith.constant dense<0xFF800000> : vector<4x8xf32>
    %92 = vector.multi_reduction <maximumf>, %91, %cst_31 [2] : vector<4x8x8xf32> to vector<4x8xf32>
    %93 = vector.shape_cast %92 : vector<4x8xf32> to vector<4x8x1xf32>
    %94 = vector.broadcast %93 : vector<4x8x1xf32> to vector<4x8x8xf32>
    %95 = arith.subf %91, %94 : vector<4x8x8xf32>
    %96 = math.exp %95 : vector<4x8x8xf32>
    %cst_32 = arith.constant dense<0.000000e+00> : vector<4x8xf32>
    %97 = vector.multi_reduction <add>, %96, %cst_32 [2] : vector<4x8x8xf32> to vector<4x8xf32>
    %98 = vector.shape_cast %97 : vector<4x8xf32> to vector<4x8x1xf32>
    %99 = tpu.reciprocal %98 {approx = true} : vector<4x8x1xf32> -> vector<4x8x1xf32>
    %100 = vector.broadcast %99 : vector<4x8x1xf32> to vector<4x8x8xf32>
    %101 = arith.mulf %96, %100 : vector<4x8x8xf32>
    %102 = arith.truncf %101 : vector<4x8x8xf32> to vector<4x8x8xbf16>
    "tpu.trace_start"() <{level = 10 : i32, message = "hqk,hkc->hqc"}> : () -> ()
    %cst_33 = arith.constant dense<0.000000e+00> : vector<4x8x8xf32>
    %103 = tpu.matmul %102, %88, %cst_33 {dimension_numbers = #tpu.dot_dimension_numbers<[2], [1], [1], [2], [0, 0, 0, 1, 1, 2], [0], [0]>} : vector<4x8x8xbf16>, vector<4x8x8xbf16>, vector<4x8x8xf32> -> vector<4x8x8xf32>
    "tpu.trace_stop"() : () -> ()
    %104 = vector.extract_strided_slice %103 {offsets = [0, 0, 0], sizes = [1, 8, 8], strides = [1, 1, 1]} : vector<4x8x8xf32> to vector<1x8x8xf32>
    %105 = vector.shape_cast %104 : vector<1x8x8xf32> to vector<8x8xf32>
    %106 = vector.extract_strided_slice %103 {offsets = [1, 0, 0], sizes = [1, 8, 8], strides = [1, 1, 1]} : vector<4x8x8xf32> to vector<1x8x8xf32>
    %107 = vector.shape_cast %106 : vector<1x8x8xf32> to vector<8x8xf32>
    %108 = vector.extract_strided_slice %103 {offsets = [2, 0, 0], sizes = [1, 8, 8], strides = [1, 1, 1]} : vector<4x8x8xf32> to vector<1x8x8xf32>
    %109 = vector.shape_cast %108 : vector<1x8x8xf32> to vector<8x8xf32>
    %110 = vector.extract_strided_slice %103 {offsets = [3, 0, 0], sizes = [1, 8, 8], strides = [1, 1, 1]} : vector<4x8x8xf32> to vector<1x8x8xf32>
    %111 = vector.shape_cast %110 : vector<1x8x8xf32> to vector<8x8xf32>
    %112 = tpu.concatenate %105, %107, %109, %111 in 1 : vector<8x8xf32>, vector<8x8xf32>, vector<8x8xf32>, vector<8x8xf32> -> vector<8x32xf32>
    %113 = arith.truncf %112 : vector<8x32xf32> to vector<8x32xbf16>
    %cst_34 = arith.constant dense<0.000000e+00> : vector<8x32xf32>
    %114 = tpu.matmul %113, %11, %cst_34 {dimension_numbers = #tpu.dot_dimension_numbers<[1], [0], [0], [1], [0, 0, 1, 1], [], []>} : vector<8x32xbf16>, vector<32x32xbf16>, vector<8x32xf32> -> vector<8x32xf32>
    %115 = vector.broadcast %25 : vector<1x32xf32> to vector<8x32xf32>
    %116 = arith.addf %114, %115 : vector<8x32xf32>
    %117 = arith.addf %3, %116 : vector<8x32xf32>
    %cst_35 = arith.constant dense<0.000000e+00> : vector<8xf32>
    %118 = vector.multi_reduction <add>, %117, %cst_35 [1] : vector<8x32xf32> to vector<8xf32>
    %119 = vector.shape_cast %118 : vector<8xf32> to vector<8x1xf32>
    %cst_36 = arith.constant 3.200000e+01 : f32
    %120 = vector.broadcast %cst_36 : f32 to vector<8x1xf32>
    %121 = arith.divf %119, %120 : vector<8x1xf32>
    %122 = vector.broadcast %121 : vector<8x1xf32> to vector<8x32xf32>
    %123 = arith.subf %117, %122 : vector<8x32xf32>
    %124 = arith.mulf %123, %123 : vector<8x32xf32>
    %cst_37 = arith.constant dense<0.000000e+00> : vector<8xf32>
    %125 = vector.multi_reduction <add>, %124, %cst_37 [1] : vector<8x32xf32> to vector<8xf32>
    %126 = vector.shape_cast %125 : vector<8xf32> to vector<8x1xf32>
    %cst_38 = arith.constant 3.200000e+01 : f32
    %127 = vector.broadcast %cst_38 : f32 to vector<8x1xf32>
    %128 = arith.divf %126, %127 : vector<8x1xf32>
    %cst_39 = arith.constant 9.99999974E-6 : f32
    %129 = vector.broadcast %cst_39 : f32 to vector<8x1xf32>
    %130 = arith.addf %128, %129 : vector<8x1xf32>
    %131 = math.rsqrt %130 : vector<8x1xf32>
    %132 = vector.broadcast %131 : vector<8x1xf32> to vector<8x32xf32>
    %133 = arith.mulf %123, %132 : vector<8x32xf32>
    %134 = vector.broadcast %20 : vector<1x32xf32> to vector<8x32xf32>
    %135 = arith.mulf %133, %134 : vector<8x32xf32>
    %136 = vector.broadcast %21 : vector<1x32xf32> to vector<8x32xf32>
    %137 = arith.addf %135, %136 : vector<8x32xf32>
    %138 = arith.truncf %137 : vector<8x32xf32> to vector<8x32xbf16>
    %cst_40 = arith.constant dense<0.000000e+00> : vector<8x64xf32>
    %139 = tpu.matmul %138, %13, %cst_40 {dimension_numbers = #tpu.dot_dimension_numbers<[1], [0], [0], [1], [0, 0, 1, 1], [], []>} : vector<8x32xbf16>, vector<32x64xbf16>, vector<8x64xf32> -> vector<8x64xf32>
    %140 = vector.broadcast %27 : vector<1x64xf32> to vector<8x64xf32>
    %141 = arith.addf %139, %140 : vector<8x64xf32>
    %cst_41 = arith.constant 0.000000e+00 : f32
    %142 = vector.broadcast %cst_41 : f32 to vector<8x64xf32>
    %143 = arith.maximumf %141, %142 : vector<8x64xf32>
    %144 = arith.truncf %143 : vector<8x64xf32> to vector<8x64xbf16>
    %cst_42 = arith.constant dense<0.000000e+00> : vector<8x32xf32>
    %145 = tpu.matmul %144, %15, %cst_42 {dimension_numbers = #tpu.dot_dimension_numbers<[1], [0], [0], [1], [0, 0, 1, 1], [], []>} : vector<8x64xbf16>, vector<64x32xbf16>, vector<8x32xf32> -> vector<8x32xf32>
    %146 = vector.broadcast %26 : vector<1x32xf32> to vector<8x32xf32>
    %147 = arith.addf %145, %146 : vector<8x32xf32>
    %148 = arith.addf %117, %147 : vector<8x32xf32>
    %c0_43 = arith.constant 0 : index
    %c0_44 = arith.constant 0 : index
    %c0_45 = arith.constant 0 : index
    %149 = vector.load %arg10[%c0_43, %c0_44, %c0_45] : memref<1x32x32xbf16, #tpu.memory_space<vmem>>, vector<1x32x32xbf16>
    %150 = vector.shape_cast %149 : vector<1x32x32xbf16> to vector<32x32xbf16>
    %c0_46 = arith.constant 0 : index
    %c0_47 = arith.constant 0 : index
    %c0_48 = arith.constant 0 : index
    %151 = vector.load %arg11[%c0_46, %c0_47, %c0_48] : memref<1x32x64xbf16, #tpu.memory_space<vmem>>, vector<1x32x64xbf16>
    %152 = vector.shape_cast %151 : vector<1x32x64xbf16> to vector<32x64xbf16>
    %c0_49 = arith.constant 0 : index
    %c0_50 = arith.constant 0 : index
    %c0_51 = arith.constant 0 : index
    %153 = vector.load %arg12[%c0_49, %c0_50, %c0_51] : memref<1x32x32xbf16, #tpu.memory_space<vmem>>, vector<1x32x32xbf16>
    %154 = vector.shape_cast %153 : vector<1x32x32xbf16> to vector<32x32xbf16>
    %c0_52 = arith.constant 0 : index
    %c0_53 = arith.constant 0 : index
    %c0_54 = arith.constant 0 : index
    %155 = vector.load %arg13[%c0_52, %c0_53, %c0_54] : memref<1x32x64xbf16, #tpu.memory_space<vmem>>, vector<1x32x64xbf16>
    %156 = vector.shape_cast %155 : vector<1x32x64xbf16> to vector<32x64xbf16>
    %c0_55 = arith.constant 0 : index
    %c0_56 = arith.constant 0 : index
    %c0_57 = arith.constant 0 : index
    %157 = vector.load %arg14[%c0_55, %c0_56, %c0_57] : memref<1x64x32xbf16, #tpu.memory_space<vmem>>, vector<1x64x32xbf16>
    %158 = vector.shape_cast %157 : vector<1x64x32xbf16> to vector<64x32xbf16>
    %c0_58 = arith.constant 0 : index
    %c0_59 = arith.constant 0 : index
    %c0_60 = arith.constant 0 : index
    %159 = vector.load %arg15[%c0_58, %c0_59, %c0_60] : memref<1x10x64xf32, #tpu.memory_space<vmem>>, vector<1x10x64xf32>
    %160 = vector.shape_cast %159 : vector<1x10x64xf32> to vector<10x64xf32>
    %161 = vector.extract_strided_slice %160 {offsets = [0, 0], sizes = [1, 32], strides = [1, 1]} : vector<10x64xf32> to vector<1x32xf32>
    %162 = vector.extract_strided_slice %160 {offsets = [1, 0], sizes = [1, 32], strides = [1, 1]} : vector<10x64xf32> to vector<1x32xf32>
    %163 = vector.extract_strided_slice %160 {offsets = [2, 0], sizes = [1, 32], strides = [1, 1]} : vector<10x64xf32> to vector<1x32xf32>
    %164 = vector.extract_strided_slice %160 {offsets = [3, 0], sizes = [1, 32], strides = [1, 1]} : vector<10x64xf32> to vector<1x32xf32>
    %165 = vector.extract_strided_slice %160 {offsets = [4, 0], sizes = [1, 32], strides = [1, 1]} : vector<10x64xf32> to vector<1x32xf32>
    %166 = vector.extract_strided_slice %160 {offsets = [5, 0], sizes = [1, 32], strides = [1, 1]} : vector<10x64xf32> to vector<1x32xf32>
    %167 = vector.extract_strided_slice %160 {offsets = [6, 0], sizes = [1, 32], strides = [1, 1]} : vector<10x64xf32> to vector<1x32xf32>
    %168 = vector.extract_strided_slice %160 {offsets = [7, 0], sizes = [1, 32], strides = [1, 1]} : vector<10x64xf32> to vector<1x32xf32>
    %169 = vector.extract_strided_slice %160 {offsets = [8, 0], sizes = [1, 32], strides = [1, 1]} : vector<10x64xf32> to vector<1x32xf32>
    %170 = vector.extract_strided_slice %160 {offsets = [9, 0], sizes = [1, 64], strides = [1, 1]} : vector<10x64xf32> to vector<1x64xf32>
    %cst_61 = arith.constant dense<0.000000e+00> : vector<8xf32>
    %171 = vector.multi_reduction <add>, %148, %cst_61 [1] : vector<8x32xf32> to vector<8xf32>
    %172 = vector.shape_cast %171 : vector<8xf32> to vector<8x1xf32>
    %cst_62 = arith.constant 3.200000e+01 : f32
    %173 = vector.broadcast %cst_62 : f32 to vector<8x1xf32>
    %174 = arith.divf %172, %173 : vector<8x1xf32>
    %175 = vector.broadcast %174 : vector<8x1xf32> to vector<8x32xf32>
    %176 = arith.subf %148, %175 : vector<8x32xf32>
    %177 = arith.mulf %176, %176 : vector<8x32xf32>
    %cst_63 = arith.constant dense<0.000000e+00> : vector<8xf32>
    %178 = vector.multi_reduction <add>, %177, %cst_63 [1] : vector<8x32xf32> to vector<8xf32>
    %179 = vector.shape_cast %178 : vector<8xf32> to vector<8x1xf32>
    %cst_64 = arith.constant 3.200000e+01 : f32
    %180 = vector.broadcast %cst_64 : f32 to vector<8x1xf32>
    %181 = arith.divf %179, %180 : vector<8x1xf32>
    %cst_65 = arith.constant 9.99999974E-6 : f32
    %182 = vector.broadcast %cst_65 : f32 to vector<8x1xf32>
    %183 = arith.addf %181, %182 : vector<8x1xf32>
    %184 = math.rsqrt %183 : vector<8x1xf32>
    %185 = vector.broadcast %184 : vector<8x1xf32> to vector<8x32xf32>
    %186 = arith.mulf %176, %185 : vector<8x32xf32>
    %187 = vector.broadcast %161 : vector<1x32xf32> to vector<8x32xf32>
    %188 = arith.mulf %186, %187 : vector<8x32xf32>
    %189 = vector.broadcast %162 : vector<1x32xf32> to vector<8x32xf32>
    %190 = arith.addf %188, %189 : vector<8x32xf32>
    %191 = arith.truncf %190 : vector<8x32xf32> to vector<8x32xbf16>
    %cst_66 = arith.constant dense<0.000000e+00> : vector<8x32xf32>
    %192 = tpu.matmul %191, %150, %cst_66 {dimension_numbers = #tpu.dot_dimension_numbers<[1], [0], [0], [1], [0, 0, 1, 1], [], []>} : vector<8x32xbf16>, vector<32x32xbf16>, vector<8x32xf32> -> vector<8x32xf32>
    %193 = vector.broadcast %165 : vector<1x32xf32> to vector<8x32xf32>
    %194 = arith.addf %192, %193 : vector<8x32xf32>
    %195 = arith.truncf %190 : vector<8x32xf32> to vector<8x32xbf16>
    %cst_67 = arith.constant dense<0.000000e+00> : vector<8x64xf32>
    %196 = tpu.matmul %195, %152, %cst_67 {dimension_numbers = #tpu.dot_dimension_numbers<[1], [0], [0], [1], [0, 0, 1, 1], [], []>} : vector<8x32xbf16>, vector<32x64xbf16>, vector<8x64xf32> -> vector<8x64xf32>
    %197 = vector.extract_strided_slice %196 {offsets = [0, 0], sizes = [8, 32], strides = [1, 1]} : vector<8x64xf32> to vector<8x32xf32>
    %198 = vector.broadcast %166 : vector<1x32xf32> to vector<8x32xf32>
    %199 = arith.addf %197, %198 : vector<8x32xf32>
    %200 = vector.extract_strided_slice %196 {offsets = [0, 32], sizes = [8, 32], strides = [1, 1]} : vector<8x64xf32> to vector<8x32xf32>
    %201 = vector.broadcast %167 : vector<1x32xf32> to vector<8x32xf32>
    %202 = arith.addf %200, %201 : vector<8x32xf32>
    %203 = arith.truncf %194 : vector<8x32xf32> to vector<8x32xbf16>
    %204 = vector.extract_strided_slice %203 {offsets = [0, 0], sizes = [8, 8], strides = [1, 1]} : vector<8x32xbf16> to vector<8x8xbf16>
    %205 = vector.extract_strided_slice %203 {offsets = [0, 8], sizes = [8, 8], strides = [1, 1]} : vector<8x32xbf16> to vector<8x8xbf16>
    %206 = vector.extract_strided_slice %203 {offsets = [0, 16], sizes = [8, 8], strides = [1, 1]} : vector<8x32xbf16> to vector<8x8xbf16>
    %207 = vector.extract_strided_slice %203 {offsets = [0, 24], sizes = [8, 8], strides = [1, 1]} : vector<8x32xbf16> to vector<8x8xbf16>
    %208 = vector.shape_cast %204 : vector<8x8xbf16> to vector<1x8x8xbf16>
    %209 = vector.shape_cast %205 : vector<8x8xbf16> to vector<1x8x8xbf16>
    %210 = vector.shape_cast %206 : vector<8x8xbf16> to vector<1x8x8xbf16>
    %211 = vector.shape_cast %207 : vector<8x8xbf16> to vector<1x8x8xbf16>
    %212 = tpu.concatenate %208, %209, %210, %211 in 0 : vector<1x8x8xbf16>, vector<1x8x8xbf16>, vector<1x8x8xbf16>, vector<1x8x8xbf16> -> vector<4x8x8xbf16>
    %213 = arith.truncf %199 : vector<8x32xf32> to vector<8x32xbf16>
    %214 = vector.extract_strided_slice %213 {offsets = [0, 0], sizes = [8, 8], strides = [1, 1]} : vector<8x32xbf16> to vector<8x8xbf16>
    %215 = vector.extract_strided_slice %213 {offsets = [0, 8], sizes = [8, 8], strides = [1, 1]} : vector<8x32xbf16> to vector<8x8xbf16>
    %216 = vector.extract_strided_slice %213 {offsets = [0, 16], sizes = [8, 8], strides = [1, 1]} : vector<8x32xbf16> to vector<8x8xbf16>
    %217 = vector.extract_strided_slice %213 {offsets = [0, 24], sizes = [8, 8], strides = [1, 1]} : vector<8x32xbf16> to vector<8x8xbf16>
    %218 = vector.shape_cast %214 : vector<8x8xbf16> to vector<1x8x8xbf16>
    %219 = vector.shape_cast %215 : vector<8x8xbf16> to vector<1x8x8xbf16>
    %220 = vector.shape_cast %216 : vector<8x8xbf16> to vector<1x8x8xbf16>
    %221 = vector.shape_cast %217 : vector<8x8xbf16> to vector<1x8x8xbf16>
    %222 = tpu.concatenate %218, %219, %220, %221 in 0 : vector<1x8x8xbf16>, vector<1x8x8xbf16>, vector<1x8x8xbf16>, vector<1x8x8xbf16> -> vector<4x8x8xbf16>
    %223 = arith.truncf %202 : vector<8x32xf32> to vector<8x32xbf16>
    %224 = vector.extract_strided_slice %223 {offsets = [0, 0], sizes = [8, 8], strides = [1, 1]} : vector<8x32xbf16> to vector<8x8xbf16>
    %225 = vector.extract_strided_slice %223 {offsets = [0, 8], sizes = [8, 8], strides = [1, 1]} : vector<8x32xbf16> to vector<8x8xbf16>
    %226 = vector.extract_strided_slice %223 {offsets = [0, 16], sizes = [8, 8], strides = [1, 1]} : vector<8x32xbf16> to vector<8x8xbf16>
    %227 = vector.extract_strided_slice %223 {offsets = [0, 24], sizes = [8, 8], strides = [1, 1]} : vector<8x32xbf16> to vector<8x8xbf16>
    %228 = vector.shape_cast %224 : vector<8x8xbf16> to vector<1x8x8xbf16>
    %229 = vector.shape_cast %225 : vector<8x8xbf16> to vector<1x8x8xbf16>
    %230 = vector.shape_cast %226 : vector<8x8xbf16> to vector<1x8x8xbf16>
    %231 = vector.shape_cast %227 : vector<8x8xbf16> to vector<1x8x8xbf16>
    %232 = tpu.concatenate %228, %229, %230, %231 in 0 : vector<1x8x8xbf16>, vector<1x8x8xbf16>, vector<1x8x8xbf16>, vector<1x8x8xbf16> -> vector<4x8x8xbf16>
    "tpu.trace_start"() <{level = 10 : i32, message = "hqc,hkc->hqk"}> : () -> ()
    %cst_68 = arith.constant dense<0.000000e+00> : vector<4x8x8xf32>
    %233 = tpu.matmul %212, %222, %cst_68 {dimension_numbers = #tpu.dot_dimension_numbers<[2], [2], [1], [1], [0, 0, 0, 1, 1, 1], [0], [0]>} : vector<4x8x8xbf16>, vector<4x8x8xbf16>, vector<4x8x8xf32> -> vector<4x8x8xf32>
    "tpu.trace_stop"() : () -> ()
    %cst_69 = arith.constant 0.353553385 : f32
    %234 = vector.broadcast %cst_69 : f32 to vector<4x8x8xf32>
    %235 = arith.mulf %233, %234 : vector<4x8x8xf32>
    %cst_70 = arith.constant dense<0xFF800000> : vector<4x8xf32>
    %236 = vector.multi_reduction <maximumf>, %235, %cst_70 [2] : vector<4x8x8xf32> to vector<4x8xf32>
    %237 = vector.shape_cast %236 : vector<4x8xf32> to vector<4x8x1xf32>
    %238 = vector.broadcast %237 : vector<4x8x1xf32> to vector<4x8x8xf32>
    %239 = arith.subf %235, %238 : vector<4x8x8xf32>
    %240 = math.exp %239 : vector<4x8x8xf32>
    %cst_71 = arith.constant dense<0.000000e+00> : vector<4x8xf32>
    %241 = vector.multi_reduction <add>, %240, %cst_71 [2] : vector<4x8x8xf32> to vector<4x8xf32>
    %242 = vector.shape_cast %241 : vector<4x8xf32> to vector<4x8x1xf32>
    %243 = tpu.reciprocal %242 {approx = true} : vector<4x8x1xf32> -> vector<4x8x1xf32>
    %244 = vector.broadcast %243 : vector<4x8x1xf32> to vector<4x8x8xf32>
    %245 = arith.mulf %240, %244 : vector<4x8x8xf32>
    %246 = arith.truncf %245 : vector<4x8x8xf32> to vector<4x8x8xbf16>
    "tpu.trace_start"() <{level = 10 : i32, message = "hqk,hkc->hqc"}> : () -> ()
    %cst_72 = arith.constant dense<0.000000e+00> : vector<4x8x8xf32>
    %247 = tpu.matmul %246, %232, %cst_72 {dimension_numbers = #tpu.dot_dimension_numbers<[2], [1], [1], [2], [0, 0, 0, 1, 1, 2], [0], [0]>} : vector<4x8x8xbf16>, vector<4x8x8xbf16>, vector<4x8x8xf32> -> vector<4x8x8xf32>
    "tpu.trace_stop"() : () -> ()
    %248 = vector.extract_strided_slice %247 {offsets = [0, 0, 0], sizes = [1, 8, 8], strides = [1, 1, 1]} : vector<4x8x8xf32> to vector<1x8x8xf32>
    %249 = vector.shape_cast %248 : vector<1x8x8xf32> to vector<8x8xf32>
    %250 = vector.extract_strided_slice %247 {offsets = [1, 0, 0], sizes = [1, 8, 8], strides = [1, 1, 1]} : vector<4x8x8xf32> to vector<1x8x8xf32>
    %251 = vector.shape_cast %250 : vector<1x8x8xf32> to vector<8x8xf32>
    %252 = vector.extract_strided_slice %247 {offsets = [2, 0, 0], sizes = [1, 8, 8], strides = [1, 1, 1]} : vector<4x8x8xf32> to vector<1x8x8xf32>
    %253 = vector.shape_cast %252 : vector<1x8x8xf32> to vector<8x8xf32>
    %254 = vector.extract_strided_slice %247 {offsets = [3, 0, 0], sizes = [1, 8, 8], strides = [1, 1, 1]} : vector<4x8x8xf32> to vector<1x8x8xf32>
    %255 = vector.shape_cast %254 : vector<1x8x8xf32> to vector<8x8xf32>
    %256 = tpu.concatenate %249, %251, %253, %255 in 1 : vector<8x8xf32>, vector<8x8xf32>, vector<8x8xf32>, vector<8x8xf32> -> vector<8x32xf32>
    %257 = arith.truncf %256 : vector<8x32xf32> to vector<8x32xbf16>
    %cst_73 = arith.constant dense<0.000000e+00> : vector<8x32xf32>
    %258 = tpu.matmul %257, %154, %cst_73 {dimension_numbers = #tpu.dot_dimension_numbers<[1], [0], [0], [1], [0, 0, 1, 1], [], []>} : vector<8x32xbf16>, vector<32x32xbf16>, vector<8x32xf32> -> vector<8x32xf32>
    %259 = vector.broadcast %168 : vector<1x32xf32> to vector<8x32xf32>
    %260 = arith.addf %258, %259 : vector<8x32xf32>
    %261 = arith.addf %148, %260 : vector<8x32xf32>
    %cst_74 = arith.constant dense<0.000000e+00> : vector<8xf32>
    %262 = vector.multi_reduction <add>, %261, %cst_74 [1] : vector<8x32xf32> to vector<8xf32>
    %263 = vector.shape_cast %262 : vector<8xf32> to vector<8x1xf32>
    %cst_75 = arith.constant 3.200000e+01 : f32
    %264 = vector.broadcast %cst_75 : f32 to vector<8x1xf32>
    %265 = arith.divf %263, %264 : vector<8x1xf32>
    %266 = vector.broadcast %265 : vector<8x1xf32> to vector<8x32xf32>
    %267 = arith.subf %261, %266 : vector<8x32xf32>
    %268 = arith.mulf %267, %267 : vector<8x32xf32>
    %cst_76 = arith.constant dense<0.000000e+00> : vector<8xf32>
    %269 = vector.multi_reduction <add>, %268, %cst_76 [1] : vector<8x32xf32> to vector<8xf32>
    %270 = vector.shape_cast %269 : vector<8xf32> to vector<8x1xf32>
    %cst_77 = arith.constant 3.200000e+01 : f32
    %271 = vector.broadcast %cst_77 : f32 to vector<8x1xf32>
    %272 = arith.divf %270, %271 : vector<8x1xf32>
    %cst_78 = arith.constant 9.99999974E-6 : f32
    %273 = vector.broadcast %cst_78 : f32 to vector<8x1xf32>
    %274 = arith.addf %272, %273 : vector<8x1xf32>
    %275 = math.rsqrt %274 : vector<8x1xf32>
    %276 = vector.broadcast %275 : vector<8x1xf32> to vector<8x32xf32>
    %277 = arith.mulf %267, %276 : vector<8x32xf32>
    %278 = vector.broadcast %163 : vector<1x32xf32> to vector<8x32xf32>
    %279 = arith.mulf %277, %278 : vector<8x32xf32>
    %280 = vector.broadcast %164 : vector<1x32xf32> to vector<8x32xf32>
    %281 = arith.addf %279, %280 : vector<8x32xf32>
    %282 = arith.truncf %281 : vector<8x32xf32> to vector<8x32xbf16>
    %cst_79 = arith.constant dense<0.000000e+00> : vector<8x64xf32>
    %283 = tpu.matmul %282, %156, %cst_79 {dimension_numbers = #tpu.dot_dimension_numbers<[1], [0], [0], [1], [0, 0, 1, 1], [], []>} : vector<8x32xbf16>, vector<32x64xbf16>, vector<8x64xf32> -> vector<8x64xf32>
    %284 = vector.broadcast %170 : vector<1x64xf32> to vector<8x64xf32>
    %285 = arith.addf %283, %284 : vector<8x64xf32>
    %cst_80 = arith.constant 0.000000e+00 : f32
    %286 = vector.broadcast %cst_80 : f32 to vector<8x64xf32>
    %287 = arith.maximumf %285, %286 : vector<8x64xf32>
    %288 = arith.truncf %287 : vector<8x64xf32> to vector<8x64xbf16>
    %cst_81 = arith.constant dense<0.000000e+00> : vector<8x32xf32>
    %289 = tpu.matmul %288, %158, %cst_81 {dimension_numbers = #tpu.dot_dimension_numbers<[1], [0], [0], [1], [0, 0, 1, 1], [], []>} : vector<8x64xbf16>, vector<64x32xbf16>, vector<8x32xf32> -> vector<8x32xf32>
    %290 = vector.broadcast %169 : vector<1x32xf32> to vector<8x32xf32>
    %291 = arith.addf %289, %290 : vector<8x32xf32>
    %292 = arith.addf %261, %291 : vector<8x32xf32>
    %c0_82 = arith.constant 0 : index
    %c0_83 = arith.constant 0 : index
    %293 = vector.load %arg17[%c0_82, %c0_83] : memref<8x32xf32, #tpu.memory_space<vmem>>, vector<8x32xf32>
    tpu.vector_store %arg17[%c0_82, %c0_83], %292 {strides = array<i32>} : memref<8x32xf32, #tpu.memory_space<vmem>>, vector<8x32xf32>,
    %294 = arith.truncf %292 : vector<8x32xf32> to vector<8x32xbf16>
    %c0_84 = arith.constant 0 : index
    %c0_85 = arith.constant 0 : index
    %c0_86 = arith.constant 0 : index
    %c0_87 = arith.constant 0 : index
    %295 = vector.load %arg16[%c0_84, %c0_85, %c0_86, %c0_87] : memref<1x1x8x32xbf16, #tpu.memory_space<vmem>>, vector<1x1x8x32xbf16>
    %296 = vector.shape_cast %295 : vector<1x1x8x32xbf16> to vector<8x32xbf16>
    %297 = vector.shape_cast %294 : vector<8x32xbf16> to vector<1x1x8x32xbf16>
    tpu.vector_store %arg16[%c0_84, %c0_85, %c0_86, %c0_87], %297 {strides = array<i32>} : memref<1x1x8x32xbf16, #tpu.memory_space<vmem>>, vector<1x1x8x32xbf16>,
    return
  }
  func.func @transform_0(%arg0: i32, %arg1: i32) -> (i32, i32) {
    %c0_i32 = arith.constant 0 : i32
    %c0_i32_0 = arith.constant 0 : i32
    %c0_i32_1 = arith.constant 0 : i32
    return %c0_i32, %c0_i32_0 : i32, i32
  }
  func.func @transform_1(%arg0: i32, %arg1: i32) -> (i32, i32, i32) {
    %c0_i32 = arith.constant 0 : i32
    %c0_i32_0 = arith.constant 0 : i32
    %c0_i32_1 = arith.constant 0 : i32
    return %arg0, %c0_i32, %c0_i32_0 : i32, i32, i32
  }
  func.func @transform_2(%arg0: i32, %arg1: i32) -> (i32, i32, i32) {
    %c0_i32 = arith.constant 0 : i32
    %c0_i32_0 = arith.constant 0 : i32
    %c0_i32_1 = arith.constant 0 : i32
    return %arg1, %c0_i32, %c0_i32_0 : i32, i32, i32
  }
  func.func @transform_3(%arg0: i32, %arg1: i32) -> (i32, i32, i32) {
    %c0_i32 = arith.constant 0 : i32
    %c0_i32_0 = arith.constant 0 : i32
    %c0_i32_1 = arith.constant 0 : i32
    return %arg1, %c0_i32, %c0_i32_0 : i32, i32, i32
  }
  func.func @transform_4(%arg0: i32, %arg1: i32) -> (i32, i32, i32) {
    %c0_i32 = arith.constant 0 : i32
    %c0_i32_0 = arith.constant 0 : i32
    %c0_i32_1 = arith.constant 0 : i32
    return %arg1, %c0_i32, %c0_i32_0 : i32, i32, i32
  }
  func.func @transform_5(%arg0: i32, %arg1: i32) -> (i32, i32, i32) {
    %c0_i32 = arith.constant 0 : i32
    %c0_i32_0 = arith.constant 0 : i32
    %c0_i32_1 = arith.constant 0 : i32
    return %arg1, %c0_i32, %c0_i32_0 : i32, i32, i32
  }
  func.func @transform_6(%arg0: i32, %arg1: i32) -> (i32, i32, i32) {
    %c0_i32 = arith.constant 0 : i32
    %c0_i32_0 = arith.constant 0 : i32
    %c0_i32_1 = arith.constant 0 : i32
    return %arg1, %c0_i32, %c0_i32_0 : i32, i32, i32
  }
  func.func @transform_7(%arg0: i32, %arg1: i32) -> (i32, i32, i32) {
    %c0_i32 = arith.constant 0 : i32
    %c0_i32_0 = arith.constant 0 : i32
    %c0_i32_1 = arith.constant 0 : i32
    return %arg1, %c0_i32, %c0_i32_0 : i32, i32, i32
  }
  func.func @transform_8(%arg0: i32, %arg1: i32) -> (i32, i32, i32) {
    %c0_i32 = arith.constant 0 : i32
    %c0_i32_0 = arith.constant 0 : i32
    %c0_i32_1 = arith.constant 0 : i32
    return %arg1, %c0_i32, %c0_i32_0 : i32, i32, i32
  }
  func.func @transform_9(%arg0: i32, %arg1: i32) -> (i32, i32, i32) {
    %c0_i32 = arith.constant 0 : i32
    %c0_i32_0 = arith.constant 0 : i32
    %c0_i32_1 = arith.constant 0 : i32
    return %arg1, %c0_i32, %c0_i32_0 : i32, i32, i32
  }
  func.func @transform_10(%arg0: i32, %arg1: i32) -> (i32, i32, i32) {
    %c0_i32 = arith.constant 0 : i32
    %c0_i32_0 = arith.constant 0 : i32
    %c0_i32_1 = arith.constant 0 : i32
    return %arg1, %c0_i32, %c0_i32_0 : i32, i32, i32
  }
  func.func @transform_11(%arg0: i32, %arg1: i32) -> (i32, i32, i32) {
    %c0_i32 = arith.constant 0 : i32
    %c0_i32_0 = arith.constant 0 : i32
    %c0_i32_1 = arith.constant 0 : i32
    return %arg1, %c0_i32, %c0_i32_0 : i32, i32, i32
  }
  func.func @transform_12(%arg0: i32, %arg1: i32) -> (i32, i32, i32) {
    %c0_i32 = arith.constant 0 : i32
    %c0_i32_0 = arith.constant 0 : i32
    %c0_i32_1 = arith.constant 0 : i32
    return %arg1, %c0_i32, %c0_i32_0 : i32, i32, i32
  }
  func.func @transform_13(%arg0: i32, %arg1: i32) -> (i32, i32, i32) {
    %c0_i32 = arith.constant 0 : i32
    %c0_i32_0 = arith.constant 0 : i32
    %c0_i32_1 = arith.constant 0 : i32
    return %arg1, %c0_i32, %c0_i32_0 : i32, i32, i32
  }
  func.func @transform_14(%arg0: i32, %arg1: i32) -> (i32, i32, i32, i32) {
    %c0_i32 = arith.constant 0 : i32
    %c0_i32_0 = arith.constant 0 : i32
    %c0_i32_1 = arith.constant 0 : i32
    return %arg0, %arg1, %c0_i32, %c0_i32_0 : i32, i32, i32, i32
  }
}

module attributes {stable_mosaic.version = 11 : i64} {
  func.func @kernel(%arg0: i32, %arg1: i32, %arg2: memref<1x8x32xf32, #tpu.memory_space<vmem>>, %arg3: memref<1x1x8x32xbf16, #tpu.memory_space<vmem>>, %arg4: memref<1x32x32xbf16, #tpu.memory_space<vmem>>, %arg5: memref<1x32x64xbf16, #tpu.memory_space<vmem>>, %arg6: memref<1x32x32xbf16, #tpu.memory_space<vmem>>, %arg7: memref<1x32x64xbf16, #tpu.memory_space<vmem>>, %arg8: memref<1x64x32xbf16, #tpu.memory_space<vmem>>, %arg9: memref<1x10x64xf32, #tpu.memory_space<vmem>>, %arg10: memref<1x8x32xf32, #tpu.memory_space<vmem>>) attributes {dimension_semantics = [#tpu.dimension_semantics<parallel>, #tpu.dimension_semantics<arbitrary>], iteration_bounds = array<i64: 2, 2>, scalar_prefetch = 0 : i64, scratch_operands = 0 : i64, tpu.core_type = #tpu.core_type<tc>, window_params = [{transform_indices = @transform_0, window_bounds = array<i64: 1, 8, 32>}, {transform_indices = @transform_1, window_bounds = array<i64: 1, 1, 8, 32>}, {transform_indices = @transform_2, window_bounds = array<i64: 1, 32, 32>}, {transform_indices = @transform_3, window_bounds = array<i64: 1, 32, 64>}, {transform_indices = @transform_4, window_bounds = array<i64: 1, 32, 32>}, {transform_indices = @transform_5, window_bounds = array<i64: 1, 32, 64>}, {transform_indices = @transform_6, window_bounds = array<i64: 1, 64, 32>}, {transform_indices = @transform_7, window_bounds = array<i64: 1, 10, 64>}, {transform_indices = @transform_8, window_bounds = array<i64: 1, 8, 32>}]} {
    %c0_i32 = arith.constant 0 : i32
    %0 = arith.cmpi eq, %arg1, %c0_i32 : i32
    %1 = arith.extui %0 : i1 to i32
    %c0_i32_0 = arith.constant 0 : i32
    %2 = arith.cmpi ne, %1, %c0_i32_0 : i32
    scf.if %2 {
      %c0_48 = arith.constant 0 : index
      %c0_49 = arith.constant 0 : index
      %c0_50 = arith.constant 0 : index
      %153 = vector.load %arg2[%c0_48, %c0_49, %c0_50] : memref<1x8x32xf32, #tpu.memory_space<vmem>>, vector<1x8x32xf32>
      %154 = vector.shape_cast %153 : vector<1x8x32xf32> to vector<8x32xf32>
      %c0_51 = arith.constant 0 : index
      %c0_52 = arith.constant 0 : index
      %c0_53 = arith.constant 0 : index
      %155 = vector.load %arg10[%c0_51, %c0_52, %c0_53] : memref<1x8x32xf32, #tpu.memory_space<vmem>>, vector<1x8x32xf32>
      %156 = vector.shape_cast %155 : vector<1x8x32xf32> to vector<8x32xf32>
      %157 = vector.shape_cast %154 : vector<8x32xf32> to vector<1x8x32xf32>
      tpu.vector_store %arg10[%c0_51, %c0_52, %c0_53], %157 {strides = array<i32>} : memref<1x8x32xf32, #tpu.memory_space<vmem>>, vector<1x8x32xf32>,
    } else {
    }
    %c0 = arith.constant 0 : index
    %c0_1 = arith.constant 0 : index
    %c0_2 = arith.constant 0 : index
    %3 = vector.load %arg10[%c0, %c0_1, %c0_2] : memref<1x8x32xf32, #tpu.memory_space<vmem>>, vector<1x8x32xf32>
    %4 = vector.shape_cast %3 : vector<1x8x32xf32> to vector<8x32xf32>
    %c0_3 = arith.constant 0 : index
    %c0_4 = arith.constant 0 : index
    %c0_5 = arith.constant 0 : index
    %c0_6 = arith.constant 0 : index
    %5 = vector.load %arg3[%c0_3, %c0_4, %c0_5, %c0_6] : memref<1x1x8x32xbf16, #tpu.memory_space<vmem>>, vector<1x1x8x32xbf16>
    %6 = vector.shape_cast %5 : vector<1x1x8x32xbf16> to vector<8x32xbf16>
    %c0_7 = arith.constant 0 : index
    %c0_8 = arith.constant 0 : index
    %c0_9 = arith.constant 0 : index
    %7 = vector.load %arg4[%c0_7, %c0_8, %c0_9] : memref<1x32x32xbf16, #tpu.memory_space<vmem>>, vector<1x32x32xbf16>
    %8 = vector.shape_cast %7 : vector<1x32x32xbf16> to vector<32x32xbf16>
    %c0_10 = arith.constant 0 : index
    %c0_11 = arith.constant 0 : index
    %c0_12 = arith.constant 0 : index
    %9 = vector.load %arg5[%c0_10, %c0_11, %c0_12] : memref<1x32x64xbf16, #tpu.memory_space<vmem>>, vector<1x32x64xbf16>
    %10 = vector.shape_cast %9 : vector<1x32x64xbf16> to vector<32x64xbf16>
    %c0_13 = arith.constant 0 : index
    %c0_14 = arith.constant 0 : index
    %c0_15 = arith.constant 0 : index
    %11 = vector.load %arg6[%c0_13, %c0_14, %c0_15] : memref<1x32x32xbf16, #tpu.memory_space<vmem>>, vector<1x32x32xbf16>
    %12 = vector.shape_cast %11 : vector<1x32x32xbf16> to vector<32x32xbf16>
    %c0_16 = arith.constant 0 : index
    %c0_17 = arith.constant 0 : index
    %c0_18 = arith.constant 0 : index
    %13 = vector.load %arg7[%c0_16, %c0_17, %c0_18] : memref<1x32x64xbf16, #tpu.memory_space<vmem>>, vector<1x32x64xbf16>
    %14 = vector.shape_cast %13 : vector<1x32x64xbf16> to vector<32x64xbf16>
    %c0_19 = arith.constant 0 : index
    %c0_20 = arith.constant 0 : index
    %c0_21 = arith.constant 0 : index
    %15 = vector.load %arg8[%c0_19, %c0_20, %c0_21] : memref<1x64x32xbf16, #tpu.memory_space<vmem>>, vector<1x64x32xbf16>
    %16 = vector.shape_cast %15 : vector<1x64x32xbf16> to vector<64x32xbf16>
    %c0_22 = arith.constant 0 : index
    %c0_23 = arith.constant 0 : index
    %c0_24 = arith.constant 0 : index
    %17 = vector.load %arg9[%c0_22, %c0_23, %c0_24] : memref<1x10x64xf32, #tpu.memory_space<vmem>>, vector<1x10x64xf32>
    %18 = vector.shape_cast %17 : vector<1x10x64xf32> to vector<10x64xf32>
    %19 = vector.extract_strided_slice %18 {offsets = [0, 0], sizes = [1, 32], strides = [1, 1]} : vector<10x64xf32> to vector<1x32xf32>
    %20 = vector.extract_strided_slice %18 {offsets = [1, 0], sizes = [1, 32], strides = [1, 1]} : vector<10x64xf32> to vector<1x32xf32>
    %21 = vector.extract_strided_slice %18 {offsets = [2, 0], sizes = [1, 32], strides = [1, 1]} : vector<10x64xf32> to vector<1x32xf32>
    %22 = vector.extract_strided_slice %18 {offsets = [3, 0], sizes = [1, 32], strides = [1, 1]} : vector<10x64xf32> to vector<1x32xf32>
    %23 = vector.extract_strided_slice %18 {offsets = [4, 0], sizes = [1, 32], strides = [1, 1]} : vector<10x64xf32> to vector<1x32xf32>
    %24 = vector.extract_strided_slice %18 {offsets = [5, 0], sizes = [1, 32], strides = [1, 1]} : vector<10x64xf32> to vector<1x32xf32>
    %25 = vector.extract_strided_slice %18 {offsets = [6, 0], sizes = [1, 32], strides = [1, 1]} : vector<10x64xf32> to vector<1x32xf32>
    %26 = vector.extract_strided_slice %18 {offsets = [7, 0], sizes = [1, 32], strides = [1, 1]} : vector<10x64xf32> to vector<1x32xf32>
    %27 = vector.extract_strided_slice %18 {offsets = [8, 0], sizes = [1, 32], strides = [1, 1]} : vector<10x64xf32> to vector<1x32xf32>
    %28 = vector.extract_strided_slice %18 {offsets = [9, 0], sizes = [1, 64], strides = [1, 1]} : vector<10x64xf32> to vector<1x64xf32>
    %cst = arith.constant dense<0.000000e+00> : vector<8xf32>
    %29 = vector.multi_reduction <add>, %4, %cst [1] : vector<8x32xf32> to vector<8xf32>
    %30 = vector.shape_cast %29 : vector<8xf32> to vector<8x1xf32>
    %cst_25 = arith.constant 3.200000e+01 : f32
    %31 = vector.broadcast %cst_25 : f32 to vector<8x1xf32>
    %32 = arith.divf %30, %31 : vector<8x1xf32>
    %33 = vector.broadcast %32 : vector<8x1xf32> to vector<8x32xf32>
    %34 = arith.subf %4, %33 : vector<8x32xf32>
    %35 = arith.mulf %34, %34 : vector<8x32xf32>
    %cst_26 = arith.constant dense<0.000000e+00> : vector<8xf32>
    %36 = vector.multi_reduction <add>, %35, %cst_26 [1] : vector<8x32xf32> to vector<8xf32>
    %37 = vector.shape_cast %36 : vector<8xf32> to vector<8x1xf32>
    %cst_27 = arith.constant 3.200000e+01 : f32
    %38 = vector.broadcast %cst_27 : f32 to vector<8x1xf32>
    %39 = arith.divf %37, %38 : vector<8x1xf32>
    %cst_28 = arith.constant 9.99999974E-6 : f32
    %40 = vector.broadcast %cst_28 : f32 to vector<8x1xf32>
    %41 = arith.addf %39, %40 : vector<8x1xf32>
    %42 = math.rsqrt %41 : vector<8x1xf32>
    %43 = vector.broadcast %42 : vector<8x1xf32> to vector<8x32xf32>
    %44 = arith.mulf %34, %43 : vector<8x32xf32>
    %45 = vector.broadcast %19 : vector<1x32xf32> to vector<8x32xf32>
    %46 = arith.mulf %44, %45 : vector<8x32xf32>
    %47 = vector.broadcast %20 : vector<1x32xf32> to vector<8x32xf32>
    %48 = arith.addf %46, %47 : vector<8x32xf32>
    %49 = arith.truncf %48 : vector<8x32xf32> to vector<8x32xbf16>
    %cst_29 = arith.constant dense<0.000000e+00> : vector<8x32xf32>
    %50 = tpu.matmul %49, %8, %cst_29 {dimension_numbers = #tpu.dot_dimension_numbers<[1], [0], [0], [1], [0, 0, 1, 1], [], []>} : vector<8x32xbf16>, vector<32x32xbf16>, vector<8x32xf32> -> vector<8x32xf32>
    %51 = vector.broadcast %23 : vector<1x32xf32> to vector<8x32xf32>
    %52 = arith.addf %50, %51 : vector<8x32xf32>
    %cst_30 = arith.constant dense<0.000000e+00> : vector<8x64xf32>
    %53 = tpu.matmul %6, %10, %cst_30 {dimension_numbers = #tpu.dot_dimension_numbers<[1], [0], [0], [1], [0, 0, 1, 1], [], []>} : vector<8x32xbf16>, vector<32x64xbf16>, vector<8x64xf32> -> vector<8x64xf32>
    %54 = vector.extract_strided_slice %53 {offsets = [0, 0], sizes = [8, 32], strides = [1, 1]} : vector<8x64xf32> to vector<8x32xf32>
    %55 = vector.broadcast %24 : vector<1x32xf32> to vector<8x32xf32>
    %56 = arith.addf %54, %55 : vector<8x32xf32>
    %57 = vector.extract_strided_slice %53 {offsets = [0, 32], sizes = [8, 32], strides = [1, 1]} : vector<8x64xf32> to vector<8x32xf32>
    %58 = vector.broadcast %25 : vector<1x32xf32> to vector<8x32xf32>
    %59 = arith.addf %57, %58 : vector<8x32xf32>
    %60 = arith.truncf %52 : vector<8x32xf32> to vector<8x32xbf16>
    %61 = vector.extract_strided_slice %60 {offsets = [0, 0], sizes = [8, 8], strides = [1, 1]} : vector<8x32xbf16> to vector<8x8xbf16>
    %62 = vector.extract_strided_slice %60 {offsets = [0, 8], sizes = [8, 8], strides = [1, 1]} : vector<8x32xbf16> to vector<8x8xbf16>
    %63 = vector.extract_strided_slice %60 {offsets = [0, 16], sizes = [8, 8], strides = [1, 1]} : vector<8x32xbf16> to vector<8x8xbf16>
    %64 = vector.extract_strided_slice %60 {offsets = [0, 24], sizes = [8, 8], strides = [1, 1]} : vector<8x32xbf16> to vector<8x8xbf16>
    %65 = vector.shape_cast %61 : vector<8x8xbf16> to vector<1x8x8xbf16>
    %66 = vector.shape_cast %62 : vector<8x8xbf16> to vector<1x8x8xbf16>
    %67 = vector.shape_cast %63 : vector<8x8xbf16> to vector<1x8x8xbf16>
    %68 = vector.shape_cast %64 : vector<8x8xbf16> to vector<1x8x8xbf16>
    %69 = tpu.concatenate %65, %66, %67, %68 in 0 : vector<1x8x8xbf16>, vector<1x8x8xbf16>, vector<1x8x8xbf16>, vector<1x8x8xbf16> -> vector<4x8x8xbf16>
    %70 = arith.truncf %56 : vector<8x32xf32> to vector<8x32xbf16>
    %71 = vector.extract_strided_slice %70 {offsets = [0, 0], sizes = [8, 8], strides = [1, 1]} : vector<8x32xbf16> to vector<8x8xbf16>
    %72 = vector.extract_strided_slice %70 {offsets = [0, 8], sizes = [8, 8], strides = [1, 1]} : vector<8x32xbf16> to vector<8x8xbf16>
    %73 = vector.extract_strided_slice %70 {offsets = [0, 16], sizes = [8, 8], strides = [1, 1]} : vector<8x32xbf16> to vector<8x8xbf16>
    %74 = vector.extract_strided_slice %70 {offsets = [0, 24], sizes = [8, 8], strides = [1, 1]} : vector<8x32xbf16> to vector<8x8xbf16>
    %75 = vector.shape_cast %71 : vector<8x8xbf16> to vector<1x8x8xbf16>
    %76 = vector.shape_cast %72 : vector<8x8xbf16> to vector<1x8x8xbf16>
    %77 = vector.shape_cast %73 : vector<8x8xbf16> to vector<1x8x8xbf16>
    %78 = vector.shape_cast %74 : vector<8x8xbf16> to vector<1x8x8xbf16>
    %79 = tpu.concatenate %75, %76, %77, %78 in 0 : vector<1x8x8xbf16>, vector<1x8x8xbf16>, vector<1x8x8xbf16>, vector<1x8x8xbf16> -> vector<4x8x8xbf16>
    %80 = arith.truncf %59 : vector<8x32xf32> to vector<8x32xbf16>
    %81 = vector.extract_strided_slice %80 {offsets = [0, 0], sizes = [8, 8], strides = [1, 1]} : vector<8x32xbf16> to vector<8x8xbf16>
    %82 = vector.extract_strided_slice %80 {offsets = [0, 8], sizes = [8, 8], strides = [1, 1]} : vector<8x32xbf16> to vector<8x8xbf16>
    %83 = vector.extract_strided_slice %80 {offsets = [0, 16], sizes = [8, 8], strides = [1, 1]} : vector<8x32xbf16> to vector<8x8xbf16>
    %84 = vector.extract_strided_slice %80 {offsets = [0, 24], sizes = [8, 8], strides = [1, 1]} : vector<8x32xbf16> to vector<8x8xbf16>
    %85 = vector.shape_cast %81 : vector<8x8xbf16> to vector<1x8x8xbf16>
    %86 = vector.shape_cast %82 : vector<8x8xbf16> to vector<1x8x8xbf16>
    %87 = vector.shape_cast %83 : vector<8x8xbf16> to vector<1x8x8xbf16>
    %88 = vector.shape_cast %84 : vector<8x8xbf16> to vector<1x8x8xbf16>
    %89 = tpu.concatenate %85, %86, %87, %88 in 0 : vector<1x8x8xbf16>, vector<1x8x8xbf16>, vector<1x8x8xbf16>, vector<1x8x8xbf16> -> vector<4x8x8xbf16>
    "tpu.trace_start"() <{level = 10 : i32, message = "hqc,hkc->hqk"}> : () -> ()
    %cst_31 = arith.constant dense<0.000000e+00> : vector<4x8x8xf32>
    %90 = tpu.matmul %69, %79, %cst_31 {dimension_numbers = #tpu.dot_dimension_numbers<[2], [2], [1], [1], [0, 0, 0, 1, 1, 1], [0], [0]>} : vector<4x8x8xbf16>, vector<4x8x8xbf16>, vector<4x8x8xf32> -> vector<4x8x8xf32>
    "tpu.trace_stop"() : () -> ()
    %cst_32 = arith.constant 0.353553385 : f32
    %91 = vector.broadcast %cst_32 : f32 to vector<4x8x8xf32>
    %92 = arith.mulf %90, %91 : vector<4x8x8xf32>
    %cst_33 = arith.constant dense<0xFF800000> : vector<4x8xf32>
    %93 = vector.multi_reduction <maximumf>, %92, %cst_33 [2] : vector<4x8x8xf32> to vector<4x8xf32>
    %94 = vector.shape_cast %93 : vector<4x8xf32> to vector<4x8x1xf32>
    %95 = vector.broadcast %94 : vector<4x8x1xf32> to vector<4x8x8xf32>
    %96 = arith.subf %92, %95 : vector<4x8x8xf32>
    %97 = math.exp %96 : vector<4x8x8xf32>
    %cst_34 = arith.constant dense<0.000000e+00> : vector<4x8xf32>
    %98 = vector.multi_reduction <add>, %97, %cst_34 [2] : vector<4x8x8xf32> to vector<4x8xf32>
    %99 = vector.shape_cast %98 : vector<4x8xf32> to vector<4x8x1xf32>
    %100 = tpu.reciprocal %99 {approx = true} : vector<4x8x1xf32> -> vector<4x8x1xf32>
    %101 = vector.broadcast %100 : vector<4x8x1xf32> to vector<4x8x8xf32>
    %102 = arith.mulf %97, %101 : vector<4x8x8xf32>
    %103 = arith.truncf %102 : vector<4x8x8xf32> to vector<4x8x8xbf16>
    "tpu.trace_start"() <{level = 10 : i32, message = "hqk,hkc->hqc"}> : () -> ()
    %cst_35 = arith.constant dense<0.000000e+00> : vector<4x8x8xf32>
    %104 = tpu.matmul %103, %89, %cst_35 {dimension_numbers = #tpu.dot_dimension_numbers<[2], [1], [1], [2], [0, 0, 0, 1, 1, 2], [0], [0]>} : vector<4x8x8xbf16>, vector<4x8x8xbf16>, vector<4x8x8xf32> -> vector<4x8x8xf32>
    "tpu.trace_stop"() : () -> ()
    %105 = vector.extract_strided_slice %104 {offsets = [0, 0, 0], sizes = [1, 8, 8], strides = [1, 1, 1]} : vector<4x8x8xf32> to vector<1x8x8xf32>
    %106 = vector.shape_cast %105 : vector<1x8x8xf32> to vector<8x8xf32>
    %107 = vector.extract_strided_slice %104 {offsets = [1, 0, 0], sizes = [1, 8, 8], strides = [1, 1, 1]} : vector<4x8x8xf32> to vector<1x8x8xf32>
    %108 = vector.shape_cast %107 : vector<1x8x8xf32> to vector<8x8xf32>
    %109 = vector.extract_strided_slice %104 {offsets = [2, 0, 0], sizes = [1, 8, 8], strides = [1, 1, 1]} : vector<4x8x8xf32> to vector<1x8x8xf32>
    %110 = vector.shape_cast %109 : vector<1x8x8xf32> to vector<8x8xf32>
    %111 = vector.extract_strided_slice %104 {offsets = [3, 0, 0], sizes = [1, 8, 8], strides = [1, 1, 1]} : vector<4x8x8xf32> to vector<1x8x8xf32>
    %112 = vector.shape_cast %111 : vector<1x8x8xf32> to vector<8x8xf32>
    %113 = tpu.concatenate %106, %108, %110, %112 in 1 : vector<8x8xf32>, vector<8x8xf32>, vector<8x8xf32>, vector<8x8xf32> -> vector<8x32xf32>
    %114 = arith.truncf %113 : vector<8x32xf32> to vector<8x32xbf16>
    %cst_36 = arith.constant dense<0.000000e+00> : vector<8x32xf32>
    %115 = tpu.matmul %114, %12, %cst_36 {dimension_numbers = #tpu.dot_dimension_numbers<[1], [0], [0], [1], [0, 0, 1, 1], [], []>} : vector<8x32xbf16>, vector<32x32xbf16>, vector<8x32xf32> -> vector<8x32xf32>
    %116 = vector.broadcast %26 : vector<1x32xf32> to vector<8x32xf32>
    %117 = arith.addf %115, %116 : vector<8x32xf32>
    %118 = arith.addf %4, %117 : vector<8x32xf32>
    %cst_37 = arith.constant dense<0.000000e+00> : vector<8xf32>
    %119 = vector.multi_reduction <add>, %118, %cst_37 [1] : vector<8x32xf32> to vector<8xf32>
    %120 = vector.shape_cast %119 : vector<8xf32> to vector<8x1xf32>
    %cst_38 = arith.constant 3.200000e+01 : f32
    %121 = vector.broadcast %cst_38 : f32 to vector<8x1xf32>
    %122 = arith.divf %120, %121 : vector<8x1xf32>
    %123 = vector.broadcast %122 : vector<8x1xf32> to vector<8x32xf32>
    %124 = arith.subf %118, %123 : vector<8x32xf32>
    %125 = arith.mulf %124, %124 : vector<8x32xf32>
    %cst_39 = arith.constant dense<0.000000e+00> : vector<8xf32>
    %126 = vector.multi_reduction <add>, %125, %cst_39 [1] : vector<8x32xf32> to vector<8xf32>
    %127 = vector.shape_cast %126 : vector<8xf32> to vector<8x1xf32>
    %cst_40 = arith.constant 3.200000e+01 : f32
    %128 = vector.broadcast %cst_40 : f32 to vector<8x1xf32>
    %129 = arith.divf %127, %128 : vector<8x1xf32>
    %cst_41 = arith.constant 9.99999974E-6 : f32
    %130 = vector.broadcast %cst_41 : f32 to vector<8x1xf32>
    %131 = arith.addf %129, %130 : vector<8x1xf32>
    %132 = math.rsqrt %131 : vector<8x1xf32>
    %133 = vector.broadcast %132 : vector<8x1xf32> to vector<8x32xf32>
    %134 = arith.mulf %124, %133 : vector<8x32xf32>
    %135 = vector.broadcast %21 : vector<1x32xf32> to vector<8x32xf32>
    %136 = arith.mulf %134, %135 : vector<8x32xf32>
    %137 = vector.broadcast %22 : vector<1x32xf32> to vector<8x32xf32>
    %138 = arith.addf %136, %137 : vector<8x32xf32>
    %139 = arith.truncf %138 : vector<8x32xf32> to vector<8x32xbf16>
    %cst_42 = arith.constant dense<0.000000e+00> : vector<8x64xf32>
    %140 = tpu.matmul %139, %14, %cst_42 {dimension_numbers = #tpu.dot_dimension_numbers<[1], [0], [0], [1], [0, 0, 1, 1], [], []>} : vector<8x32xbf16>, vector<32x64xbf16>, vector<8x64xf32> -> vector<8x64xf32>
    %141 = vector.broadcast %28 : vector<1x64xf32> to vector<8x64xf32>
    %142 = arith.addf %140, %141 : vector<8x64xf32>
    %cst_43 = arith.constant 0.000000e+00 : f32
    %143 = vector.broadcast %cst_43 : f32 to vector<8x64xf32>
    %144 = arith.maximumf %142, %143 : vector<8x64xf32>
    %145 = arith.truncf %144 : vector<8x64xf32> to vector<8x64xbf16>
    %cst_44 = arith.constant dense<0.000000e+00> : vector<8x32xf32>
    %146 = tpu.matmul %145, %16, %cst_44 {dimension_numbers = #tpu.dot_dimension_numbers<[1], [0], [0], [1], [0, 0, 1, 1], [], []>} : vector<8x64xbf16>, vector<64x32xbf16>, vector<8x32xf32> -> vector<8x32xf32>
    %147 = vector.broadcast %27 : vector<1x32xf32> to vector<8x32xf32>
    %148 = arith.addf %146, %147 : vector<8x32xf32>
    %149 = arith.addf %118, %148 : vector<8x32xf32>
    %c0_45 = arith.constant 0 : index
    %c0_46 = arith.constant 0 : index
    %c0_47 = arith.constant 0 : index
    %150 = vector.load %arg10[%c0_45, %c0_46, %c0_47] : memref<1x8x32xf32, #tpu.memory_space<vmem>>, vector<1x8x32xf32>
    %151 = vector.shape_cast %150 : vector<1x8x32xf32> to vector<8x32xf32>
    %152 = vector.shape_cast %149 : vector<8x32xf32> to vector<1x8x32xf32>
    tpu.vector_store %arg10[%c0_45, %c0_46, %c0_47], %152 {strides = array<i32>} : memref<1x8x32xf32, #tpu.memory_space<vmem>>, vector<1x8x32xf32>,
    return
  }
  func.func @transform_0(%arg0: i32, %arg1: i32) -> (i32, i32, i32) {
    %c0_i32 = arith.constant 0 : i32
    %c0_i32_0 = arith.constant 0 : i32
    %c0_i32_1 = arith.constant 0 : i32
    return %arg0, %c0_i32, %c0_i32_0 : i32, i32, i32
  }
  func.func @transform_1(%arg0: i32, %arg1: i32) -> (i32, i32, i32, i32) {
    %c0_i32 = arith.constant 0 : i32
    %c0_i32_0 = arith.constant 0 : i32
    %c0_i32_1 = arith.constant 0 : i32
    return %arg0, %arg1, %c0_i32, %c0_i32_0 : i32, i32, i32, i32
  }
  func.func @transform_2(%arg0: i32, %arg1: i32) -> (i32, i32, i32) {
    %c0_i32 = arith.constant 0 : i32
    %c0_i32_0 = arith.constant 0 : i32
    %c0_i32_1 = arith.constant 0 : i32
    return %arg1, %c0_i32, %c0_i32_0 : i32, i32, i32
  }
  func.func @transform_3(%arg0: i32, %arg1: i32) -> (i32, i32, i32) {
    %c0_i32 = arith.constant 0 : i32
    %c0_i32_0 = arith.constant 0 : i32
    %c0_i32_1 = arith.constant 0 : i32
    return %arg1, %c0_i32, %c0_i32_0 : i32, i32, i32
  }
  func.func @transform_4(%arg0: i32, %arg1: i32) -> (i32, i32, i32) {
    %c0_i32 = arith.constant 0 : i32
    %c0_i32_0 = arith.constant 0 : i32
    %c0_i32_1 = arith.constant 0 : i32
    return %arg1, %c0_i32, %c0_i32_0 : i32, i32, i32
  }
  func.func @transform_5(%arg0: i32, %arg1: i32) -> (i32, i32, i32) {
    %c0_i32 = arith.constant 0 : i32
    %c0_i32_0 = arith.constant 0 : i32
    %c0_i32_1 = arith.constant 0 : i32
    return %arg1, %c0_i32, %c0_i32_0 : i32, i32, i32
  }
  func.func @transform_6(%arg0: i32, %arg1: i32) -> (i32, i32, i32) {
    %c0_i32 = arith.constant 0 : i32
    %c0_i32_0 = arith.constant 0 : i32
    %c0_i32_1 = arith.constant 0 : i32
    return %arg1, %c0_i32, %c0_i32_0 : i32, i32, i32
  }
  func.func @transform_7(%arg0: i32, %arg1: i32) -> (i32, i32, i32) {
    %c0_i32 = arith.constant 0 : i32
    %c0_i32_0 = arith.constant 0 : i32
    %c0_i32_1 = arith.constant 0 : i32
    return %arg1, %c0_i32, %c0_i32_0 : i32, i32, i32
  }
  func.func @transform_8(%arg0: i32, %arg1: i32) -> (i32, i32, i32) {
    %c0_i32 = arith.constant 0 : i32
    %c0_i32_0 = arith.constant 0 : i32
    %c0_i32_1 = arith.constant 0 : i32
    return %arg0, %c0_i32, %c0_i32_0 : i32, i32, i32
  }
}

module attributes {stable_mosaic.version = 11 : i64} {
  func.func @_tail_kernel(%arg0: i32, %arg1: memref<16x32xf32, #tpu.memory_space<vmem>>, %arg2: memref<16x1xf32, #tpu.memory_space<vmem>>, %arg3: memref<4x128xf32, #tpu.memory_space<vmem>>, %arg4: memref<32x64xbf16, #tpu.memory_space<vmem>>, %arg5: memref<64x128xbf16, #tpu.memory_space<vmem>>, %arg6: memref<16x128xf32, #tpu.memory_space<vmem>>) attributes {dimension_semantics = [#tpu.dimension_semantics<parallel>], iteration_bounds = array<i64: 1>, scalar_prefetch = 0 : i64, scratch_operands = 0 : i64, tpu.core_type = #tpu.core_type<tc>, window_params = [{transform_indices = @transform_0, window_bounds = array<i64: 16, 32>}, {transform_indices = @transform_1, window_bounds = array<i64: 16, 1>}, {pipeline_mode = #tpu.pipeline_mode<synchronous>, transform_indices = @transform_2, window_bounds = array<i64: 4, 128>}, {pipeline_mode = #tpu.pipeline_mode<synchronous>, transform_indices = @transform_3, window_bounds = array<i64: 32, 64>}, {pipeline_mode = #tpu.pipeline_mode<synchronous>, transform_indices = @transform_4, window_bounds = array<i64: 64, 128>}, {transform_indices = @transform_5, window_bounds = array<i64: 16, 128>}]} {
    %c0 = arith.constant 0 : index
    %c0_0 = arith.constant 0 : index
    %0 = vector.load %arg3[%c0, %c0_0] : memref<4x128xf32, #tpu.memory_space<vmem>>, vector<4x128xf32>
    %1 = vector.extract_strided_slice %0 {offsets = [0, 0], sizes = [1, 32], strides = [1, 1]} : vector<4x128xf32> to vector<1x32xf32>
    %2 = vector.extract_strided_slice %0 {offsets = [1, 0], sizes = [1, 32], strides = [1, 1]} : vector<4x128xf32> to vector<1x32xf32>
    %3 = vector.extract_strided_slice %0 {offsets = [2, 0], sizes = [1, 64], strides = [1, 1]} : vector<4x128xf32> to vector<1x64xf32>
    %4 = vector.extract_strided_slice %0 {offsets = [3, 0], sizes = [1, 128], strides = [1, 1]} : vector<4x128xf32> to vector<1x128xf32>
    %c0_1 = arith.constant 0 : index
    %c0_2 = arith.constant 0 : index
    %5 = vector.load %arg1[%c0_1, %c0_2] : memref<16x32xf32, #tpu.memory_space<vmem>>, vector<16x32xf32>
    %cst = arith.constant dense<0.000000e+00> : vector<16xf32>
    %6 = vector.multi_reduction <add>, %5, %cst [1] : vector<16x32xf32> to vector<16xf32>
    %7 = vector.shape_cast %6 : vector<16xf32> to vector<16x1xf32>
    %cst_3 = arith.constant 3.200000e+01 : f32
    %8 = vector.broadcast %cst_3 : f32 to vector<16x1xf32>
    %9 = arith.divf %7, %8 : vector<16x1xf32>
    %10 = vector.broadcast %9 : vector<16x1xf32> to vector<16x32xf32>
    %11 = arith.subf %5, %10 : vector<16x32xf32>
    %12 = arith.mulf %11, %11 : vector<16x32xf32>
    %cst_4 = arith.constant dense<0.000000e+00> : vector<16xf32>
    %13 = vector.multi_reduction <add>, %12, %cst_4 [1] : vector<16x32xf32> to vector<16xf32>
    %14 = vector.shape_cast %13 : vector<16xf32> to vector<16x1xf32>
    %cst_5 = arith.constant 3.200000e+01 : f32
    %15 = vector.broadcast %cst_5 : f32 to vector<16x1xf32>
    %16 = arith.divf %14, %15 : vector<16x1xf32>
    %cst_6 = arith.constant 9.99999974E-6 : f32
    %17 = vector.broadcast %cst_6 : f32 to vector<16x1xf32>
    %18 = arith.addf %16, %17 : vector<16x1xf32>
    %19 = math.rsqrt %18 : vector<16x1xf32>
    %20 = vector.broadcast %19 : vector<16x1xf32> to vector<16x32xf32>
    %21 = arith.mulf %11, %20 : vector<16x32xf32>
    %22 = vector.broadcast %1 : vector<1x32xf32> to vector<16x32xf32>
    %23 = arith.mulf %21, %22 : vector<16x32xf32>
    %24 = vector.broadcast %2 : vector<1x32xf32> to vector<16x32xf32>
    %25 = arith.addf %23, %24 : vector<16x32xf32>
    %26 = arith.truncf %25 : vector<16x32xf32> to vector<16x32xbf16>
    %c0_7 = arith.constant 0 : index
    %c0_8 = arith.constant 0 : index
    %27 = vector.load %arg4[%c0_7, %c0_8] : memref<32x64xbf16, #tpu.memory_space<vmem>>, vector<32x64xbf16>
    %cst_9 = arith.constant dense<0.000000e+00> : vector<16x64xf32>
    %28 = tpu.matmul %26, %27, %cst_9 {dimension_numbers = #tpu.dot_dimension_numbers<[1], [0], [0], [1], [0, 0, 1, 1], [], []>} : vector<16x32xbf16>, vector<32x64xbf16>, vector<16x64xf32> -> vector<16x64xf32>
    %29 = vector.broadcast %3 : vector<1x64xf32> to vector<16x64xf32>
    %30 = arith.addf %28, %29 : vector<16x64xf32>
    %cst_10 = arith.constant 0.000000e+00 : f32
    %31 = vector.broadcast %cst_10 : f32 to vector<16x64xf32>
    %32 = arith.maximumf %30, %31 : vector<16x64xf32>
    %33 = arith.truncf %32 : vector<16x64xf32> to vector<16x64xbf16>
    %c0_11 = arith.constant 0 : index
    %c0_12 = arith.constant 0 : index
    %34 = vector.load %arg5[%c0_11, %c0_12] : memref<64x128xbf16, #tpu.memory_space<vmem>>, vector<64x128xbf16>
    %cst_13 = arith.constant dense<0.000000e+00> : vector<16x128xf32>
    %35 = tpu.matmul %33, %34, %cst_13 {dimension_numbers = #tpu.dot_dimension_numbers<[1], [0], [0], [1], [0, 0, 1, 1], [], []>} : vector<16x64xbf16>, vector<64x128xbf16>, vector<16x128xf32> -> vector<16x128xf32>
    %36 = vector.broadcast %4 : vector<1x128xf32> to vector<16x128xf32>
    %37 = arith.addf %35, %36 : vector<16x128xf32>
    %38 = vector.extract_strided_slice %37 {offsets = [0, 0], sizes = [16, 1], strides = [1, 1]} : vector<16x128xf32> to vector<16x1xf32>
    %39 = vector.extract_strided_slice %37 {offsets = [0, 1], sizes = [16, 1], strides = [1, 1]} : vector<16x128xf32> to vector<16x1xf32>
    %40 = math.exp %39 : vector<16x1xf32>
    %c0_14 = arith.constant 0 : index
    %c0_15 = arith.constant 0 : index
    %41 = vector.load %arg2[%c0_14, %c0_15] : memref<16x1xf32, #tpu.memory_space<vmem>>, vector<16x1xf32>
    %42 = arith.subf %41, %38 : vector<16x1xf32>
    %cst_16 = arith.constant 0.000000e+00 : f32
    %43 = vector.broadcast %cst_16 : f32 to vector<16x1xf32>
    %44 = arith.subf %43, %39 : vector<16x1xf32>
    %45 = math.exp %44 : vector<16x1xf32>
    %46 = arith.mulf %42, %45 : vector<16x1xf32>
    %cst_17 = arith.constant -5.000000e-01 : f32
    %47 = vector.broadcast %cst_17 : f32 to vector<16x1xf32>
    %48 = arith.mulf %47, %46 : vector<16x1xf32>
    %49 = arith.mulf %48, %46 : vector<16x1xf32>
    %50 = arith.subf %49, %39 : vector<16x1xf32>
    %cst_18 = arith.constant 0.918938517 : f32
    %51 = vector.broadcast %cst_18 : f32 to vector<16x1xf32>
    %52 = arith.subf %50, %51 : vector<16x1xf32>
    %cst_19 = arith.constant dense<0.000000e+00> : vector<16xf32>
    %53 = vector.multi_reduction <add>, %52, %cst_19 [1] : vector<16x1xf32> to vector<16xf32>
    %54 = vector.shape_cast %53 : vector<16xf32> to vector<16x1xf32>
    %cst_20 = arith.constant 0.000000e+00 : f32
    %55 = vector.broadcast %cst_20 : f32 to vector<16x125xf32>
    %56 = tpu.concatenate %38, %40, %54, %55 in 1 : vector<16x1xf32>, vector<16x1xf32>, vector<16x1xf32>, vector<16x125xf32> -> vector<16x128xf32>
    %c0_21 = arith.constant 0 : index
    %c0_22 = arith.constant 0 : index
    %57 = vector.load %arg6[%c0_21, %c0_22] : memref<16x128xf32, #tpu.memory_space<vmem>>, vector<16x128xf32>
    tpu.vector_store %arg6[%c0_21, %c0_22], %56 {strides = array<i32>} : memref<16x128xf32, #tpu.memory_space<vmem>>, vector<16x128xf32>,
    return
  }
  func.func @transform_0(%arg0: i32) -> (i32, i32) {
    %c0_i32 = arith.constant 0 : i32
    %c0_i32_0 = arith.constant 0 : i32
    return %arg0, %c0_i32 : i32, i32
  }
  func.func @transform_1(%arg0: i32) -> (i32, i32) {
    %c0_i32 = arith.constant 0 : i32
    %c0_i32_0 = arith.constant 0 : i32
    return %arg0, %c0_i32 : i32, i32
  }
  func.func @transform_2(%arg0: i32) -> (i32, i32) {
    %c0_i32 = arith.constant 0 : i32
    %c0_i32_0 = arith.constant 0 : i32
    %c0_i32_1 = arith.constant 0 : i32
    return %c0_i32, %c0_i32_0 : i32, i32
  }
  func.func @transform_3(%arg0: i32) -> (i32, i32) {
    %c0_i32 = arith.constant 0 : i32
    %c0_i32_0 = arith.constant 0 : i32
    %c0_i32_1 = arith.constant 0 : i32
    return %c0_i32, %c0_i32_0 : i32, i32
  }
  func.func @transform_4(%arg0: i32) -> (i32, i32) {
    %c0_i32 = arith.constant 0 : i32
    %c0_i32_0 = arith.constant 0 : i32
    %c0_i32_1 = arith.constant 0 : i32
    return %c0_i32, %c0_i32_0 : i32, i32
  }
  func.func @transform_5(%arg0: i32) -> (i32, i32) {
    %c0_i32 = arith.constant 0 : i32
    %c0_i32_0 = arith.constant 0 : i32
    return %arg0, %c0_i32 : i32, i32
  }
}

</mosaic_0001>

<llo_original>
// kernel: tpu_custom_call.1
$region0: #{tpu_custom_call.1}
  #allocation0 [shape = 'u32[]', space=smem, size = 0x4, offset = 0x4, fixed_abs, tag = 'smem constant byte address 0x4 - core index']
  #allocation1 [shape = 'u32[72,128]{1,0:T(1,128)}', space=vmem, size = 0x9000, scoped, tag = 'internal scratch']
  %s0 = inlined_call_operand.hbm [shape: f32[8,128], index: 0, kind: input, shape index: {}]
  %s1 = inlined_call_operand.hbm [shape: f32[16,128], index: 1, kind: output, shape index: {}]
  %s2 = sld [smem:[#allocation0]]
  $region41: #{tpu_custom_call.1} parent=0
    _
  %s4 = ssub.s32 1, %s2
  %s5 = scalar_select 0, %s4, %s2
  $region1: #{tpu_custom_call.1} parent=0
    #allocation2 [shape = 'u8[4096]{0}', space=vmem, size = 0x1000, scoped, tag = 'input window, operand 0, single buffered']
    #allocation3 [shape = 's32[2]{0}', space=sflag, size = 0x8, scoped, tag = 'scoped memory for tpu_custom_call.1']
    #allocation4 [shape = 's32[2]{0}', space=sflag, size = 0x8, scoped, tag = 'scoped memory for tpu_custom_call.1']
    #allocation5 [shape = 'u8[8192]{0}', space=vmem, size = 0x2000, scoped, tag = 'output window, operand 0']
    %6 = vsyncpa [#allocation3], 0
    %7 = vsyncpa [#allocation4], 0
    %s8 = scalar_lea.sflag [#allocation4], 1
    %9 = vsyncpa %s8, 0
    loop: start=0, step=1, limit=4
    $region2: #{tpu_custom_call.1} parent=1 // loop_pre_header
      _
    $region3: #{tpu_custom_call.1} parent=1 // loop_header
      %s11 = sphi 0, %s15
      %p12 = scmp.ge.s32.totalorder %s11, 4
      %s19 = sphi 0, %s19
      %s21 = sphi 0, %s19
      %s22 = sphi 0, %s21
      %s36 = sphi 0, %s22
      %s42 = sphi 0, %s44
      %s45 = sphi 0, %s42
      %s46 = sphi 0, %s45
      %s62 = sphi 0, %s46
    $region4: #{tpu_custom_call.1} parent=1 // loop_header_branch
      %14 = sbr.rel (%p12) target = $region8
    $region5: #{tpu_custom_call.1} parent=1 // loop_body
      %s16 = ssub.s32 %s11, 1
      %s17 = ssub.s32 %s11, 2
      %s18 = sadd.s32 %s11, 1
      %s20 = sadd.s32 %s19, 1
      %p23 = scmp.eq.s32.totalorder %s11, 1
      %p24 = scmp.ne.s32.totalorder %s19, %s21
      %p25 = scmp.eq.s32.totalorder %s11, 0
      %p26 = por %p24, %p25
      %p27 = scmp.ne.s32.totalorder %s19, %s21
      %p28 = scmp.eq.s32.totalorder %s16, 1
      %p29 = por %p27, %p28
      %p30 = scmp.ne.s32.totalorder %s21, %s22
      %p31 = scmp.eq.s32.totalorder %s16, 0
      %p32 = por %p30, %p31
      %p33 = scmp.ne.s32.totalorder %s21, %s22
      %p34 = scmp.eq.s32.totalorder %s17, 1
      %p35 = por %p33, %p34
      %p37 = scmp.ne.s32.totalorder %s22, %s36
      %p38 = scmp.eq.s32.totalorder %s17, 0
      %p39 = por %p37, %p38
      %s40 = ssub.s32 %s11, %s18
      %p41 = scmp.eq.s32.totalorder %s40, 0
      %s43 = sadd.s32 %s42, 1
      %s44 = scalar_select %p41, %s42, %s43
      %p47 = pneg %p41
      %p48 = scmp.eq.s32.totalorder %s11, 1
      %p49 = por %p47, %p48
      %p50 = scmp.ne.s32.totalorder %s42, %s45
      %p51 = scmp.eq.s32.totalorder %s11, 0
      %p52 = por %p50, %p51
      %p53 = scmp.ne.s32.totalorder %s42, %s45
      %p54 = scmp.eq.s32.totalorder %s16, 1
      %p55 = por %p53, %p54
      %p56 = scmp.ne.s32.totalorder %s45, %s46
      %p57 = scmp.eq.s32.totalorder %s16, 0
      %p58 = por %p56, %p57
      %p59 = scmp.ne.s32.totalorder %s45, %s46
      %p60 = scmp.eq.s32.totalorder %s17, 1
      %p61 = por %p59, %p60
      %p63 = scmp.ne.s32.totalorder %s46, %s62
      %p64 = scmp.eq.s32.totalorder %s17, 0
      %p65 = por %p63, %p64
      %p66 = scmp.le.s32.totalorder 1, %s11
      %p67 = scmp.lt.s32.totalorder %s11, 3
      %p68 = pnand %p66, %p67
      %p69 = pneg %p68
      // Predicated region
      $region9: #{tpu_custom_call.1} parent=5 // pred_check
        _
      $region10: #{tpu_custom_call.1} parent=5 // pred_check_branch
        %71 = sbr.rel (%p68) target = $region12
      $region11: #{tpu_custom_call.1} parent=5 // pred_region
        %s72 = ssub.s32 %s11, 1
        // Predicated region
        $region13: #{tpu_custom_call.1} parent=11 // pred_check
          %p73 = pneg %p32
        $region14: #{tpu_custom_call.1} parent=11 // pred_check_branch
          %75 = sbr.rel (%p73) target = $region16
        $region15: #{tpu_custom_call.1} parent=11 // pred_region
          %77 = vsyncadd [#allocation3], 0
          %s79 = sshll.u32 %s0, 4
          %s80 = int_to_ptr.hbm [resolvable:$true] %s79
          %s81 = sshll.u32 [#allocation2], 4
          %s82 = int_to_ptr.vmem [resolvable:$true] %s81
          %84 = dma.hbm_to_vmem [thread:$0]  %s80, 128, %s82, [#allocation3]
        $region16: #{tpu_custom_call.1} parent=11 // pred_fallthru
          _
      $region12: #{tpu_custom_call.1} parent=5 // pred_fallthru
        _
      %p85 = scmp.lt.s32.totalorder %s11, 2
      // Predicated region
      $region17: #{tpu_custom_call.1} parent=5 // pred_check
        %p86 = pneg %p85
      $region18: #{tpu_custom_call.1} parent=5 // pred_check_branch
        %88 = sbr.rel (%p86) target = $region20
      $region19: #{tpu_custom_call.1} parent=5 // pred_region
        _
      $region20: #{tpu_custom_call.1} parent=5 // pred_fallthru
        _
      %p89 = scmp.le.s32.totalorder 1, %s11
      %p90 = scmp.lt.s32.totalorder %s11, 3
      %p91 = pnand %p89, %p90
      %p92 = pneg %p91
      // Predicated region
      $region21: #{tpu_custom_call.1} parent=5 // pred_check
        _
      $region22: #{tpu_custom_call.1} parent=5 // pred_check_branch
        %94 = sbr.rel (%p91) target = $region24
      $region23: #{tpu_custom_call.1} parent=5 // pred_region
        %s95 = ssub.s32 %s11, 1
        // Predicated region
        $region25: #{tpu_custom_call.1} parent=23 // pred_check
          %p96 = pneg %p32
        $region26: #{tpu_custom_call.1} parent=23 // pred_check_branch
          %98 = sbr.rel (%p96) target = $region28
        $region27: #{tpu_custom_call.1} parent=23 // pred_region
          %100 = dma.done [#allocation3], 128
        $region28: #{tpu_custom_call.1} parent=23 // pred_fallthru
          _
        %p101 = pneg %p32
        %p102 = pneg %p29
        %p103 = pneg %p58
        %p104 = pneg %p55
        %s105 = sand.u32 %s45, 1
        %s106 = scalar_lea.sflag [#allocation4], %s105
        %s107 = sand.u32 %s45, 1
        %s108 = smul.addr %s107, 8
        %s109 = scalar_lea.vmem [#allocation5], %s108
        %v110 = vld [vmem:[#allocation2] sm:$0xff]
        %v111 = vadd.f32 %v110, 1.0
        %112 = vst [vmem:[%s109] sm:$0xff] %v111
        %s113 = sand.u32 %s45, 1
        %s114 = scalar_lea.sflag [#allocation4], %s113
        %s115 = sand.u32 %s45, 1
        %s116 = smul.addr %s115, 8
        %s117 = scalar_lea.vmem [#allocation5], %s116
        // Predicated region
        $region29: #{tpu_custom_call.1} parent=23 // pred_check
          %p118 = pneg %p55
        $region30: #{tpu_custom_call.1} parent=23 // pred_check_branch
          %120 = sbr.rel (%p118) target = $region32
        $region31: #{tpu_custom_call.1} parent=23 // pred_region
          %122 = vsyncadd %s114, 0
          %s123 = smul.addr %s16, 8
          %s124 = scalar_lea.hbm %s1, %s123
          %s126 = sshll.u32 %s117, 4
          %s127 = int_to_ptr.vmem [resolvable:$true] %s126
          %s128 = sshll.u32 %s124, 4
          %s129 = int_to_ptr.hbm [resolvable:$true] %s128
          %131 = dma.vmem_to_hbm [thread:$0]  %s127, 128, %s129, %s114
        $region32: #{tpu_custom_call.1} parent=23 // pred_fallthru
          _
      $region24: #{tpu_custom_call.1} parent=5 // pred_fallthru
        _
      %p132 = scmp.le.s32.totalorder 2, %s11
      // Predicated region
      $region33: #{tpu_custom_call.1} parent=5 // pred_check
        %p133 = pneg %p132
      $region34: #{tpu_custom_call.1} parent=5 // pred_check_branch
        %135 = sbr.rel (%p133) target = $region36
      $region35: #{tpu_custom_call.1} parent=5 // pred_region
        %s136 = ssub.s32 %s11, 2
        // Predicated region
        $region37: #{tpu_custom_call.1} parent=35 // pred_check
          %p137 = pneg %p61
        $region38: #{tpu_custom_call.1} parent=35 // pred_check_branch
          %139 = sbr.rel (%p137) target = $region40
        $region39: #{tpu_custom_call.1} parent=35 // pred_region
          %s140 = sand.u32 %s46, 1
          %s141 = scalar_lea.sflag [#allocation4], %s140
          %s142 = sand.u32 %s46, 1
          %s143 = smul.addr %s142, 8
          %s144 = scalar_lea.vmem [#allocation5], %s143
          %146 = dma.done %s141, 128
        $region40: #{tpu_custom_call.1} parent=35 // pred_fallthru
          _
      $region36: #{tpu_custom_call.1} parent=5 // pred_fallthru
        _
    $region6: #{tpu_custom_call.1} parent=1 // loop_footer
      %s15 = sadd.s32 1, %s11
    $region7: #{tpu_custom_call.1} parent=1 // loop_footer_branch
      %10 = sbr.rel target = $region3
    $region8: #{tpu_custom_call.1} parent=1 // loop_exit
      _
    %147 = vsyncpa [#allocation3], 1
    %s148 = scalar_lea.sflag [#allocation3], 1
    %149 = vsyncpa %s148, 1
    %150 = vsyncpa [#allocation4], 1
    %s151 = scalar_lea.sflag [#allocation4], 1
    %152 = vsyncpa %s151, 1

// kernel: lbanp_forward.5
$region0: #{lbanp_forward.5}
  #allocation0 [shape = 'u32[]', space=smem, size = 0x4, offset = 0x4, fixed_abs, tag = 'smem constant byte address 0x4 - core index']
  #allocation1 [shape = 'u32[72,128]{1,0:T(1,128)}', space=vmem, size = 0x9000, scoped, tag = 'internal scratch']
  %s0 = inlined_call_operand.vmem [shape: f32[16,2], index: 0, kind: input, shape index: {}]
  %s1 = inlined_call_operand.vmem [shape: f32[2,32], index: 1, kind: input, shape index: {}]
  %s2 = inlined_call_operand.vmem [shape: f32[2,32], index: 2, kind: input, shape index: {}]
  %s3 = inlined_call_operand.vmem [shape: bf16[32,32], index: 3, kind: input, shape index: {}]
  %s4 = inlined_call_operand.vmem [shape: bf16[16,32], index: 4, kind: output, shape index: {}]
  %s5 = sld [smem:[#allocation0]]
  $region26: #{lbanp_forward.5} parent=0
    _
  %s7 = ssub.s32 1, %s5
  %s8 = scalar_select 0, %s7, %s5
  // Predicated region
  $region2: #{lbanp_forward.5} parent=0 // pred_check
    _
  $region3: #{lbanp_forward.5} parent=0 // pred_check_branch
    %10 = sbr.rel (0) target = $region5
  $region4: #{lbanp_forward.5} parent=0 // pred_region
    _
  $region5: #{lbanp_forward.5} parent=0 // pred_fallthru
    _
  // Predicated region
  $region6: #{lbanp_forward.5} parent=0 // pred_check
    _
  $region7: #{lbanp_forward.5} parent=0 // pred_check_branch
    %12 = sbr.rel (0) target = $region9
  $region8: #{lbanp_forward.5} parent=0 // pred_region
    _
  $region9: #{lbanp_forward.5} parent=0 // pred_fallthru
    _
  // Predicated region
  $region10: #{lbanp_forward.5} parent=0 // pred_check
    _
  $region11: #{lbanp_forward.5} parent=0 // pred_check_branch
    %14 = sbr.rel (0) target = $region13
  $region12: #{lbanp_forward.5} parent=0 // pred_region
    _
  $region13: #{lbanp_forward.5} parent=0 // pred_fallthru
    _
  // Predicated region
  $region14: #{lbanp_forward.5} parent=0 // pred_check
    _
  $region15: #{lbanp_forward.5} parent=0 // pred_check_branch
    %16 = sbr.rel (0) target = $region17
  $region16: #{lbanp_forward.5} parent=0 // pred_region
    _
  $region17: #{lbanp_forward.5} parent=0 // pred_fallthru
    _
  %v18 = vld [vmem:[%s1] sm:$0x3]
  %v19 = vld [vmem:[%s0] sm:$0xff]
  %v20 = vld [vmem:[%s0 + $0x8] sm:$0xff]
  %v21 = vld [vmem:[%s2] sm:$0x3]
  %v22 = vperm.slane %v18, 0
  %vm23 = vcmask 15360
  %v25 = vsel %vm23, %v19, 0
  %v28 = vsel %vm23, %v20, 0
  %vm30 = vcmask 1041408
  %v32 = vsel %vm30, %v21, 0
  %34 = vmatpush.msra.mxu0 0.0
  %35 = vmatpush.msra.mxu0 0.0
  %36 = vmatpush.msra.mxu0 0.0
  %37 = vmatpush.msra.mxu0 0.0
  %38 = vmatpush.msra.mxu0 0.0
  %39 = vmatpush.msra.mxu0 0.0
  %40 = vmatpush.msra.mxu0 0.0
  %41 = vmatpush.msra.mxu0 0.0
  %42 = vmatpush.msra.mxu0 0.0
  %43 = vmatpush.msra.mxu0 0.0
  %44 = vmatpush.msra.mxu0 0.0
  %45 = vmatpush.msra.mxu0 0.0
  %46 = vmatpush.msra.mxu0 0.0
  %47 = vmatpush.msra.mxu0 0.0
  %48 = vmatpush.msra.mxu0 0.0
  %49 = vmatpush.msra.mxu0 %v32
  %50 = vmatmul.f32.gmra.mxu0 %v25
  %v51 = vpop.f32.mrf.mxu0
  %v52 = vadd.f32 %v22, %v51
  %53 = vmatmul.f32.gmra.mxu0 %v28
  %v54 = vpop.f32.mrf.mxu0
  %v55 = vadd.f32 %v22, %v54
  %56 = vdwg.mxu0
  %v57 = vmax.f32 %v52, 0.0
  %v58 = vmax.f32 %v55, 0.0
  %v59 = vld [vmem:[%s3] sm:$0xf]
  %v60 = vld [vmem:[%s3 + $0x4] sm:$0xf]
  %v61 = vld [vmem:[%s3 + $0x8] sm:$0xf]
  %v62 = vld [vmem:[%s3 + $0xc] sm:$0xf]
  %v63 = vpack.c.bf16 %v58, %v57
  %v64 = vperm.slane %v18, 1
  %v69 = vunpack.c.l.b16 %v59
  %v70 = vunpack.c.l.b16 %v60
  %v71 = vunpack.c.l.b16 %v61
  %v72 = vunpack.c.l.b16 %v62
  %v73 = vpack.c.b16 %v70, %v69
  %v74 = vpack.c.b16 %v72, %v71
  %vm77 = vcmask 261120
  %v79 = vsel %vm77, %v63, 0
  %81 = vmatpush.bf16.msra.mxu0 0
  %82 = vmatpush.bf16.msra.mxu0 0
  %83 = vmatpush.bf16.msra.mxu0 0
  %84 = vmatpush.bf16.msra.mxu0 0
  %85 = vmatpush.bf16.msra.mxu0 0
  %86 = vmatpush.bf16.msra.mxu0 0
  %87 = vmatpush.bf16.msra.mxu0 %v74
  %88 = vmatpush.bf16.msra.mxu0 %v73
  %89 = vmatmul.bf16.gmra.mxu0 %v79
  %v90 = vpop.f32.mrf.mxu0
  %v91 = vadd.f32 %v64, %v90
  %v92 = vpop.f32.mrf.mxu0
  %v93 = vadd.f32 %v64, %v92
  %94 = vdwg.mxu0
  %v95 = vpack.c.bf16 %v91, %v91
  %v96 = vpack.c.bf16 %v93, %v93
  %vm97 = vcmask 257024
  %98 = vst.msk [vmem:[%s4] sm:$0xf] %vm97, %v95
  %99 = vst.msk [vmem:[%s4 + $0x4] sm:$0xf] %vm97, %v96
  // Predicated region
  $region18: #{lbanp_forward.5} parent=0 // pred_check
    _
  $region19: #{lbanp_forward.5} parent=0 // pred_check_branch
    %101 = sbr.rel (0) target = $region21
  $region20: #{lbanp_forward.5} parent=0 // pred_region
    _
  $region21: #{lbanp_forward.5} parent=0 // pred_fallthru
    _
  // Predicated region
  $region22: #{lbanp_forward.5} parent=0 // pred_check
    _
  $region23: #{lbanp_forward.5} parent=0 // pred_check_branch
    %103 = sbr.rel (0) target = $region25
  $region24: #{lbanp_forward.5} parent=0 // pred_region
    _
  $region25: #{lbanp_forward.5} parent=0 // pred_fallthru
    _

// kernel: lbanp_forward.7
$region0: #{lbanp_forward.7}
  #allocation0 [shape = 'u32[]', space=smem, size = 0x4, offset = 0x4, fixed_abs, tag = 'smem constant byte address 0x4 - core index']
  #allocation1 [shape = 'u32[72,128]{1,0:T(1,128)}', space=vmem, size = 0x9000, scoped, tag = 'internal scratch']
  %s0 = inlined_call_operand.vmem [shape: f32[16,1], index: 0, kind: input, shape index: {}]
  %s1 = inlined_call_operand.vmem [shape: f32[2,32], index: 1, kind: input, shape index: {}]
  %s2 = inlined_call_operand.vmem [shape: f32[1,32], index: 2, kind: input, shape index: {}]
  %s3 = inlined_call_operand.vmem [shape: bf16[32,32], index: 3, kind: input, shape index: {}]
  %s4 = inlined_call_operand.vmem [shape: f32[16,32], index: 4, kind: output, shape index: {}]
  %s5 = sld [smem:[#allocation0]]
  $region26: #{lbanp_forward.7} parent=0
    _
  %s7 = ssub.s32 1, %s5
  %s8 = scalar_select 0, %s7, %s5
  // Predicated region
  $region2: #{lbanp_forward.7} parent=0 // pred_check
    _
  $region3: #{lbanp_forward.7} parent=0 // pred_check_branch
    %10 = sbr.rel (0) target = $region5
  $region4: #{lbanp_forward.7} parent=0 // pred_region
    _
  $region5: #{lbanp_forward.7} parent=0 // pred_fallthru
    _
  // Predicated region
  $region6: #{lbanp_forward.7} parent=0 // pred_check
    _
  $region7: #{lbanp_forward.7} parent=0 // pred_check_branch
    %12 = sbr.rel (0) target = $region9
  $region8: #{lbanp_forward.7} parent=0 // pred_region
    _
  $region9: #{lbanp_forward.7} parent=0 // pred_fallthru
    _
  // Predicated region
  $region10: #{lbanp_forward.7} parent=0 // pred_check
    _
  $region11: #{lbanp_forward.7} parent=0 // pred_check_branch
    %14 = sbr.rel (0) target = $region13
  $region12: #{lbanp_forward.7} parent=0 // pred_region
    _
  $region13: #{lbanp_forward.7} parent=0 // pred_fallthru
    _
  // Predicated region
  $region14: #{lbanp_forward.7} parent=0 // pred_check
    _
  $region15: #{lbanp_forward.7} parent=0 // pred_check_branch
    %16 = sbr.rel (0) target = $region17
  $region16: #{lbanp_forward.7} parent=0 // pred_region
    _
  $region17: #{lbanp_forward.7} parent=0 // pred_fallthru
    _
  %v18 = vld [vmem:[%s1] sm:$0x3]
  %v19 = vld [vmem:[%s0] sm:$0xff]
  %v20 = vld [vmem:[%s0 + $0x8] sm:$0xff]
  %v21 = vld [vmem:[%s2] sm:$0x1]
  %v22 = vperm.slane %v18, 0
  %vm23 = vcmask 7168
  %v25 = vsel %vm23, %v19, 0
  %v28 = vsel %vm23, %v20, 0
  %vm30 = vcmask 1040384
  %v32 = vsel %vm30, %v21, 0
  %34 = vmatpush.msra.mxu0 0.0
  %35 = vmatpush.msra.mxu0 0.0
  %36 = vmatpush.msra.mxu0 0.0
  %37 = vmatpush.msra.mxu0 0.0
  %38 = vmatpush.msra.mxu0 0.0
  %39 = vmatpush.msra.mxu0 0.0
  %40 = vmatpush.msra.mxu0 0.0
  %41 = vmatpush.msra.mxu0 0.0
  %42 = vmatpush.msra.mxu0 0.0
  %43 = vmatpush.msra.mxu0 0.0
  %44 = vmatpush.msra.mxu0 0.0
  %45 = vmatpush.msra.mxu0 0.0
  %46 = vmatpush.msra.mxu0 0.0
  %47 = vmatpush.msra.mxu0 0.0
  %48 = vmatpush.msra.mxu0 0.0
  %49 = vmatpush.msra.mxu0 %v32
  %50 = vmatmul.f32.gmra.mxu0 %v25
  %v51 = vpop.f32.mrf.mxu0
  %v52 = vadd.f32 %v22, %v51
  %53 = vmatmul.f32.gmra.mxu0 %v28
  %v54 = vpop.f32.mrf.mxu0
  %v55 = vadd.f32 %v22, %v54
  %56 = vdwg.mxu0
  %v57 = vmax.f32 %v52, 0.0
  %v58 = vmax.f32 %v55, 0.0
  %v59 = vld [vmem:[%s3] sm:$0xf]
  %v60 = vld [vmem:[%s3 + $0x4] sm:$0xf]
  %v61 = vld [vmem:[%s3 + $0x8] sm:$0xf]
  %v62 = vld [vmem:[%s3 + $0xc] sm:$0xf]
  %v63 = vpack.c.bf16 %v58, %v57
  %v64 = vperm.slane %v18, 1
  %v69 = vunpack.c.l.b16 %v59
  %v70 = vunpack.c.l.b16 %v60
  %v71 = vunpack.c.l.b16 %v61
  %v72 = vunpack.c.l.b16 %v62
  %v73 = vpack.c.b16 %v70, %v69
  %v74 = vpack.c.b16 %v72, %v71
  %vm77 = vcmask 261120
  %v79 = vsel %vm77, %v63, 0
  %81 = vmatpush.bf16.msra.mxu0 0
  %82 = vmatpush.bf16.msra.mxu0 0
  %83 = vmatpush.bf16.msra.mxu0 0
  %84 = vmatpush.bf16.msra.mxu0 0
  %85 = vmatpush.bf16.msra.mxu0 0
  %86 = vmatpush.bf16.msra.mxu0 0
  %87 = vmatpush.bf16.msra.mxu0 %v74
  %88 = vmatpush.bf16.msra.mxu0 %v73
  %89 = vmatmul.bf16.gmra.mxu0 %v79
  %v90 = vpop.f32.mrf.mxu0
  %v91 = vadd.f32 %v64, %v90
  %v92 = vpop.f32.mrf.mxu0
  %v93 = vadd.f32 %v64, %v92
  %94 = vdwg.mxu0
  %95 = vst.msk [vmem:[%s4] sm:$0xff] %vm77, %v91
  %96 = vst.msk [vmem:[%s4 + $0x8] sm:$0xff] %vm77, %v93
  // Predicated region
  $region18: #{lbanp_forward.7} parent=0 // pred_check
    _
  $region19: #{lbanp_forward.7} parent=0 // pred_check_branch
    %98 = sbr.rel (0) target = $region21
  $region20: #{lbanp_forward.7} parent=0 // pred_region
    _
  $region21: #{lbanp_forward.7} parent=0 // pred_fallthru
    _
  // Predicated region
  $region22: #{lbanp_forward.7} parent=0 // pred_check
    _
  $region23: #{lbanp_forward.7} parent=0 // pred_check_branch
    %100 = sbr.rel (0) target = $region25
  $region24: #{lbanp_forward.7} parent=0 // pred_region
    _
  $region25: #{lbanp_forward.7} parent=0 // pred_fallthru
    _

// kernel: lbanp_forward.9
$region0: #{lbanp_forward.9}
  #allocation0 [shape = 'u32[]', space=smem, size = 0x4, offset = 0x4, fixed_abs, tag = 'smem constant byte address 0x4 - core index']
  #allocation1 [shape = 'u32[72,128]{1,0:T(1,128)}', space=vmem, size = 0x9000, scoped, tag = 'internal scratch']
  %s0 = inlined_call_operand.vmem [shape: f32[16,32], index: 0, kind: input, shape index: {}]
  %s1 = inlined_call_operand.vmem [shape: f32[16,1], index: 1, kind: input, shape index: {}]
  %s2 = inlined_call_operand.vmem [shape: f32[4,128], index: 2, kind: input, shape index: {}]
  %s3 = inlined_call_operand.vmem [shape: bf16[32,64], index: 3, kind: input, shape index: {}]
  %s4 = inlined_call_operand.vmem [shape: bf16[64,128], index: 4, kind: input, shape index: {}]
  %s5 = inlined_call_operand.vmem [shape: f32[16,128], index: 5, kind: output, shape index: {}]
  %s6 = sld [smem:[#allocation0]]
  $region30: #{lbanp_forward.9} parent=0
    _
  %s8 = ssub.s32 1, %s6
  %s9 = scalar_select 0, %s8, %s6
  // Predicated region
  $region2: #{lbanp_forward.9} parent=0 // pred_check
    _
  $region3: #{lbanp_forward.9} parent=0 // pred_check_branch
    %11 = sbr.rel (0) target = $region5
  $region4: #{lbanp_forward.9} parent=0 // pred_region
    _
  $region5: #{lbanp_forward.9} parent=0 // pred_fallthru
    _
  // Predicated region
  $region6: #{lbanp_forward.9} parent=0 // pred_check
    _
  $region7: #{lbanp_forward.9} parent=0 // pred_check_branch
    %13 = sbr.rel (0) target = $region9
  $region8: #{lbanp_forward.9} parent=0 // pred_region
    _
  $region9: #{lbanp_forward.9} parent=0 // pred_fallthru
    _
  // Predicated region
  $region10: #{lbanp_forward.9} parent=0 // pred_check
    _
  $region11: #{lbanp_forward.9} parent=0 // pred_check_branch
    %15 = sbr.rel (0) target = $region13
  $region12: #{lbanp_forward.9} parent=0 // pred_region
    _
  $region13: #{lbanp_forward.9} parent=0 // pred_fallthru
    _
  // Predicated region
  $region14: #{lbanp_forward.9} parent=0 // pred_check
    _
  $region15: #{lbanp_forward.9} parent=0 // pred_check_branch
    %17 = sbr.rel (0) target = $region17
  $region16: #{lbanp_forward.9} parent=0 // pred_region
    _
  $region17: #{lbanp_forward.9} parent=0 // pred_fallthru
    _
  // Predicated region
  $region18: #{lbanp_forward.9} parent=0 // pred_check
    _
  $region19: #{lbanp_forward.9} parent=0 // pred_check_branch
    %19 = sbr.rel (0) target = $region21
  $region20: #{lbanp_forward.9} parent=0 // pred_region
    _
  $region21: #{lbanp_forward.9} parent=0 // pred_fallthru
    _
  %v21 = vld [vmem:[%s2] sm:$0xf]
  %v22 = vld [vmem:[%s0] sm:$0xff]
  %v23 = vld [vmem:[%s0 + $0x8] sm:$0xff]
  %vm24 = vcmask 261120
  %v25 = vsel %vm24, %v22, 0.0
  %26 = vadd.xlane.f32.xlu0 %v25
  %v27 = vpop.xlane.xlu0 %26
  %v28 = vsel %vm24, %v23, 0.0
  %29 = vadd.xlane.f32.xlu0 %v28
  %v30 = vpop.xlane.xlu0 %29
  %v31 = vrcp.pop 32.0
  %v32 = vmul.f32 32.0, %v31
  %v33 = vsub.f32 1.0, %v32
  %v34 = vmul.f32 %v31, %v33
  %v35 = vadd.f32 %v31, %v34
  %vm36 = vweird.f32 %v31
  %v37 = vsel %vm36, %v31, %v35
  %v38 = vmul.f32 %v27, %v37
  %v39 = vmul.f32 %v30, %v37
  %v40 = vsub.f32 %v22, %v38
  %v41 = vsub.f32 %v23, %v39
  %v42 = vmul.f32 %v40, %v40
  %v43 = vmul.f32 %v41, %v41
  %v44 = vsel %vm24, %v42, 0.0
  %45 = vadd.xlane.f32.xlu0 %v44
  %v46 = vpop.xlane.xlu0 %45
  %v47 = vsel %vm24, %v43, 0.0
  %48 = vadd.xlane.f32.xlu0 %v47
  %v49 = vpop.xlane.xlu0 %48
  %v50 = vmul.f32 %v46, %v37
  %v51 = vmul.f32 %v49, %v37
  %v52 = vadd.f32 %v50, 1e-05
  %v53 = vadd.f32 %v51, 1e-05
  %v54 = vrsqrt.pop %v52
  %v55 = vmul.f32 %v54, %v52
  %v56 = vmul.f32 %v55, %v54
  %v57 = vmul.f32 0.5, %v56
  %v58 = vsub.f32 1.5, %v57
  %v59 = vmul.f32 %v54, %v58
  %vm60 = vweird.f32 %v52
  %vm61 = vweird.f32 %v54
  %vm62 = vmor %vm60, %vm61
  %v63 = vsel %vm62, %v54, %v59
  %v64 = vrsqrt.pop %v53
  %v65 = vmul.f32 %v64, %v53
  %v66 = vmul.f32 %v65, %v64
  %v67 = vmul.f32 0.5, %v66
  %v68 = vsub.f32 1.5, %v67
  %v69 = vmul.f32 %v64, %v68
  %vm70 = vweird.f32 %v53
  %vm71 = vweird.f32 %v64
  %vm72 = vmor %vm70, %vm71
  %v73 = vsel %vm72, %v64, %v69
  %v74 = vmul.f32 %v40, %v63
  %v75 = vmul.f32 %v41, %v73
  %v76 = vperm.slane %v21, 0
  %v77 = vmul.f32 %v74, %v76
  %v78 = vmul.f32 %v75, %v76
  %v79 = vperm.slane %v21, 1
  %v80 = vadd.f32 %v77, %v79
  %v81 = vadd.f32 %v78, %v79
  %v82 = vpack.c.bf16 %v81, %v80
  %v83 = vld [vmem:[%s3] sm:$0xf]
  %v84 = vld [vmem:[%s3 + $0x4] sm:$0xf]
  %v85 = vld [vmem:[%s3 + $0x8] sm:$0xf]
  %v86 = vld [vmem:[%s3 + $0xc] sm:$0xf]
  %v87 = vperm.slane %v21, 2
  %v92 = vunpack.c.l.b16 %v83
  %v93 = vunpack.c.l.b16 %v84
  %v94 = vunpack.c.l.b16 %v85
  %v95 = vunpack.c.l.b16 %v86
  %v96 = vpack.c.b16 %v93, %v92
  %v97 = vpack.c.b16 %v95, %v94
  %v101 = vsel %vm24, %v82, 0
  %103 = vmatpush.bf16.msra.mxu0 0
  %104 = vmatpush.bf16.msra.mxu0 0
  %105 = vmatpush.bf16.msra.mxu0 0
  %106 = vmatpush.bf16.msra.mxu0 0
  %107 = vmatpush.bf16.msra.mxu0 0
  %108 = vmatpush.bf16.msra.mxu0 0
  %109 = vmatpush.bf16.msra.mxu0 %v97
  %110 = vmatpush.bf16.msra.mxu0 %v96
  %111 = vmatmul.bf16.gmra.mxu0 %v101
  %v112 = vpop.f32.mrf.mxu0
  %v113 = vadd.f32 %v87, %v112
  %v114 = vpop.f32.mrf.mxu0
  %v115 = vadd.f32 %v87, %v114
  %116 = vdwg.mxu0
  %v117 = vmax.f32 %v113, 0.0
  %v118 = vmax.f32 %v115, 0.0
  %v119 = vpack.c.bf16 %v118, %v117
  %v120 = vld [vmem:[%s4] sm:$0xf]
  %v121 = vld [vmem:[%s4 + $0x4] sm:$0xf]
  %v122 = vld [vmem:[%s4 + $0x8] sm:$0xf]
  %v123 = vld [vmem:[%s4 + $0xc] sm:$0xf]
  %v124 = vld [vmem:[%s4 + $0x10] sm:$0xf]
  %v125 = vld [vmem:[%s4 + $0x14] sm:$0xf]
  %v126 = vld [vmem:[%s4 + $0x18] sm:$0xf]
  %v127 = vld [vmem:[%s4 + $0x1c] sm:$0xf]
  %v128 = vperm.slane %v21, 3
  %v137 = vunpack.c.l.b16 %v120
  %v138 = vunpack.c.l.b16 %v121
  %v139 = vunpack.c.l.b16 %v122
  %v140 = vunpack.c.l.b16 %v123
  %v141 = vunpack.c.l.b16 %v124
  %v142 = vunpack.c.l.b16 %v125
  %v143 = vunpack.c.l.b16 %v126
  %v144 = vunpack.c.l.b16 %v127
  %v145 = vpack.c.b16 %v138, %v137
  %v146 = vpack.c.b16 %v140, %v139
  %v147 = vpack.c.b16 %v142, %v141
  %v148 = vpack.c.b16 %v144, %v143
  %vm153 = vcmask 523264
  %v155 = vsel %vm153, %v119, 0
  %157 = vmatpush.bf16.msra.mxu0 0
  %158 = vmatpush.bf16.msra.mxu0 0
  %159 = vmatpush.bf16.msra.mxu0 0
  %160 = vmatpush.bf16.msra.mxu0 0
  %161 = vmatpush.bf16.msra.mxu0 %v148
  %162 = vmatpush.bf16.msra.mxu0 %v147
  %163 = vmatpush.bf16.msra.mxu0 %v146
  %164 = vmatpush.bf16.msra.mxu0 %v145
  %165 = vmatmul.bf16.gmra.mxu0 %v155
  %v166 = vpop.f32.mrf.mxu0
  %v167 = vadd.f32 %v128, %v166
  %v168 = vpop.f32.mrf.mxu0
  %v169 = vadd.f32 %v128, %v168
  %170 = vdwg.mxu0
  %v171 = vmul.f32 %v167, 1.442695
  %v172 = vpow.pop %v171
  %v173 = vmul.f32 %v169, 1.442695
  %v174 = vpow.pop %v173
  %v175 = vld [vmem:[%s1] sm:$0xff]
  %v176 = vld [vmem:[%s1 + $0x8] sm:$0xff]
  %v177 = vsub.f32 %v175, %v167
  %v178 = vsub.f32 %v176, %v169
  %v179 = vsub.f32 0.0, %v167
  %v180 = vsub.f32 0.0, %v169
  %v181 = vmul.f32 %v179, 1.442695
  %v182 = vpow.pop %v181
  %v183 = vmul.f32 %v180, 1.442695
  %v184 = vpow.pop %v183
  %187 = vrot.lane.b32.xlu0 %v182, 127
  %v188 = vpop.permute.xlu0 %187
  %189 = vrot.lane.b32.xlu0 %v184, 127
  %v190 = vpop.permute.xlu0 %189
  %v193 = vmul.f32 %v177, %v188
  %v194 = vmul.f32 %v178, %v190
  %v195 = vmul.f32 %v193, -0.5
  %v196 = vmul.f32 %v194, -0.5
  %v197 = vmul.f32 %v195, %v193
  %v198 = vmul.f32 %v196, %v194
  %201 = vrot.lane.b32.xlu0 %v167, 127
  %v202 = vpop.permute.xlu0 %201
  %203 = vrot.lane.b32.xlu0 %v169, 127
  %v204 = vpop.permute.xlu0 %203
  %v207 = vsub.f32 %v197, %v202
  %v208 = vsub.f32 %v198, %v204
  %v209 = vsub.f32 %v207, 0.9189385
  %v210 = vsub.f32 %v208, 0.9189385
  %v211 = vadd.f32 %v209, 0.0
  %v212 = vadd.f32 %v210, 0.0
  %215 = vrot.lane.b32.xlu0 %v211, 2
  %v216 = vpop.permute.xlu0 %215
  %217 = vrot.lane.b32.xlu0 %v212, 2
  %v218 = vpop.permute.xlu0 %217
  %vm221 = vcmask 7168
  %v222 = vsel %vm221, %v167, %v172
  %v223 = vsel %vm221, %v169, %v174
  %vm224 = vcmask 15360
  %v225 = vsel %vm224, %v222, %v216
  %v226 = vsel %vm224, %v223, %v218
  %vm227 = vcmask 23552
  %v228 = vsel %vm227, %v225, 0.0
  %v229 = vsel %vm227, %v226, 0.0
  %230 = vst [vmem:[%s5] sm:$0xff] %v228
  %231 = vst [vmem:[%s5 + $0x8] sm:$0xff] %v229
  // Predicated region
  $region22: #{lbanp_forward.9} parent=0 // pred_check
    _
  $region23: #{lbanp_forward.9} parent=0 // pred_check_branch
    %233 = sbr.rel (0) target = $region25
  $region24: #{lbanp_forward.9} parent=0 // pred_region
    _
  $region25: #{lbanp_forward.9} parent=0 // pred_fallthru
    _
  // Predicated region
  $region26: #{lbanp_forward.9} parent=0 // pred_check
    _
  $region27: #{lbanp_forward.9} parent=0 // pred_check_branch
    %235 = sbr.rel (0) target = $region29
  $region28: #{lbanp_forward.9} parent=0 // pred_region
    _
  $region29: #{lbanp_forward.9} parent=0 // pred_fallthru
    _

// kernel: lbanp_forward.8
$region0: #{lbanp_forward.8}
  #allocation0 [shape = 'u32[]', space=smem, size = 0x4, offset = 0x4, fixed_abs, tag = 'smem constant byte address 0x4 - core index']
  #allocation1 [shape = 'u32[72,128]{1,0:T(1,128)}', space=vmem, size = 0x9000, scoped, tag = 'internal scratch']
  %s0 = inlined_call_operand.vmem [shape: f32[2,8,32], index: 0, kind: input, shape index: {}]
  %s1 = inlined_call_operand.vmem [shape: bf16[2,2,8,32], index: 1, kind: input, shape index: {}]
  %s2 = inlined_call_operand.vmem [shape: bf16[2,32,32], index: 2, kind: input, shape index: {}]
  %s3 = inlined_call_operand.vmem [shape: bf16[2,32,64], index: 3, kind: input, shape index: {}]
  %s4 = inlined_call_operand.vmem [shape: bf16[2,32,32], index: 4, kind: input, shape index: {}]
  %s5 = inlined_call_operand.hbm [shape: bf16[2,32,64], index: 5, kind: input, shape index: {}]
  %s6 = inlined_call_operand.vmem [shape: bf16[2,64,32], index: 6, kind: input, shape index: {}]
  %s7 = inlined_call_operand.vmem [shape: f32[2,10,64], index: 7, kind: input, shape index: {}]
  %s8 = inlined_call_operand.vmem [shape: f32[2,8,32], index: 8, kind: output, shape index: {}]
  %s9 = sld [smem:[#allocation0]]
  $region73: #{lbanp_forward.8} parent=0
    _
  %s11 = ssub.s32 1, %s9
  %s12 = scalar_select 0, %s11, %s9
  $region1: #{lbanp_forward.8} parent=0
    #allocation2 [shape = 'u8[16384]{0}', space=vmem, size = 0x4000, scoped, tag = 'input window, operand 5']
    #allocation3 [shape = 's32[2]{0}', space=sflag, size = 0x8, scoped, tag = 'scoped memory for lbanp_forward.8']
    %13 = vsyncpa [#allocation3], 0
    %s14 = scalar_lea.sflag [#allocation3], 1
    %15 = vsyncpa %s14, 0
    loop: start=0, step=1, limit=6
    $region2: #{lbanp_forward.8} parent=1 // loop_pre_header
      _
    $region3: #{lbanp_forward.8} parent=1 // loop_header
      %s17 = sphi 0, %s21
      %p18 = scmp.ge.s32.totalorder %s17, 6
      %s24 = sphi 0, %s36
      %s25 = sphi 0, %s32
      %s26 = sphi 0, %s24
      %s27 = sphi 0, %s25
      %s28 = sphi 0, %s26
      %s29 = sphi 0, %s27
      %s39 = sphi 0, %s41
      %s42 = sphi 0, %s39
      %s43 = sphi 0, %s42
      %s59 = sphi 0, %s43
      %s67 = sphi 0, %s69
      %s70 = sphi 0, %s67
      %s71 = sphi 0, %s70
      %s87 = sphi 0, %s71
      %s93 = sphi 0, %s95
      %s96 = sphi 0, %s93
      %s97 = sphi 0, %s96
      %s113 = sphi 0, %s97
      %s119 = sphi 0, %s121
      %s122 = sphi 0, %s119
      %s123 = sphi 0, %s122
      %s139 = sphi 0, %s123
      %s145 = sphi 0, %s147
      %s148 = sphi 0, %s145
      %s149 = sphi 0, %s148
      %s165 = sphi 0, %s149
      %s171 = sphi 0, %s173
      %s174 = sphi 0, %s171
      %s175 = sphi 0, %s174
      %s191 = sphi 0, %s175
      %s197 = sphi 0, %s199
      %s200 = sphi 0, %s197
      %s201 = sphi 0, %s200
      %s217 = sphi 0, %s201
      %s223 = sphi 0, %s225
      %s226 = sphi 0, %s223
      %s227 = sphi 0, %s226
      %s243 = sphi 0, %s227
      %s249 = sphi 0, %s251
      %s252 = sphi 0, %s249
      %s253 = sphi 0, %s252
      %s269 = sphi 0, %s253
    $region4: #{lbanp_forward.8} parent=1 // loop_header_branch
      %20 = sbr.rel (%p18) target = $region8
    $region5: #{lbanp_forward.8} parent=1 // loop_body
      %s22 = ssub.s32 %s17, 1
      %s23 = ssub.s32 %s17, 2
      %s30 = sadd.s32 1, %s25
      %p31 = scmp.ge.s32.totalorder %s30, 2
      %s32 = scalar_select %p31, 0, %s30
      %s33 = sadd.s32 1, %s24
      %s34 = scalar_select %p31, %s33, %s24
      %p35 = scmp.ge.s32.totalorder %s34, 2
      %s36 = scalar_select %p35, 0, %s34
      %s37 = ssub.s32 %s24, %s36
      %p38 = scmp.eq.s32.totalorder %s37, 0
      %s40 = sadd.s32 %s39, 1
      %s41 = scalar_select %p38, %s39, %s40
      %p44 = pneg %p38
      %p45 = scmp.eq.s32.totalorder %s17, 3
      %p46 = por %p44, %p45
      %p47 = scmp.ne.s32.totalorder %s39, %s42
      %p48 = scmp.eq.s32.totalorder %s17, 0
      %p49 = por %p47, %p48
      %p50 = scmp.ne.s32.totalorder %s39, %s42
      %p51 = scmp.eq.s32.totalorder %s22, 3
      %p52 = por %p50, %p51
      %p53 = scmp.ne.s32.totalorder %s42, %s43
      %p54 = scmp.eq.s32.totalorder %s22, 0
      %p55 = por %p53, %p54
      %p56 = scmp.ne.s32.totalorder %s42, %s43
      %p57 = scmp.eq.s32.totalorder %s23, 3
      %p58 = por %p56, %p57
      %p60 = scmp.ne.s32.totalorder %s43, %s59
      %p61 = scmp.eq.s32.totalorder %s23, 0
      %p62 = por %p60, %p61
      %s63 = ssub.s32 %s24, %s36
      %s64 = ssub.s32 %s25, %s32
      %s65 = sor.u32 %s63, %s64
      %p66 = scmp.eq.s32.totalorder %s65, 0
      %s68 = sadd.s32 %s67, 1
      %s69 = scalar_select %p66, %s67, %s68
      %p72 = pneg %p66
      %p73 = scmp.eq.s32.totalorder %s17, 3
      %p74 = por %p72, %p73
      %p75 = scmp.ne.s32.totalorder %s67, %s70
      %p76 = scmp.eq.s32.totalorder %s17, 0
      %p77 = por %p75, %p76
      %p78 = scmp.ne.s32.totalorder %s67, %s70
      %p79 = scmp.eq.s32.totalorder %s22, 3
      %p80 = por %p78, %p79
      %p81 = scmp.ne.s32.totalorder %s70, %s71
      %p82 = scmp.eq.s32.totalorder %s22, 0
      %p83 = por %p81, %p82
      %p84 = scmp.ne.s32.totalorder %s70, %s71
      %p85 = scmp.eq.s32.totalorder %s23, 3
      %p86 = por %p84, %p85
      %p88 = scmp.ne.s32.totalorder %s71, %s87
      %p89 = scmp.eq.s32.totalorder %s23, 0
      %p90 = por %p88, %p89
      %s91 = ssub.s32 %s25, %s32
      %p92 = scmp.eq.s32.totalorder %s91, 0
      %s94 = sadd.s32 %s93, 1
      %s95 = scalar_select %p92, %s93, %s94
      %p98 = pneg %p92
      %p99 = scmp.eq.s32.totalorder %s17, 3
      %p100 = por %p98, %p99
      %p101 = scmp.ne.s32.totalorder %s93, %s96
      %p102 = scmp.eq.s32.totalorder %s17, 0
      %p103 = por %p101, %p102
      %p104 = scmp.ne.s32.totalorder %s93, %s96
      %p105 = scmp.eq.s32.totalorder %s22, 3
      %p106 = por %p104, %p105
      %p107 = scmp.ne.s32.totalorder %s96, %s97
      %p108 = scmp.eq.s32.totalorder %s22, 0
      %p109 = por %p107, %p108
      %p110 = scmp.ne.s32.totalorder %s96, %s97
      %p111 = scmp.eq.s32.totalorder %s23, 3
      %p112 = por %p110, %p111
      %p114 = scmp.ne.s32.totalorder %s97, %s113
      %p115 = scmp.eq.s32.totalorder %s23, 0
      %p116 = por %p114, %p115
      %s117 = ssub.s32 %s25, %s32
      %p118 = scmp.eq.s32.totalorder %s117, 0
      %s120 = sadd.s32 %s119, 1
      %s121 = scalar_select %p118, %s119, %s120
      %p124 = pneg %p118
      %p125 = scmp.eq.s32.totalorder %s17, 3
      %p126 = por %p124, %p125
      %p127 = scmp.ne.s32.totalorder %s119, %s122
      %p128 = scmp.eq.s32.totalorder %s17, 0
      %p129 = por %p127, %p128
      %p130 = scmp.ne.s32.totalorder %s119, %s122
      %p131 = scmp.eq.s32.totalorder %s22, 3
      %p132 = por %p130, %p131
      %p133 = scmp.ne.s32.totalorder %s122, %s123
      %p134 = scmp.eq.s32.totalorder %s22, 0
      %p135 = por %p133, %p134
      %p136 = scmp.ne.s32.totalorder %s122, %s123
      %p137 = scmp.eq.s32.totalorder %s23, 3
      %p138 = por %p136, %p137
      %p140 = scmp.ne.s32.totalorder %s123, %s139
      %p141 = scmp.eq.s32.totalorder %s23, 0
      %p142 = por %p140, %p141
      %s143 = ssub.s32 %s25, %s32
      %p144 = scmp.eq.s32.totalorder %s143, 0
      %s146 = sadd.s32 %s145, 1
      %s147 = scalar_select %p144, %s145, %s146
      %p150 = pneg %p144
      %p151 = scmp.eq.s32.totalorder %s17, 3
      %p152 = por %p150, %p151
      %p153 = scmp.ne.s32.totalorder %s145, %s148
      %p154 = scmp.eq.s32.totalorder %s17, 0
      %p155 = por %p153, %p154
      %p156 = scmp.ne.s32.totalorder %s145, %s148
      %p157 = scmp.eq.s32.totalorder %s22, 3
      %p158 = por %p156, %p157
      %p159 = scmp.ne.s32.totalorder %s148, %s149
      %p160 = scmp.eq.s32.totalorder %s22, 0
      %p161 = por %p159, %p160
      %p162 = scmp.ne.s32.totalorder %s148, %s149
      %p163 = scmp.eq.s32.totalorder %s23, 3
      %p164 = por %p162, %p163
      %p166 = scmp.ne.s32.totalorder %s149, %s165
      %p167 = scmp.eq.s32.totalorder %s23, 0
      %p168 = por %p166, %p167
      %s169 = ssub.s32 %s25, %s32
      %p170 = scmp.eq.s32.totalorder %s169, 0
      %s172 = sadd.s32 %s171, 1
      %s173 = scalar_select %p170, %s171, %s172
      %p176 = pneg %p170
      %p177 = scmp.eq.s32.totalorder %s17, 3
      %p178 = por %p176, %p177
      %p179 = scmp.ne.s32.totalorder %s171, %s174
      %p180 = scmp.eq.s32.totalorder %s17, 0
      %p181 = por %p179, %p180
      %p182 = scmp.ne.s32.totalorder %s171, %s174
      %p183 = scmp.eq.s32.totalorder %s22, 3
      %p184 = por %p182, %p183
      %p185 = scmp.ne.s32.totalorder %s174, %s175
      %p186 = scmp.eq.s32.totalorder %s22, 0
      %p187 = por %p185, %p186
      %p188 = scmp.ne.s32.totalorder %s174, %s175
      %p189 = scmp.eq.s32.totalorder %s23, 3
      %p190 = por %p188, %p189
      %p192 = scmp.ne.s32.totalorder %s175, %s191
      %p193 = scmp.eq.s32.totalorder %s23, 0
      %p194 = por %p192, %p193
      %s195 = ssub.s32 %s25, %s32
      %p196 = scmp.eq.s32.totalorder %s195, 0
      %s198 = sadd.s32 %s197, 1
      %s199 = scalar_select %p196, %s197, %s198
      %p202 = pneg %p196
      %p203 = scmp.eq.s32.totalorder %s17, 3
      %p204 = por %p202, %p203
      %p205 = scmp.ne.s32.totalorder %s197, %s200
      %p206 = scmp.eq.s32.totalorder %s17, 0
      %p207 = por %p205, %p206
      %p208 = scmp.ne.s32.totalorder %s197, %s200
      %p209 = scmp.eq.s32.totalorder %s22, 3
      %p210 = por %p208, %p209
      %p211 = scmp.ne.s32.totalorder %s200, %s201
      %p212 = scmp.eq.s32.totalorder %s22, 0
      %p213 = por %p211, %p212
      %p214 = scmp.ne.s32.totalorder %s200, %s201
      %p215 = scmp.eq.s32.totalorder %s23, 3
      %p216 = por %p214, %p215
      %p218 = scmp.ne.s32.totalorder %s201, %s217
      %p219 = scmp.eq.s32.totalorder %s23, 0
      %p220 = por %p218, %p219
      %s221 = ssub.s32 %s25, %s32
      %p222 = scmp.eq.s32.totalorder %s221, 0
      %s224 = sadd.s32 %s223, 1
      %s225 = scalar_select %p222, %s223, %s224
      %p228 = pneg %p222
      %p229 = scmp.eq.s32.totalorder %s17, 3
      %p230 = por %p228, %p229
      %p231 = scmp.ne.s32.totalorder %s223, %s226
      %p232 = scmp.eq.s32.totalorder %s17, 0
      %p233 = por %p231, %p232
      %p234 = scmp.ne.s32.totalorder %s223, %s226
      %p235 = scmp.eq.s32.totalorder %s22, 3
      %p236 = por %p234, %p235
      %p237 = scmp.ne.s32.totalorder %s226, %s227
      %p238 = scmp.eq.s32.totalorder %s22, 0
      %p239 = por %p237, %p238
      %p240 = scmp.ne.s32.totalorder %s226, %s227
      %p241 = scmp.eq.s32.totalorder %s23, 3
      %p242 = por %p240, %p241
      %p244 = scmp.ne.s32.totalorder %s227, %s243
      %p245 = scmp.eq.s32.totalorder %s23, 0
      %p246 = por %p244, %p245
      %s247 = ssub.s32 %s24, %s36
      %p248 = scmp.eq.s32.totalorder %s247, 0
      %s250 = sadd.s32 %s249, 1
      %s251 = scalar_select %p248, %s249, %s250
      %p254 = pneg %p248
      %p255 = scmp.eq.s32.totalorder %s17, 3
      %p256 = por %p254, %p255
      %p257 = scmp.ne.s32.totalorder %s249, %s252
      %p258 = scmp.eq.s32.totalorder %s17, 0
      %p259 = por %p257, %p258
      %p260 = scmp.ne.s32.totalorder %s249, %s252
      %p261 = scmp.eq.s32.totalorder %s22, 3
      %p262 = por %p260, %p261
      %p263 = scmp.ne.s32.totalorder %s252, %s253
      %p264 = scmp.eq.s32.totalorder %s22, 0
      %p265 = por %p263, %p264
      %p266 = scmp.ne.s32.totalorder %s252, %s253
      %p267 = scmp.eq.s32.totalorder %s23, 3
      %p268 = por %p266, %p267
      %p270 = scmp.ne.s32.totalorder %s253, %s269
      %p271 = scmp.eq.s32.totalorder %s23, 0
      %p272 = por %p270, %p271
      %p273 = scmp.le.s32.totalorder 1, %s17
      %p274 = scmp.lt.s32.totalorder %s17, 5
      %p275 = pnand %p273, %p274
      %p276 = pneg %p275
      // Predicated region
      $region9: #{lbanp_forward.8} parent=5 // pred_check
        _
      $region10: #{lbanp_forward.8} parent=5 // pred_check_branch
        %278 = sbr.rel (%p275) target = $region12
      $region11: #{lbanp_forward.8} parent=5 // pred_region
        %s279 = ssub.s32 %s17, 1
      $region12: #{lbanp_forward.8} parent=5 // pred_fallthru
        _
      %p280 = scmp.lt.s32.totalorder %s17, 4
      // Predicated region
      $region13: #{lbanp_forward.8} parent=5 // pred_check
        %p281 = pneg %p280
      $region14: #{lbanp_forward.8} parent=5 // pred_check_branch
        %283 = sbr.rel (%p281) target = $region16
      $region15: #{lbanp_forward.8} parent=5 // pred_region
        // Predicated region
        $region17: #{lbanp_forward.8} parent=15 // pred_check
          %p284 = pneg %p49
        $region18: #{lbanp_forward.8} parent=15 // pred_check_branch
          %286 = sbr.rel (%p284) target = $region20
        $region19: #{lbanp_forward.8} parent=15 // pred_region
          %p287 = scmp.lt.s32.totalorder %s24, 1
          %s288 = scalar_select %p287, %s24, 1
          %s289 = smul.addr %s288, 8
          %s290 = scalar_lea.vmem %s0, %s289
        $region20: #{lbanp_forward.8} parent=15 // pred_fallthru
          _
        // Predicated region
        $region21: #{lbanp_forward.8} parent=15 // pred_check
          %p291 = pneg %p77
        $region22: #{lbanp_forward.8} parent=15 // pred_check_branch
          %293 = sbr.rel (%p291) target = $region24
        $region23: #{lbanp_forward.8} parent=15 // pred_region
          %p294 = scmp.lt.s32.totalorder %s24, 1
          %s295 = scalar_select %p294, %s24, 1
          %p296 = scmp.lt.s32.totalorder %s25, 1
          %s297 = scalar_select %p296, %s25, 1
          %s298 = smul.addr %s295, 2
          %s299 = sadd.s32 %s297, %s298
          %s300 = smul.addr %s299, 4
          %s301 = scalar_lea.vmem %s1, %s300
        $region24: #{lbanp_forward.8} parent=15 // pred_fallthru
          _
        // Predicated region
        $region25: #{lbanp_forward.8} parent=15 // pred_check
          %p302 = pneg %p103
        $region26: #{lbanp_forward.8} parent=15 // pred_check_branch
          %304 = sbr.rel (%p302) target = $region28
        $region27: #{lbanp_forward.8} parent=15 // pred_region
          %p305 = scmp.lt.s32.totalorder %s25, 1
          %s306 = scalar_select %p305, %s25, 1
          %s307 = smul.addr %s306, 4
          %s308 = smul.addr %s307, 4
          %s309 = scalar_lea.vmem %s2, %s308
        $region28: #{lbanp_forward.8} parent=15 // pred_fallthru
          _
        // Predicated region
        $region29: #{lbanp_forward.8} parent=15 // pred_check
          %p310 = pneg %p129
        $region30: #{lbanp_forward.8} parent=15 // pred_check_branch
          %312 = sbr.rel (%p310) target = $region32
        $region31: #{lbanp_forward.8} parent=15 // pred_region
          %p313 = scmp.lt.s32.totalorder %s25, 1
          %s314 = scalar_select %p313, %s25, 1
          %s315 = smul.addr %s314, 4
          %s316 = smul.addr %s315, 4
          %s317 = scalar_lea.vmem %s3, %s316
        $region32: #{lbanp_forward.8} parent=15 // pred_fallthru
          _
        // Predicated region
        $region33: #{lbanp_forward.8} parent=15 // pred_check
          %p318 = pneg %p155
        $region34: #{lbanp_forward.8} parent=15 // pred_check_branch
          %320 = sbr.rel (%p318) target = $region36
        $region35: #{lbanp_forward.8} parent=15 // pred_region
          %p321 = scmp.lt.s32.totalorder %s25, 1
          %s322 = scalar_select %p321, %s25, 1
          %s323 = smul.addr %s322, 4
          %s324 = smul.addr %s323, 4
          %s325 = scalar_lea.vmem %s4, %s324
        $region36: #{lbanp_forward.8} parent=15 // pred_fallthru
          _
        // Predicated region
        $region37: #{lbanp_forward.8} parent=15 // pred_check
          %p326 = pneg %p181
        $region38: #{lbanp_forward.8} parent=15 // pred_check_branch
          %328 = sbr.rel (%p326) target = $region40
        $region39: #{lbanp_forward.8} parent=15 // pred_region
          %s329 = sand.u32 %s171, 1
          %s330 = scalar_lea.sflag [#allocation3], %s329
          %s331 = sand.u32 %s171, 1
          %s332 = smul.addr %s331, 16
          %s333 = scalar_lea.vmem [#allocation2], %s332
          %335 = vsyncadd %s330, 0
          %s336 = smul.addr %s25, 4
          %s337 = smul.addr %s336, 4
          %s338 = scalar_lea.hbm %s5, %s337
          %s339 = sshll.u32 %s338, 4
          %s340 = int_to_ptr.hbm [resolvable:$true] %s339
          %s341 = sshll.u32 %s333, 4
          %s342 = int_to_ptr.vmem [resolvable:$true] %s341
          %347 = dma.hbm_to_vmem [thread:$0]  %s340, 256, %s342, %s330, 64, 64, 4
        $region40: #{lbanp_forward.8} parent=15 // pred_fallthru
          _
        // Predicated region
        $region41: #{lbanp_forward.8} parent=15 // pred_check
          %p348 = pneg %p207
        $region42: #{lbanp_forward.8} parent=15 // pred_check_branch
          %350 = sbr.rel (%p348) target = $region44
        $region43: #{lbanp_forward.8} parent=15 // pred_region
          %p351 = scmp.lt.s32.totalorder %s25, 1
          %s352 = scalar_select %p351, %s25, 1
          %s353 = smul.addr %s352, 8
          %s354 = smul.addr %s353, 4
          %s355 = scalar_lea.vmem %s6, %s354
        $region44: #{lbanp_forward.8} parent=15 // pred_fallthru
          _
        // Predicated region
        $region45: #{lbanp_forward.8} parent=15 // pred_check
          %p356 = pneg %p233
        $region46: #{lbanp_forward.8} parent=15 // pred_check_branch
          %358 = sbr.rel (%p356) target = $region48
        $region47: #{lbanp_forward.8} parent=15 // pred_region
          %p359 = scmp.lt.s32.totalorder %s25, 1
          %s360 = scalar_select %p359, %s25, 1
          %s361 = smul.addr %s360, 2
          %s362 = smul.addr %s361, 8
          %s363 = scalar_lea.vmem %s7, %s362
        $region48: #{lbanp_forward.8} parent=15 // pred_fallthru
          _
      $region16: #{lbanp_forward.8} parent=5 // pred_fallthru
        _
      %p364 = scmp.le.s32.totalorder 1, %s17
      %p365 = scmp.lt.s32.totalorder %s17, 5
      %p366 = pnand %p364, %p365
      %p367 = pneg %p366
      // Predicated region
      $region49: #{lbanp_forward.8} parent=5 // pred_check
        _
      $region50: #{lbanp_forward.8} parent=5 // pred_check_branch
        %369 = sbr.rel (%p366) target = $region52
      $region51: #{lbanp_forward.8} parent=5 // pred_region
        %s370 = ssub.s32 %s17, 1
        %s371 = sand.u32 %s174, 1
        %s372 = scalar_lea.sflag [#allocation3], %s371
        %s373 = sand.u32 %s174, 1
        %s374 = smul.addr %s373, 16
        %s375 = scalar_lea.vmem [#allocation2], %s374
        // Predicated region
        $region53: #{lbanp_forward.8} parent=51 // pred_check
          %p376 = pneg %p187
        $region54: #{lbanp_forward.8} parent=51 // pred_check_branch
          %378 = sbr.rel (%p376) target = $region56
        $region55: #{lbanp_forward.8} parent=51 // pred_region
          %380 = dma.done %s372, 256
        $region56: #{lbanp_forward.8} parent=51 // pred_fallthru
          _
        %p381 = scmp.lt.s32.totalorder %s26, 1
        %s382 = scalar_select %p381, %s26, 1
        %s383 = smul.addr %s382, 8
        %s384 = scalar_lea.vmem %s0, %s383
        %p385 = pneg %p55
        %p386 = pneg %p52
        %p387 = scmp.lt.s32.totalorder %s26, 1
        %s388 = scalar_select %p387, %s26, 1
        %p389 = scmp.lt.s32.totalorder %s27, 1
        %s390 = scalar_select %p389, %s27, 1
        %s391 = smul.addr %s388, 2
        %s392 = sadd.s32 %s390, %s391
        %s393 = smul.addr %s392, 4
        %s394 = scalar_lea.vmem %s1, %s393
        %p395 = pneg %p83
        %p396 = pneg %p80
        %p397 = scmp.lt.s32.totalorder %s27, 1
        %s398 = scalar_select %p397, %s27, 1
        %s399 = smul.addr %s398, 4
        %s400 = smul.addr %s399, 4
        %s401 = scalar_lea.vmem %s2, %s400
        %p402 = pneg %p109
        %p403 = pneg %p106
        %p404 = scmp.lt.s32.totalorder %s27, 1
        %s405 = scalar_select %p404, %s27, 1
        %s406 = smul.addr %s405, 4
        %s407 = smul.addr %s406, 4
        %s408 = scalar_lea.vmem %s3, %s407
        %p409 = pneg %p135
        %p410 = pneg %p132
        %p411 = scmp.lt.s32.totalorder %s27, 1
        %s412 = scalar_select %p411, %s27, 1
        %s413 = smul.addr %s412, 4
        %s414 = smul.addr %s413, 4
        %s415 = scalar_lea.vmem %s4, %s414
        %p416 = pneg %p161
        %p417 = pneg %p158
        %s418 = sand.u32 %s174, 1
        %s419 = scalar_lea.sflag [#allocation3], %s418
        %s420 = sand.u32 %s174, 1
        %s421 = smul.addr %s420, 16
        %s422 = scalar_lea.vmem [#allocation2], %s421
        %p423 = pneg %p187
        %p424 = pneg %p184
        %p425 = scmp.lt.s32.totalorder %s27, 1
        %s426 = scalar_select %p425, %s27, 1
        %s427 = smul.addr %s426, 8
        %s428 = smul.addr %s427, 4
        %s429 = scalar_lea.vmem %s6, %s428
        %p430 = pneg %p213
        %p431 = pneg %p210
        %p432 = scmp.lt.s32.totalorder %s27, 1
        %s433 = scalar_select %p432, %s27, 1
        %s434 = smul.addr %s433, 2
        %s435 = smul.addr %s434, 8
        %s436 = scalar_lea.vmem %s7, %s435
        %p437 = pneg %p239
        %p438 = pneg %p236
        %p439 = pneg %p265
        %p440 = pneg %p262
        %p441 = scmp.lt.s32.totalorder %s26, 1
        %s442 = scalar_select %p441, %s26, 1
        %s443 = smul.addr %s442, 8
        %s444 = scalar_lea.vmem %s8, %s443
        %p445 = scmp.lt.s32.totalorder %s26, 1
        %s446 = scalar_select %p445, %s26, 1
        %s447 = smul.addr %s446, 8
        %s448 = scalar_lea.vmem %s0, %s447
        %p449 = scmp.lt.s32.totalorder %s26, 1
        %s450 = scalar_select %p449, %s26, 1
        %p451 = scmp.lt.s32.totalorder %s27, 1
        %s452 = scalar_select %p451, %s27, 1
        %s453 = smul.addr %s450, 2
        %s454 = sadd.s32 %s452, %s453
        %s455 = smul.addr %s454, 4
        %s456 = scalar_lea.vmem %s1, %s455
        %p457 = scmp.lt.s32.totalorder %s27, 1
        %s458 = scalar_select %p457, %s27, 1
        %s459 = smul.addr %s458, 4
        %s460 = smul.addr %s459, 4
        %s461 = scalar_lea.vmem %s2, %s460
        %p462 = scmp.lt.s32.totalorder %s27, 1
        %s463 = scalar_select %p462, %s27, 1
        %s464 = smul.addr %s463, 4
        %s465 = smul.addr %s464, 4
        %s466 = scalar_lea.vmem %s3, %s465
        %p467 = scmp.lt.s32.totalorder %s27, 1
        %s468 = scalar_select %p467, %s27, 1
        %s469 = smul.addr %s468, 4
        %s470 = smul.addr %s469, 4
        %s471 = scalar_lea.vmem %s4, %s470
        %p472 = scmp.lt.s32.totalorder %s27, 1
        %s473 = scalar_select %p472, %s27, 1
        %s474 = smul.addr %s473, 8
        %s475 = smul.addr %s474, 4
        %s476 = scalar_lea.vmem %s6, %s475
        %p477 = scmp.lt.s32.totalorder %s27, 1
        %s478 = scalar_select %p477, %s27, 1
        %s479 = smul.addr %s478, 2
        %s480 = smul.addr %s479, 8
        %s481 = scalar_lea.vmem %s7, %s480
        %p482 = scmp.lt.s32.totalorder %s26, 1
        %s483 = scalar_select %p482, %s26, 1
        %s484 = smul.addr %s483, 8
        %s485 = scalar_lea.vmem %s8, %s484
        %p487 = scmp.eq.s32.totalorder %s27, 0
        // Predicated region
        $region57: #{lbanp_forward.8} parent=51 // pred_check
          %p488 = pneg %p487
        $region58: #{lbanp_forward.8} parent=51 // pred_check_branch
          %490 = sbr.rel (%p488) target = $region60
        $region59: #{lbanp_forward.8} parent=51 // pred_region
          %v491 = vld [vmem:[%s448] sm:$0xff]
          %vm492 = vcmask 261120
          %493 = vst.msk [vmem:[%s485] sm:$0xff] %vm492, %v491
        $region60: #{lbanp_forward.8} parent=51 // pred_fallthru
          _
        %v494 = vld [vmem:[%s485] sm:$0xff]
        %v495 = vld [vmem:[%s456] sm:$0xf]
        %v496 = vld [vmem:[%s461] sm:$0xf]
        %v497 = vld [vmem:[%s461 + $0x4] sm:$0xf]
        %v498 = vld [vmem:[%s461 + $0x8] sm:$0xf]
        %v499 = vld [vmem:[%s461 + $0xc] sm:$0xf]
        %v500 = vld [vmem:[%s466] sm:$0xf]
        %v501 = vld [vmem:[%s466 + $0x4] sm:$0xf]
        %v502 = vld [vmem:[%s466 + $0x8] sm:$0xf]
        %v503 = vld [vmem:[%s466 + $0xc] sm:$0xf]
        %v504 = vld [vmem:[%s471] sm:$0xf]
        %v505 = vld [vmem:[%s471 + $0x4] sm:$0xf]
        %v506 = vld [vmem:[%s471 + $0x8] sm:$0xf]
        %v507 = vld [vmem:[%s471 + $0xc] sm:$0xf]
        %v508 = vld [vmem:[%s375] sm:$0xf]
        %v509 = vld [vmem:[%s375 + $0x4] sm:$0xf]
        %v510 = vld [vmem:[%s375 + $0x8] sm:$0xf]
        %v511 = vld [vmem:[%s375 + $0xc] sm:$0xf]
        %v512 = vld [vmem:[%s476] sm:$0xf]
        %v513 = vld [vmem:[%s476 + $0x4] sm:$0xf]
        %v514 = vld [vmem:[%s476 + $0x8] sm:$0xf]
        %v515 = vld [vmem:[%s476 + $0xc] sm:$0xf]
        %v516 = vld [vmem:[%s476 + $0x10] sm:$0xf]
        %v517 = vld [vmem:[%s476 + $0x14] sm:$0xf]
        %v518 = vld [vmem:[%s476 + $0x18] sm:$0xf]
        %v519 = vld [vmem:[%s476 + $0x1c] sm:$0xf]
        %v520 = vld [vmem:[%s481] sm:$0xff]
        %v521 = vld [vmem:[%s481 + $0x8] sm:$0x3]
        %vm522 = vcmask 261120
        %v523 = vsel %vm522, %v494, 0.0
        %524 = vadd.xlane.f32.xlu0 %v523
        %v525 = vpop.xlane.xlu0 %524
        %v526 = vrcp.pop 32.0
        %v527 = vmul.f32 32.0, %v526
        %v528 = vsub.f32 1.0, %v527
        %v529 = vmul.f32 %v526, %v528
        %v530 = vadd.f32 %v526, %v529
        %vm531 = vweird.f32 %v526
        %v532 = vsel %vm531, %v526, %v530
        %v533 = vmul.f32 %v525, %v532
        %v534 = vsub.f32 %v494, %v533
        %v535 = vmul.f32 %v534, %v534
        %v536 = vsel %vm522, %v535, 0.0
        %537 = vadd.xlane.f32.xlu0 %v536
        %v538 = vpop.xlane.xlu0 %537
        %v539 = vmul.f32 %v538, %v532
        %v540 = vadd.f32 %v539, 1e-05
        %v541 = vrsqrt.pop %v540
        %v542 = vmul.f32 %v541, %v540
        %v543 = vmul.f32 %v542, %v541
        %v544 = vmul.f32 0.5, %v543
        %v545 = vsub.f32 1.5, %v544
        %v546 = vmul.f32 %v541, %v545
        %vm547 = vweird.f32 %v540
        %vm548 = vweird.f32 %v541
        %vm549 = vmor %vm547, %vm548
        %v550 = vsel %vm549, %v541, %v546
        %v551 = vmul.f32 %v534, %v550
        %v552 = vperm.slane %v520, 0
        %v553 = vmul.f32 %v551, %v552
        %v554 = vperm.slane %v520, 1
        %v555 = vadd.f32 %v553, %v554
        %v556 = vpack.c.bf16 %v555, %v555
        %v557 = vperm.slane %v520, 4
        %v562 = vunpack.c.l.b16 %v496
        %v563 = vunpack.c.l.b16 %v497
        %v564 = vunpack.c.l.b16 %v498
        %v565 = vunpack.c.l.b16 %v499
        %v566 = vpack.c.b16 %v563, %v562
        %v567 = vpack.c.b16 %v565, %v564
        %v571 = vsel %vm522, %v556, 0
        %573 = vmatpush.bf16.msra.mxu0 0
        %574 = vmatpush.bf16.msra.mxu0 0
        %575 = vmatpush.bf16.msra.mxu0 0
        %576 = vmatpush.bf16.msra.mxu0 0
        %577 = vmatpush.bf16.msra.mxu0 0
        %578 = vmatpush.bf16.msra.mxu0 0
        %579 = vmatpush.bf16.msra.mxu0 %v567
        %580 = vmatpush.bf16.msra.mxu0 %v566
        %581 = vmatmul.bf16.gmra.mxu0 %v571
        %v582 = vpop.f32.mrf.mxu0
        %v583 = vadd.f32 %v557, %v582
        %v584 = vpop.f32.mrf.mxu0
        %585 = vdwg.mxu0
        %v590 = vunpack.c.l.b16 %v500
        %v591 = vunpack.c.l.b16 %v501
        %v592 = vunpack.c.l.b16 %v502
        %v593 = vunpack.c.l.b16 %v503
        %v594 = vpack.c.b16 %v591, %v590
        %v595 = vpack.c.b16 %v593, %v592
        %v599 = vsel %vm522, %v495, 0
        %601 = vmatpush.bf16.msra.mxu0 0
        %602 = vmatpush.bf16.msra.mxu0 0
        %603 = vmatpush.bf16.msra.mxu0 0
        %604 = vmatpush.bf16.msra.mxu0 0
        %605 = vmatpush.bf16.msra.mxu0 0
        %606 = vmatpush.bf16.msra.mxu0 0
        %607 = vmatpush.bf16.msra.mxu0 %v595
        %608 = vmatpush.bf16.msra.mxu0 %v594
        %609 = vmatmul.bf16.gmra.mxu0 %v599
        %v610 = vpop.f32.mrf.mxu0
        %v611 = vadd.f32 0.0, %v610
        %v612 = vpop.f32.mrf.mxu0
        %613 = vdwg.mxu0
        %v614 = vperm.slane %v520, 5
        %v615 = vadd.f32 %v611, %v614
        %v616 = vperm.slane %v520, 6
        %618 = vrot.lane.b32.xlu0 %v616, 32
        %v619 = vpop.permute.xlu0 %618
        %v621 = vadd.f32 %v611, %v619
        %v622 = vpack.c.bf16 %v583, %v583
        %624 = vrot.lane.b32.xlu0 %v622, 120
        %v625 = vpop.permute.xlu0 %624
        %626 = vrot.lane.b32.xlu0 %v622, 112
        %v627 = vpop.permute.xlu0 %626
        %628 = vrot.lane.b32.xlu0 %v622, 104
        %v629 = vpop.permute.xlu0 %628
        %v630 = vpack.c.bf16 %v615, %v615
        %632 = vrot.lane.b32.xlu0 %v630, 120
        %v633 = vpop.permute.xlu0 %632
        %634 = vrot.lane.b32.xlu0 %v630, 112
        %v635 = vpop.permute.xlu0 %634
        %636 = vrot.lane.b32.xlu0 %v630, 104
        %v637 = vpop.permute.xlu0 %636
        %v638 = vpack.c.bf16 %v621, %v621
        %640 = vrot.lane.b32.xlu0 %v638, 120
        %v641 = vpop.permute.xlu0 %640
        %642 = vrot.lane.b32.xlu0 %v638, 112
        %v643 = vpop.permute.xlu0 %642
        %644 = vrot.lane.b32.xlu0 %v638, 104
        %v645 = vpop.permute.xlu0 %644
        %vm646 = vcmask 64512
        %v648 = vsel %vm646, %v622, 0
        %v651 = vsel %vm646, %v630, 0
        %653 = vmatpush.bf16.xpose.msra.mxu0 0
        %654 = vmatpush.bf16.xpose.msra.mxu0 0
        %655 = vmatpush.bf16.xpose.msra.mxu0 0
        %656 = vmatpush.bf16.xpose.msra.mxu0 0
        %657 = vmatpush.bf16.xpose.msra.mxu0 0
        %658 = vmatpush.bf16.xpose.msra.mxu0 0
        %659 = vmatpush.bf16.xpose.msra.mxu0 0
        %660 = vmatpush.bf16.xpose.msra.mxu0 %v651
        %661 = vmatmul.bf16.gmra.mxu0 %v648
        %v662 = vpop.f32.mrf.mxu0
        %v663 = vadd.f32 0.0, %v662
        %v664 = vpop.f32.mrf.mxu0
        %665 = vdwg.mxu0
        %v667 = vsel %vm646, %v625, 0
        %v670 = vsel %vm646, %v633, 0
        %672 = vmatpush.bf16.xpose.msra.mxu0 0
        %673 = vmatpush.bf16.xpose.msra.mxu0 0
        %674 = vmatpush.bf16.xpose.msra.mxu0 0
        %675 = vmatpush.bf16.xpose.msra.mxu0 0
        %676 = vmatpush.bf16.xpose.msra.mxu0 0
        %677 = vmatpush.bf16.xpose.msra.mxu0 0
        %678 = vmatpush.bf16.xpose.msra.mxu0 0
        %679 = vmatpush.bf16.xpose.msra.mxu0 %v670
        %680 = vmatmul.bf16.gmra.mxu0 %v667
        %v681 = vpop.f32.mrf.mxu0
        %v682 = vadd.f32 0.0, %v681
        %v683 = vpop.f32.mrf.mxu0
        %684 = vdwg.mxu0
        %v686 = vsel %vm646, %v627, 0
        %v689 = vsel %vm646, %v635, 0
        %691 = vmatpush.bf16.xpose.msra.mxu0 0
        %692 = vmatpush.bf16.xpose.msra.mxu0 0
        %693 = vmatpush.bf16.xpose.msra.mxu0 0
        %694 = vmatpush.bf16.xpose.msra.mxu0 0
        %695 = vmatpush.bf16.xpose.msra.mxu0 0
        %696 = vmatpush.bf16.xpose.msra.mxu0 0
        %697 = vmatpush.bf16.xpose.msra.mxu0 0
        %698 = vmatpush.bf16.xpose.msra.mxu0 %v689
        %699 = vmatmul.bf16.gmra.mxu0 %v686
        %v700 = vpop.f32.mrf.mxu0
        %v701 = vadd.f32 0.0, %v700
        %v702 = vpop.f32.mrf.mxu0
        %703 = vdwg.mxu0
        %v705 = vsel %vm646, %v629, 0
        %v708 = vsel %vm646, %v637, 0
        %710 = vmatpush.bf16.xpose.msra.mxu0 0
        %711 = vmatpush.bf16.xpose.msra.mxu0 0
        %712 = vmatpush.bf16.xpose.msra.mxu0 0
        %713 = vmatpush.bf16.xpose.msra.mxu0 0
        %714 = vmatpush.bf16.xpose.msra.mxu0 0
        %715 = vmatpush.bf16.xpose.msra.mxu0 0
        %716 = vmatpush.bf16.xpose.msra.mxu0 0
        %717 = vmatpush.bf16.xpose.msra.mxu0 %v708
        %718 = vmatmul.bf16.gmra.mxu0 %v705
        %v719 = vpop.f32.mrf.mxu0
        %v720 = vadd.f32 0.0, %v719
        %v721 = vpop.f32.mrf.mxu0
        %722 = vdwg.mxu0
        %v723 = vmul.f32 %v663, 0.35355338
        %v724 = vmul.f32 %v682, 0.35355338
        %v725 = vmul.f32 %v701, 0.35355338
        %v726 = vmul.f32 %v720, 0.35355338
        %v727 = vsel %vm646, %v723, -inf
        %728 = vmax.xlane.f32.xlu0 %v727
        %v729 = vpop.xlane.xlu0 %728
        %v730 = vsel %vm646, %v724, -inf
        %731 = vmax.xlane.f32.xlu0 %v730
        %v732 = vpop.xlane.xlu0 %731
        %v733 = vsel %vm646, %v725, -inf
        %734 = vmax.xlane.f32.xlu0 %v733
        %v735 = vpop.xlane.xlu0 %734
        %v736 = vsel %vm646, %v726, -inf
        %737 = vmax.xlane.f32.xlu0 %v736
        %v738 = vpop.xlane.xlu0 %737
        %v739 = vsub.f32 %v723, %v729
        %v740 = vsub.f32 %v724, %v732
        %v741 = vsub.f32 %v725, %v735
        %v742 = vsub.f32 %v726, %v738
        %v743 = vmul.f32 %v739, 1.442695
        %v744 = vpow.pop %v743
        %v745 = vmul.f32 %v740, 1.442695
        %v746 = vpow.pop %v745
        %v747 = vmul.f32 %v741, 1.442695
        %v748 = vpow.pop %v747
        %v749 = vmul.f32 %v742, 1.442695
        %v750 = vpow.pop %v749
        %v751 = vsel %vm646, %v744, 0.0
        %752 = vadd.xlane.f32.xlu0 %v751
        %v753 = vpop.xlane.xlu0 %752
        %v754 = vsel %vm646, %v746, 0.0
        %755 = vadd.xlane.f32.xlu0 %v754
        %v756 = vpop.xlane.xlu0 %755
        %v757 = vsel %vm646, %v748, 0.0
        %758 = vadd.xlane.f32.xlu0 %v757
        %v759 = vpop.xlane.xlu0 %758
        %v760 = vsel %vm646, %v750, 0.0
        %761 = vadd.xlane.f32.xlu0 %v760
        %v762 = vpop.xlane.xlu0 %761
        %v763 = vrcp.pop %v753
        %v764 = vrcp.pop %v756
        %v765 = vrcp.pop %v759
        %v766 = vrcp.pop %v762
        %v767 = vmul.f32 %v744, %v763
        %v768 = vmul.f32 %v746, %v764
        %v769 = vmul.f32 %v748, %v765
        %v770 = vmul.f32 %v750, %v766
        %v771 = vpack.c.bf16 %v767, %v767
        %v772 = vpack.c.bf16 %v768, %v768
        %v773 = vpack.c.bf16 %v769, %v769
        %v774 = vpack.c.bf16 %v770, %v770
        %v775 = vunpack.c.l.b16 %v638
        %v776 = vpack.c.b16 %v775, %v775
        %777 = vrot.lane.b32.xlu0 %v776, 96
        %v778 = vpop.permute.xlu0 %777
        %v780 = vsel %vm646, %v771, 0
        %vm782 = vcmask 1043456
        %v784 = vsel %vm782, %v778, 0
        %786 = vmatpush.bf16.msra.mxu0 0
        %787 = vmatpush.bf16.msra.mxu0 0
        %788 = vmatpush.bf16.msra.mxu0 0
        %789 = vmatpush.bf16.msra.mxu0 0
        %790 = vmatpush.bf16.msra.mxu0 0
        %791 = vmatpush.bf16.msra.mxu0 0
        %792 = vmatpush.bf16.msra.mxu0 0
        %793 = vmatpush.bf16.msra.mxu0 %v784
        %794 = vmatmul.bf16.gmra.mxu0 %v780
        %v795 = vpop.f32.mrf.mxu0
        %v796 = vadd.f32 0.0, %v795
        %v797 = vpop.f32.mrf.mxu0
        %798 = vdwg.mxu0
        %v799 = vunpack.c.l.b16 %v641
        %v800 = vpack.c.b16 %v799, %v799
        %801 = vrot.lane.b32.xlu0 %v800, 96
        %v802 = vpop.permute.xlu0 %801
        %v804 = vsel %vm646, %v772, 0
        %v807 = vsel %vm782, %v802, 0
        %809 = vmatpush.bf16.msra.mxu0 0
        %810 = vmatpush.bf16.msra.mxu0 0
        %811 = vmatpush.bf16.msra.mxu0 0
        %812 = vmatpush.bf16.msra.mxu0 0
        %813 = vmatpush.bf16.msra.mxu0 0
        %814 = vmatpush.bf16.msra.mxu0 0
        %815 = vmatpush.bf16.msra.mxu0 0
        %816 = vmatpush.bf16.msra.mxu0 %v807
        %817 = vmatmul.bf16.gmra.mxu0 %v804
        %v818 = vpop.f32.mrf.mxu0
        %v819 = vadd.f32 0.0, %v818
        %v820 = vpop.f32.mrf.mxu0
        %821 = vdwg.mxu0
        %v822 = vunpack.c.l.b16 %v643
        %v823 = vpack.c.b16 %v822, %v822
        %824 = vrot.lane.b32.xlu0 %v823, 96
        %v825 = vpop.permute.xlu0 %824
        %v827 = vsel %vm646, %v773, 0
        %v830 = vsel %vm782, %v825, 0
        %832 = vmatpush.bf16.msra.mxu0 0
        %833 = vmatpush.bf16.msra.mxu0 0
        %834 = vmatpush.bf16.msra.mxu0 0
        %835 = vmatpush.bf16.msra.mxu0 0
        %836 = vmatpush.bf16.msra.mxu0 0
        %837 = vmatpush.bf16.msra.mxu0 0
        %838 = vmatpush.bf16.msra.mxu0 0
        %839 = vmatpush.bf16.msra.mxu0 %v830
        %840 = vmatmul.bf16.gmra.mxu0 %v827
        %v841 = vpop.f32.mrf.mxu0
        %v842 = vadd.f32 0.0, %v841
        %v843 = vpop.f32.mrf.mxu0
        %844 = vdwg.mxu0
        %v845 = vunpack.c.l.b16 %v645
        %v846 = vpack.c.b16 %v845, %v845
        %847 = vrot.lane.b32.xlu0 %v846, 96
        %v848 = vpop.permute.xlu0 %847
        %v850 = vsel %vm646, %v774, 0
        %v853 = vsel %vm782, %v848, 0
        %855 = vmatpush.bf16.msra.mxu0 0
        %856 = vmatpush.bf16.msra.mxu0 0
        %857 = vmatpush.bf16.msra.mxu0 0
        %858 = vmatpush.bf16.msra.mxu0 0
        %859 = vmatpush.bf16.msra.mxu0 0
        %860 = vmatpush.bf16.msra.mxu0 0
        %861 = vmatpush.bf16.msra.mxu0 0
        %862 = vmatpush.bf16.msra.mxu0 %v853
        %863 = vmatmul.bf16.gmra.mxu0 %v850
        %v864 = vpop.f32.mrf.mxu0
        %v865 = vadd.f32 0.0, %v864
        %v866 = vpop.f32.mrf.mxu0
        %867 = vdwg.mxu0
        %869 = vrot.lane.b32.xlu0 %v819, 8
        %v870 = vpop.permute.xlu0 %869
        %873 = vrot.lane.b32.xlu0 %v842, 16
        %v874 = vpop.permute.xlu0 %873
        %877 = vrot.lane.b32.xlu0 %v865, 24
        %v878 = vpop.permute.xlu0 %877
        %v880 = vsel %vm646, %v796, %v870
        %vm881 = vcmask 130048
        %v882 = vsel %vm881, %v880, %v874
        %vm883 = vcmask 195584
        %v884 = vsel %vm883, %v882, %v878
        %v885 = vpack.c.bf16 %v884, %v884
        %v886 = vperm.slane %v520, 7
        %v891 = vunpack.c.l.b16 %v504
        %v892 = vunpack.c.l.b16 %v505
        %v893 = vunpack.c.l.b16 %v506
        %v894 = vunpack.c.l.b16 %v507
        %v895 = vpack.c.b16 %v892, %v891
        %v896 = vpack.c.b16 %v894, %v893
        %v900 = vsel %vm522, %v885, 0
        %902 = vmatpush.bf16.msra.mxu0 0
        %903 = vmatpush.bf16.msra.mxu0 0
        %904 = vmatpush.bf16.msra.mxu0 0
        %905 = vmatpush.bf16.msra.mxu0 0
        %906 = vmatpush.bf16.msra.mxu0 0
        %907 = vmatpush.bf16.msra.mxu0 0
        %908 = vmatpush.bf16.msra.mxu0 %v896
        %909 = vmatpush.bf16.msra.mxu0 %v895
        %910 = vmatmul.bf16.gmra.mxu0 %v900
        %v911 = vpop.f32.mrf.mxu0
        %v912 = vadd.f32 %v886, %v911
        %v913 = vpop.f32.mrf.mxu0
        %914 = vdwg.mxu0
        %v915 = vadd.f32 %v494, %v912
        %v916 = vsel %vm522, %v915, 0.0
        %917 = vadd.xlane.f32.xlu0 %v916
        %v918 = vpop.xlane.xlu0 %917
        %v919 = vmul.f32 %v918, %v532
        %v920 = vsub.f32 %v915, %v919
        %v921 = vmul.f32 %v920, %v920
        %v922 = vsel %vm522, %v921, 0.0
        %923 = vadd.xlane.f32.xlu0 %v922
        %v924 = vpop.xlane.xlu0 %923
        %v925 = vmul.f32 %v924, %v532
        %v926 = vadd.f32 %v925, 1e-05
        %v927 = vrsqrt.pop %v926
        %v928 = vmul.f32 %v927, %v926
        %v929 = vmul.f32 %v928, %v927
        %v930 = vmul.f32 0.5, %v929
        %v931 = vsub.f32 1.5, %v930
        %v932 = vmul.f32 %v927, %v931
        %vm933 = vweird.f32 %v926
        %vm934 = vweird.f32 %v927
        %vm935 = vmor %vm933, %vm934
        %v936 = vsel %vm935, %v927, %v932
        %v937 = vmul.f32 %v920, %v936
        %v938 = vperm.slane %v520, 2
        %v939 = vmul.f32 %v937, %v938
        %v940 = vperm.slane %v520, 3
        %v941 = vadd.f32 %v939, %v940
        %v942 = vpack.c.bf16 %v941, %v941
        %v943 = vperm.slane %v521, 1
        %v948 = vunpack.c.l.b16 %v508
        %v949 = vunpack.c.l.b16 %v509
        %v950 = vunpack.c.l.b16 %v510
        %v951 = vunpack.c.l.b16 %v511
        %v952 = vpack.c.b16 %v949, %v948
        %v953 = vpack.c.b16 %v951, %v950
        %v957 = vsel %vm522, %v942, 0
        %959 = vmatpush.bf16.msra.mxu0 0
        %960 = vmatpush.bf16.msra.mxu0 0
        %961 = vmatpush.bf16.msra.mxu0 0
        %962 = vmatpush.bf16.msra.mxu0 0
        %963 = vmatpush.bf16.msra.mxu0 0
        %964 = vmatpush.bf16.msra.mxu0 0
        %965 = vmatpush.bf16.msra.mxu0 %v953
        %966 = vmatpush.bf16.msra.mxu0 %v952
        %967 = vmatmul.bf16.gmra.mxu0 %v957
        %v968 = vpop.f32.mrf.mxu0
        %v969 = vadd.f32 %v943, %v968
        %v970 = vpop.f32.mrf.mxu0
        %971 = vdwg.mxu0
        %v972 = vmax.f32 %v969, 0.0
        %v973 = vpack.c.bf16 %v972, %v972
        %v974 = vperm.slane %v521, 0
        %v983 = vunpack.c.l.b16 %v512
        %v984 = vunpack.c.l.b16 %v513
        %v985 = vunpack.c.l.b16 %v514
        %v986 = vunpack.c.l.b16 %v515
        %v987 = vunpack.c.l.b16 %v516
        %v988 = vunpack.c.l.b16 %v517
        %v989 = vunpack.c.l.b16 %v518
        %v990 = vunpack.c.l.b16 %v519
        %v991 = vpack.c.b16 %v984, %v983
        %v992 = vpack.c.b16 %v986, %v985
        %v993 = vpack.c.b16 %v988, %v987
        %v994 = vpack.c.b16 %v990, %v989
        %vm999 = vcmask 523264
        %v1001 = vsel %vm999, %v973, 0
        %1003 = vmatpush.bf16.msra.mxu0 0
        %1004 = vmatpush.bf16.msra.mxu0 0
        %1005 = vmatpush.bf16.msra.mxu0 0
        %1006 = vmatpush.bf16.msra.mxu0 0
        %1007 = vmatpush.bf16.msra.mxu0 %v994
        %1008 = vmatpush.bf16.msra.mxu0 %v993
        %1009 = vmatpush.bf16.msra.mxu0 %v992
        %1010 = vmatpush.bf16.msra.mxu0 %v991
        %1011 = vmatmul.bf16.gmra.mxu0 %v1001
        %v1012 = vpop.f32.mrf.mxu0
        %v1013 = vadd.f32 %v974, %v1012
        %v1014 = vpop.f32.mrf.mxu0
        %1015 = vdwg.mxu0
        %v1016 = vadd.f32 %v915, %v1013
        %1017 = vst.msk [vmem:[%s485] sm:$0xff] %vm522, %v1016
        %p1018 = scmp.lt.s32.totalorder %s26, 1
        %s1019 = scalar_select %p1018, %s26, 1
        %s1020 = smul.addr %s1019, 8
        %s1021 = scalar_lea.vmem %s8, %s1020
        // Predicated region
        $region61: #{lbanp_forward.8} parent=51 // pred_check
          %p1022 = pneg %p262
        $region62: #{lbanp_forward.8} parent=51 // pred_check_branch
          %1024 = sbr.rel (%p1022) target = $region64
        $region63: #{lbanp_forward.8} parent=51 // pred_region
          _
        $region64: #{lbanp_forward.8} parent=51 // pred_fallthru
          _
      $region52: #{lbanp_forward.8} parent=5 // pred_fallthru
        _
      %p1025 = scmp.le.s32.totalorder 2, %s17
      // Predicated region
      $region65: #{lbanp_forward.8} parent=5 // pred_check
        %p1026 = pneg %p1025
      $region66: #{lbanp_forward.8} parent=5 // pred_check_branch
        %1028 = sbr.rel (%p1026) target = $region68
      $region67: #{lbanp_forward.8} parent=5 // pred_region
        %s1029 = ssub.s32 %s17, 2
        // Predicated region
        $region69: #{lbanp_forward.8} parent=67 // pred_check
          %p1030 = pneg %p268
        $region70: #{lbanp_forward.8} parent=67 // pred_check_branch
          %1032 = sbr.rel (%p1030) target = $region72
        $region71: #{lbanp_forward.8} parent=67 // pred_region
          %p1033 = scmp.lt.s32.totalorder %s28, 1
          %s1034 = scalar_select %p1033, %s28, 1
          %s1035 = smul.addr %s1034, 8
          %s1036 = scalar_lea.vmem %s8, %s1035
        $region72: #{lbanp_forward.8} parent=67 // pred_fallthru
          _
      $region68: #{lbanp_forward.8} parent=5 // pred_fallthru
        _
    $region6: #{lbanp_forward.8} parent=1 // loop_footer
      %s21 = sadd.s32 1, %s17
    $region7: #{lbanp_forward.8} parent=1 // loop_footer_branch
      %16 = sbr.rel target = $region3
    $region8: #{lbanp_forward.8} parent=1 // loop_exit
      _
    %1037 = vsyncpa [#allocation3], 1
    %s1038 = scalar_lea.sflag [#allocation3], 1
    %1039 = vsyncpa %s1038, 1

// kernel: lbanp_forward.6
$region0: #{lbanp_forward.6}
  #allocation0 [shape = 'u32[]', space=smem, size = 0x4, offset = 0x4, fixed_abs, tag = 'smem constant byte address 0x4 - core index']
  #allocation1 [shape = 'u32[72,128]{1,0:T(1,128)}', space=vmem, size = 0x9000, scoped, tag = 'internal scratch']
  #allocation2 [shape = 'f32[8,32]{1,0:T(8,128)}', space=vmem, size = 0x1000, scoped, tag = 'scratch operand']
  %s0 = inlined_call_operand.hbm [shape: f32[8,32], index: 0, kind: input, shape index: {}]
  %s1 = inlined_call_operand.vmem [shape: bf16[2,8,32], index: 1, kind: input, shape index: {}]
  %s2 = inlined_call_operand.vmem [shape: bf16[2,32,32], index: 2, kind: input, shape index: {}]
  %s3 = inlined_call_operand.vmem [shape: bf16[2,32,64], index: 3, kind: input, shape index: {}]
  %s4 = inlined_call_operand.vmem [shape: bf16[2,32,32], index: 4, kind: input, shape index: {}]
  %s5 = inlined_call_operand.vmem [shape: bf16[2,32,64], index: 5, kind: input, shape index: {}]
  %s6 = inlined_call_operand.vmem [shape: bf16[2,64,32], index: 6, kind: input, shape index: {}]
  %s7 = inlined_call_operand.vmem [shape: f32[2,10,64], index: 7, kind: input, shape index: {}]
  %s8 = inlined_call_operand.vmem [shape: bf16[2,32,32], index: 8, kind: input, shape index: {}]
  %s9 = inlined_call_operand.vmem [shape: bf16[2,32,64], index: 9, kind: input, shape index: {}]
  %s10 = inlined_call_operand.hbm [shape: bf16[2,32,32], index: 10, kind: input, shape index: {}]
  %s11 = inlined_call_operand.hbm [shape: bf16[2,32,64], index: 11, kind: input, shape index: {}]
  %s12 = inlined_call_operand.vmem [shape: bf16[2,64,32], index: 12, kind: input, shape index: {}]
  %s13 = inlined_call_operand.vmem [shape: f32[2,10,64], index: 13, kind: input, shape index: {}]
  %s14 = inlined_call_operand.vmem [shape: bf16[2,2,8,32], index: 14, kind: output, shape index: {}]
  %s15 = sld [smem:[#allocation0]]
  $region105: #{lbanp_forward.6} parent=0
    _
  %s17 = ssub.s32 1, %s15
  %s18 = scalar_select 0, %s17, %s15
  $region1: #{lbanp_forward.6} parent=0
    #allocation3 [shape = 'u8[4096]{0}', space=vmem, size = 0x1000, scoped, tag = 'input window, operand 0, single buffered']
    #allocation4 [shape = 's32[2]{0}', space=sflag, size = 0x8, scoped, tag = 'scoped memory for lbanp_forward.6']
    #allocation5 [shape = 'u8[16384]{0}', space=vmem, size = 0x4000, scoped, tag = 'input window, operand 10']
    #allocation6 [shape = 's32[2]{0}', space=sflag, size = 0x8, scoped, tag = 'scoped memory for lbanp_forward.6']
    #allocation7 [shape = 'u8[16384]{0}', space=vmem, size = 0x4000, scoped, tag = 'input window, operand 11']
    %19 = vsyncpa [#allocation4], 0
    %20 = vsyncpa [#allocation6], 0
    %s21 = scalar_lea.sflag [#allocation6], 1
    %22 = vsyncpa %s21, 0
    loop: start=0, step=1, limit=6
    $region2: #{lbanp_forward.6} parent=1 // loop_pre_header
      _
    $region3: #{lbanp_forward.6} parent=1 // loop_header
      %s24 = sphi 0, %s28
      %p25 = scmp.ge.s32.totalorder %s24, 6
      %s31 = sphi 0, %s43
      %s32 = sphi 0, %s39
      %s33 = sphi 0, %s31
      %s34 = sphi 0, %s32
      %s35 = sphi 0, %s33
      %s36 = sphi 0, %s34
      %s44 = sphi 0, %s44
      %s46 = sphi 0, %s44
      %s47 = sphi 0, %s46
      %s61 = sphi 0, %s47
      %s67 = sphi 0, %s69
      %s70 = sphi 0, %s67
      %s71 = sphi 0, %s70
      %s87 = sphi 0, %s71
      %s93 = sphi 0, %s95
      %s96 = sphi 0, %s93
      %s97 = sphi 0, %s96
      %s113 = sphi 0, %s97
      %s119 = sphi 0, %s121
      %s122 = sphi 0, %s119
      %s123 = sphi 0, %s122
      %s139 = sphi 0, %s123
      %s145 = sphi 0, %s147
      %s148 = sphi 0, %s145
      %s149 = sphi 0, %s148
      %s165 = sphi 0, %s149
      %s171 = sphi 0, %s173
      %s174 = sphi 0, %s171
      %s175 = sphi 0, %s174
      %s191 = sphi 0, %s175
      %s197 = sphi 0, %s199
      %s200 = sphi 0, %s197
      %s201 = sphi 0, %s200
      %s217 = sphi 0, %s201
      %s223 = sphi 0, %s225
      %s226 = sphi 0, %s223
      %s227 = sphi 0, %s226
      %s243 = sphi 0, %s227
      %s249 = sphi 0, %s251
      %s252 = sphi 0, %s249
      %s253 = sphi 0, %s252
      %s269 = sphi 0, %s253
      %s275 = sphi 0, %s277
      %s278 = sphi 0, %s275
      %s279 = sphi 0, %s278
      %s295 = sphi 0, %s279
      %s301 = sphi 0, %s303
      %s304 = sphi 0, %s301
      %s305 = sphi 0, %s304
      %s321 = sphi 0, %s305
      %s327 = sphi 0, %s329
      %s330 = sphi 0, %s327
      %s331 = sphi 0, %s330
      %s347 = sphi 0, %s331
      %s353 = sphi 0, %s355
      %s356 = sphi 0, %s353
      %s357 = sphi 0, %s356
      %s373 = sphi 0, %s357
      %s379 = sphi 0, %s381
      %s382 = sphi 0, %s379
      %s383 = sphi 0, %s382
      %s399 = sphi 0, %s383
      %s407 = sphi 0, %s409
      %s410 = sphi 0, %s407
      %s411 = sphi 0, %s410
      %s427 = sphi 0, %s411
    $region4: #{lbanp_forward.6} parent=1 // loop_header_branch
      %27 = sbr.rel (%p25) target = $region8
    $region5: #{lbanp_forward.6} parent=1 // loop_body
      %s29 = ssub.s32 %s24, 1
      %s30 = ssub.s32 %s24, 2
      %s37 = sadd.s32 1, %s32
      %p38 = scmp.ge.s32.totalorder %s37, 2
      %s39 = scalar_select %p38, 0, %s37
      %s40 = sadd.s32 1, %s31
      %s41 = scalar_select %p38, %s40, %s31
      %p42 = scmp.ge.s32.totalorder %s41, 2
      %s43 = scalar_select %p42, 0, %s41
      %s45 = sadd.s32 %s44, 1
      %p48 = scmp.eq.s32.totalorder %s24, 3
      %p49 = scmp.ne.s32.totalorder %s44, %s46
      %p50 = scmp.eq.s32.totalorder %s24, 0
      %p51 = por %p49, %p50
      %p52 = scmp.ne.s32.totalorder %s44, %s46
      %p53 = scmp.eq.s32.totalorder %s29, 3
      %p54 = por %p52, %p53
      %p55 = scmp.ne.s32.totalorder %s46, %s47
      %p56 = scmp.eq.s32.totalorder %s29, 0
      %p57 = por %p55, %p56
      %p58 = scmp.ne.s32.totalorder %s46, %s47
      %p59 = scmp.eq.s32.totalorder %s30, 3
      %p60 = por %p58, %p59
      %p62 = scmp.ne.s32.totalorder %s47, %s61
      %p63 = scmp.eq.s32.totalorder %s30, 0
      %p64 = por %p62, %p63
      %s65 = ssub.s32 %s31, %s43
      %p66 = scmp.eq.s32.totalorder %s65, 0
      %s68 = sadd.s32 %s67, 1
      %s69 = scalar_select %p66, %s67, %s68
      %p72 = pneg %p66
      %p73 = scmp.eq.s32.totalorder %s24, 3
      %p74 = por %p72, %p73
      %p75 = scmp.ne.s32.totalorder %s67, %s70
      %p76 = scmp.eq.s32.totalorder %s24, 0
      %p77 = por %p75, %p76
      %p78 = scmp.ne.s32.totalorder %s67, %s70
      %p79 = scmp.eq.s32.totalorder %s29, 3
      %p80 = por %p78, %p79
      %p81 = scmp.ne.s32.totalorder %s70, %s71
      %p82 = scmp.eq.s32.totalorder %s29, 0
      %p83 = por %p81, %p82
      %p84 = scmp.ne.s32.totalorder %s70, %s71
      %p85 = scmp.eq.s32.totalorder %s30, 3
      %p86 = por %p84, %p85
      %p88 = scmp.ne.s32.totalorder %s71, %s87
      %p89 = scmp.eq.s32.totalorder %s30, 0
      %p90 = por %p88, %p89
      %s91 = ssub.s32 %s32, %s39
      %p92 = scmp.eq.s32.totalorder %s91, 0
      %s94 = sadd.s32 %s93, 1
      %s95 = scalar_select %p92, %s93, %s94
      %p98 = pneg %p92
      %p99 = scmp.eq.s32.totalorder %s24, 3
      %p100 = por %p98, %p99
      %p101 = scmp.ne.s32.totalorder %s93, %s96
      %p102 = scmp.eq.s32.totalorder %s24, 0
      %p103 = por %p101, %p102
      %p104 = scmp.ne.s32.totalorder %s93, %s96
      %p105 = scmp.eq.s32.totalorder %s29, 3
      %p106 = por %p104, %p105
      %p107 = scmp.ne.s32.totalorder %s96, %s97
      %p108 = scmp.eq.s32.totalorder %s29, 0
      %p109 = por %p107, %p108
      %p110 = scmp.ne.s32.totalorder %s96, %s97
      %p111 = scmp.eq.s32.totalorder %s30, 3
      %p112 = por %p110, %p111
      %p114 = scmp.ne.s32.totalorder %s97, %s113
      %p115 = scmp.eq.s32.totalorder %s30, 0
      %p116 = por %p114, %p115
      %s117 = ssub.s32 %s32, %s39
      %p118 = scmp.eq.s32.totalorder %s117, 0
      %s120 = sadd.s32 %s119, 1
      %s121 = scalar_select %p118, %s119, %s120
      %p124 = pneg %p118
      %p125 = scmp.eq.s32.totalorder %s24, 3
      %p126 = por %p124, %p125
      %p127 = scmp.ne.s32.totalorder %s119, %s122
      %p128 = scmp.eq.s32.totalorder %s24, 0
      %p129 = por %p127, %p128
      %p130 = scmp.ne.s32.totalorder %s119, %s122
      %p131 = scmp.eq.s32.totalorder %s29, 3
      %p132 = por %p130, %p131
      %p133 = scmp.ne.s32.totalorder %s122, %s123
      %p134 = scmp.eq.s32.totalorder %s29, 0
      %p135 = por %p133, %p134
      %p136 = scmp.ne.s32.totalorder %s122, %s123
      %p137 = scmp.eq.s32.totalorder %s30, 3
      %p138 = por %p136, %p137
      %p140 = scmp.ne.s32.totalorder %s123, %s139
      %p141 = scmp.eq.s32.totalorder %s30, 0
      %p142 = por %p140, %p141
      %s143 = ssub.s32 %s32, %s39
      %p144 = scmp.eq.s32.totalorder %s143, 0
      %s146 = sadd.s32 %s145, 1
      %s147 = scalar_select %p144, %s145, %s146
      %p150 = pneg %p144
      %p151 = scmp.eq.s32.totalorder %s24, 3
      %p152 = por %p150, %p151
      %p153 = scmp.ne.s32.totalorder %s145, %s148
      %p154 = scmp.eq.s32.totalorder %s24, 0
      %p155 = por %p153, %p154
      %p156 = scmp.ne.s32.totalorder %s145, %s148
      %p157 = scmp.eq.s32.totalorder %s29, 3
      %p158 = por %p156, %p157
      %p159 = scmp.ne.s32.totalorder %s148, %s149
      %p160 = scmp.eq.s32.totalorder %s29, 0
      %p161 = por %p159, %p160
      %p162 = scmp.ne.s32.totalorder %s148, %s149
      %p163 = scmp.eq.s32.totalorder %s30, 3
      %p164 = por %p162, %p163
      %p166 = scmp.ne.s32.totalorder %s149, %s165
      %p167 = scmp.eq.s32.totalorder %s30, 0
      %p168 = por %p166, %p167
      %s169 = ssub.s32 %s32, %s39
      %p170 = scmp.eq.s32.totalorder %s169, 0
      %s172 = sadd.s32 %s171, 1
      %s173 = scalar_select %p170, %s171, %s172
      %p176 = pneg %p170
      %p177 = scmp.eq.s32.totalorder %s24, 3
      %p178 = por %p176, %p177
      %p179 = scmp.ne.s32.totalorder %s171, %s174
      %p180 = scmp.eq.s32.totalorder %s24, 0
      %p181 = por %p179, %p180
      %p182 = scmp.ne.s32.totalorder %s171, %s174
      %p183 = scmp.eq.s32.totalorder %s29, 3
      %p184 = por %p182, %p183
      %p185 = scmp.ne.s32.totalorder %s174, %s175
      %p186 = scmp.eq.s32.totalorder %s29, 0
      %p187 = por %p185, %p186
      %p188 = scmp.ne.s32.totalorder %s174, %s175
      %p189 = scmp.eq.s32.totalorder %s30, 3
      %p190 = por %p188, %p189
      %p192 = scmp.ne.s32.totalorder %s175, %s191
      %p193 = scmp.eq.s32.totalorder %s30, 0
      %p194 = por %p192, %p193
      %s195 = ssub.s32 %s32, %s39
      %p196 = scmp.eq.s32.totalorder %s195, 0
      %s198 = sadd.s32 %s197, 1
      %s199 = scalar_select %p196, %s197, %s198
      %p202 = pneg %p196
      %p203 = scmp.eq.s32.totalorder %s24, 3
      %p204 = por %p202, %p203
      %p205 = scmp.ne.s32.totalorder %s197, %s200
      %p206 = scmp.eq.s32.totalorder %s24, 0
      %p207 = por %p205, %p206
      %p208 = scmp.ne.s32.totalorder %s197, %s200
      %p209 = scmp.eq.s32.totalorder %s29, 3
      %p210 = por %p208, %p209
      %p211 = scmp.ne.s32.totalorder %s200, %s201
      %p212 = scmp.eq.s32.totalorder %s29, 0
      %p213 = por %p211, %p212
      %p214 = scmp.ne.s32.totalorder %s200, %s201
      %p215 = scmp.eq.s32.totalorder %s30, 3
      %p216 = por %p214, %p215
      %p218 = scmp.ne.s32.totalorder %s201, %s217
      %p219 = scmp.eq.s32.totalorder %s30, 0
      %p220 = por %p218, %p219
      %s221 = ssub.s32 %s32, %s39
      %p222 = scmp.eq.s32.totalorder %s221, 0
      %s224 = sadd.s32 %s223, 1
      %s225 = scalar_select %p222, %s223, %s224
      %p228 = pneg %p222
      %p229 = scmp.eq.s32.totalorder %s24, 3
      %p230 = por %p228, %p229
      %p231 = scmp.ne.s32.totalorder %s223, %s226
      %p232 = scmp.eq.s32.totalorder %s24, 0
      %p233 = por %p231, %p232
      %p234 = scmp.ne.s32.totalorder %s223, %s226
      %p235 = scmp.eq.s32.totalorder %s29, 3
      %p236 = por %p234, %p235
      %p237 = scmp.ne.s32.totalorder %s226, %s227
      %p238 = scmp.eq.s32.totalorder %s29, 0
      %p239 = por %p237, %p238
      %p240 = scmp.ne.s32.totalorder %s226, %s227
      %p241 = scmp.eq.s32.totalorder %s30, 3
      %p242 = por %p240, %p241
      %p244 = scmp.ne.s32.totalorder %s227, %s243
      %p245 = scmp.eq.s32.totalorder %s30, 0
      %p246 = por %p244, %p245
      %s247 = ssub.s32 %s32, %s39
      %p248 = scmp.eq.s32.totalorder %s247, 0
      %s250 = sadd.s32 %s249, 1
      %s251 = scalar_select %p248, %s249, %s250
      %p254 = pneg %p248
      %p255 = scmp.eq.s32.totalorder %s24, 3
      %p256 = por %p254, %p255
      %p257 = scmp.ne.s32.totalorder %s249, %s252
      %p258 = scmp.eq.s32.totalorder %s24, 0
      %p259 = por %p257, %p258
      %p260 = scmp.ne.s32.totalorder %s249, %s252
      %p261 = scmp.eq.s32.totalorder %s29, 3
      %p262 = por %p260, %p261
      %p263 = scmp.ne.s32.totalorder %s252, %s253
      %p264 = scmp.eq.s32.totalorder %s29, 0
      %p265 = por %p263, %p264
      %p266 = scmp.ne.s32.totalorder %s252, %s253
      %p267 = scmp.eq.s32.totalorder %s30, 3
      %p268 = por %p266, %p267
      %p270 = scmp.ne.s32.totalorder %s253, %s269
      %p271 = scmp.eq.s32.totalorder %s30, 0
      %p272 = por %p270, %p271
      %s273 = ssub.s32 %s32, %s39
      %p274 = scmp.eq.s32.totalorder %s273, 0
      %s276 = sadd.s32 %s275, 1
      %s277 = scalar_select %p274, %s275, %s276
      %p280 = pneg %p274
      %p281 = scmp.eq.s32.totalorder %s24, 3
      %p282 = por %p280, %p281
      %p283 = scmp.ne.s32.totalorder %s275, %s278
      %p284 = scmp.eq.s32.totalorder %s24, 0
      %p285 = por %p283, %p284
      %p286 = scmp.ne.s32.totalorder %s275, %s278
      %p287 = scmp.eq.s32.totalorder %s29, 3
      %p288 = por %p286, %p287
      %p289 = scmp.ne.s32.totalorder %s278, %s279
      %p290 = scmp.eq.s32.totalorder %s29, 0
      %p291 = por %p289, %p290
      %p292 = scmp.ne.s32.totalorder %s278, %s279
      %p293 = scmp.eq.s32.totalorder %s30, 3
      %p294 = por %p292, %p293
      %p296 = scmp.ne.s32.totalorder %s279, %s295
      %p297 = scmp.eq.s32.totalorder %s30, 0
      %p298 = por %p296, %p297
      %s299 = ssub.s32 %s32, %s39
      %p300 = scmp.eq.s32.totalorder %s299, 0
      %s302 = sadd.s32 %s301, 1
      %s303 = scalar_select %p300, %s301, %s302
      %p306 = pneg %p300
      %p307 = scmp.eq.s32.totalorder %s24, 3
      %p308 = por %p306, %p307
      %p309 = scmp.ne.s32.totalorder %s301, %s304
      %p310 = scmp.eq.s32.totalorder %s24, 0
      %p311 = por %p309, %p310
      %p312 = scmp.ne.s32.totalorder %s301, %s304
      %p313 = scmp.eq.s32.totalorder %s29, 3
      %p314 = por %p312, %p313
      %p315 = scmp.ne.s32.totalorder %s304, %s305
      %p316 = scmp.eq.s32.totalorder %s29, 0
      %p317 = por %p315, %p316
      %p318 = scmp.ne.s32.totalorder %s304, %s305
      %p319 = scmp.eq.s32.totalorder %s30, 3
      %p320 = por %p318, %p319
      %p322 = scmp.ne.s32.totalorder %s305, %s321
      %p323 = scmp.eq.s32.totalorder %s30, 0
      %p324 = por %p322, %p323
      %s325 = ssub.s32 %s32, %s39
      %p326 = scmp.eq.s32.totalorder %s325, 0
      %s328 = sadd.s32 %s327, 1
      %s329 = scalar_select %p326, %s327, %s328
      %p332 = pneg %p326
      %p333 = scmp.eq.s32.totalorder %s24, 3
      %p334 = por %p332, %p333
      %p335 = scmp.ne.s32.totalorder %s327, %s330
      %p336 = scmp.eq.s32.totalorder %s24, 0
      %p337 = por %p335, %p336
      %p338 = scmp.ne.s32.totalorder %s327, %s330
      %p339 = scmp.eq.s32.totalorder %s29, 3
      %p340 = por %p338, %p339
      %p341 = scmp.ne.s32.totalorder %s330, %s331
      %p342 = scmp.eq.s32.totalorder %s29, 0
      %p343 = por %p341, %p342
      %p344 = scmp.ne.s32.totalorder %s330, %s331
      %p345 = scmp.eq.s32.totalorder %s30, 3
      %p346 = por %p344, %p345
      %p348 = scmp.ne.s32.totalorder %s331, %s347
      %p349 = scmp.eq.s32.totalorder %s30, 0
      %p350 = por %p348, %p349
      %s351 = ssub.s32 %s32, %s39
      %p352 = scmp.eq.s32.totalorder %s351, 0
      %s354 = sadd.s32 %s353, 1
      %s355 = scalar_select %p352, %s353, %s354
      %p358 = pneg %p352
      %p359 = scmp.eq.s32.totalorder %s24, 3
      %p360 = por %p358, %p359
      %p361 = scmp.ne.s32.totalorder %s353, %s356
      %p362 = scmp.eq.s32.totalorder %s24, 0
      %p363 = por %p361, %p362
      %p364 = scmp.ne.s32.totalorder %s353, %s356
      %p365 = scmp.eq.s32.totalorder %s29, 3
      %p366 = por %p364, %p365
      %p367 = scmp.ne.s32.totalorder %s356, %s357
      %p368 = scmp.eq.s32.totalorder %s29, 0
      %p369 = por %p367, %p368
      %p370 = scmp.ne.s32.totalorder %s356, %s357
      %p371 = scmp.eq.s32.totalorder %s30, 3
      %p372 = por %p370, %p371
      %p374 = scmp.ne.s32.totalorder %s357, %s373
      %p375 = scmp.eq.s32.totalorder %s30, 0
      %p376 = por %p374, %p375
      %s377 = ssub.s32 %s32, %s39
      %p378 = scmp.eq.s32.totalorder %s377, 0
      %s380 = sadd.s32 %s379, 1
      %s381 = scalar_select %p378, %s379, %s380
      %p384 = pneg %p378
      %p385 = scmp.eq.s32.totalorder %s24, 3
      %p386 = por %p384, %p385
      %p387 = scmp.ne.s32.totalorder %s379, %s382
      %p388 = scmp.eq.s32.totalorder %s24, 0
      %p389 = por %p387, %p388
      %p390 = scmp.ne.s32.totalorder %s379, %s382
      %p391 = scmp.eq.s32.totalorder %s29, 3
      %p392 = por %p390, %p391
      %p393 = scmp.ne.s32.totalorder %s382, %s383
      %p394 = scmp.eq.s32.totalorder %s29, 0
      %p395 = por %p393, %p394
      %p396 = scmp.ne.s32.totalorder %s382, %s383
      %p397 = scmp.eq.s32.totalorder %s30, 3
      %p398 = por %p396, %p397
      %p400 = scmp.ne.s32.totalorder %s383, %s399
      %p401 = scmp.eq.s32.totalorder %s30, 0
      %p402 = por %p400, %p401
      %s403 = ssub.s32 %s31, %s43
      %s404 = ssub.s32 %s32, %s39
      %s405 = sor.u32 %s403, %s404
      %p406 = scmp.eq.s32.totalorder %s405, 0
      %s408 = sadd.s32 %s407, 1
      %s409 = scalar_select %p406, %s407, %s408
      %p412 = pneg %p406
      %p413 = scmp.eq.s32.totalorder %s24, 3
      %p414 = por %p412, %p413
      %p415 = scmp.ne.s32.totalorder %s407, %s410
      %p416 = scmp.eq.s32.totalorder %s24, 0
      %p417 = por %p415, %p416
      %p418 = scmp.ne.s32.totalorder %s407, %s410
      %p419 = scmp.eq.s32.totalorder %s29, 3
      %p420 = por %p418, %p419
      %p421 = scmp.ne.s32.totalorder %s410, %s411
      %p422 = scmp.eq.s32.totalorder %s29, 0
      %p423 = por %p421, %p422
      %p424 = scmp.ne.s32.totalorder %s410, %s411
      %p425 = scmp.eq.s32.totalorder %s30, 3
      %p426 = por %p424, %p425
      %p428 = scmp.ne.s32.totalorder %s411, %s427
      %p429 = scmp.eq.s32.totalorder %s30, 0
      %p430 = por %p428, %p429
      %p431 = scmp.le.s32.totalorder 1, %s24
      %p432 = scmp.lt.s32.totalorder %s24, 5
      %p433 = pnand %p431, %p432
      %p434 = pneg %p433
      // Predicated region
      $region9: #{lbanp_forward.6} parent=5 // pred_check
        _
      $region10: #{lbanp_forward.6} parent=5 // pred_check_branch
        %436 = sbr.rel (%p433) target = $region12
      $region11: #{lbanp_forward.6} parent=5 // pred_region
        %s437 = ssub.s32 %s24, 1
        // Predicated region
        $region13: #{lbanp_forward.6} parent=11 // pred_check
          %p438 = pneg %p57
        $region14: #{lbanp_forward.6} parent=11 // pred_check_branch
          %440 = sbr.rel (%p438) target = $region16
        $region15: #{lbanp_forward.6} parent=11 // pred_region
          %442 = vsyncadd [#allocation4], 0
          %s444 = sshll.u32 %s0, 4
          %s445 = int_to_ptr.hbm [resolvable:$true] %s444
          %s446 = sshll.u32 [#allocation3], 4
          %s447 = int_to_ptr.vmem [resolvable:$true] %s446
          %449 = dma.hbm_to_vmem [thread:$0]  %s445, 128, %s447, [#allocation4]
        $region16: #{lbanp_forward.6} parent=11 // pred_fallthru
          _
      $region12: #{lbanp_forward.6} parent=5 // pred_fallthru
        _
      %p450 = scmp.lt.s32.totalorder %s24, 4
      // Predicated region
      $region17: #{lbanp_forward.6} parent=5 // pred_check
        %p451 = pneg %p450
      $region18: #{lbanp_forward.6} parent=5 // pred_check_branch
        %453 = sbr.rel (%p451) target = $region20
      $region19: #{lbanp_forward.6} parent=5 // pred_region
        // Predicated region
        $region21: #{lbanp_forward.6} parent=19 // pred_check
          %p454 = pneg %p77
        $region22: #{lbanp_forward.6} parent=19 // pred_check_branch
          %456 = sbr.rel (%p454) target = $region24
        $region23: #{lbanp_forward.6} parent=19 // pred_region
          %p457 = scmp.lt.s32.totalorder %s31, 1
          %s458 = scalar_select %p457, %s31, 1
          %s459 = smul.addr %s458, 4
          %s460 = scalar_lea.vmem %s1, %s459
        $region24: #{lbanp_forward.6} parent=19 // pred_fallthru
          _
        // Predicated region
        $region25: #{lbanp_forward.6} parent=19 // pred_check
          %p461 = pneg %p103
        $region26: #{lbanp_forward.6} parent=19 // pred_check_branch
          %463 = sbr.rel (%p461) target = $region28
        $region27: #{lbanp_forward.6} parent=19 // pred_region
          %p464 = scmp.lt.s32.totalorder %s32, 1
          %s465 = scalar_select %p464, %s32, 1
          %s466 = smul.addr %s465, 4
          %s467 = smul.addr %s466, 4
          %s468 = scalar_lea.vmem %s2, %s467
        $region28: #{lbanp_forward.6} parent=19 // pred_fallthru
          _
        // Predicated region
        $region29: #{lbanp_forward.6} parent=19 // pred_check
          %p469 = pneg %p129
        $region30: #{lbanp_forward.6} parent=19 // pred_check_branch
          %471 = sbr.rel (%p469) target = $region32
        $region31: #{lbanp_forward.6} parent=19 // pred_region
          %p472 = scmp.lt.s32.totalorder %s32, 1
          %s473 = scalar_select %p472, %s32, 1
          %s474 = smul.addr %s473, 4
          %s475 = smul.addr %s474, 4
          %s476 = scalar_lea.vmem %s3, %s475
        $region32: #{lbanp_forward.6} parent=19 // pred_fallthru
          _
        // Predicated region
        $region33: #{lbanp_forward.6} parent=19 // pred_check
          %p477 = pneg %p155
        $region34: #{lbanp_forward.6} parent=19 // pred_check_branch
          %479 = sbr.rel (%p477) target = $region36
        $region35: #{lbanp_forward.6} parent=19 // pred_region
          %p480 = scmp.lt.s32.totalorder %s32, 1
          %s481 = scalar_select %p480, %s32, 1
          %s482 = smul.addr %s481, 4
          %s483 = smul.addr %s482, 4
          %s484 = scalar_lea.vmem %s4, %s483
        $region36: #{lbanp_forward.6} parent=19 // pred_fallthru
          _
        // Predicated region
        $region37: #{lbanp_forward.6} parent=19 // pred_check
          %p485 = pneg %p181
        $region38: #{lbanp_forward.6} parent=19 // pred_check_branch
          %487 = sbr.rel (%p485) target = $region40
        $region39: #{lbanp_forward.6} parent=19 // pred_region
          %p488 = scmp.lt.s32.totalorder %s32, 1
          %s489 = scalar_select %p488, %s32, 1
          %s490 = smul.addr %s489, 4
          %s491 = smul.addr %s490, 4
          %s492 = scalar_lea.vmem %s5, %s491
        $region40: #{lbanp_forward.6} parent=19 // pred_fallthru
          _
        // Predicated region
        $region41: #{lbanp_forward.6} parent=19 // pred_check
          %p493 = pneg %p207
        $region42: #{lbanp_forward.6} parent=19 // pred_check_branch
          %495 = sbr.rel (%p493) target = $region44
        $region43: #{lbanp_forward.6} parent=19 // pred_region
          %p496 = scmp.lt.s32.totalorder %s32, 1
          %s497 = scalar_select %p496, %s32, 1
          %s498 = smul.addr %s497, 8
          %s499 = smul.addr %s498, 4
          %s500 = scalar_lea.vmem %s6, %s499
        $region44: #{lbanp_forward.6} parent=19 // pred_fallthru
          _
        // Predicated region
        $region45: #{lbanp_forward.6} parent=19 // pred_check
          %p501 = pneg %p233
        $region46: #{lbanp_forward.6} parent=19 // pred_check_branch
          %503 = sbr.rel (%p501) target = $region48
        $region47: #{lbanp_forward.6} parent=19 // pred_region
          %p504 = scmp.lt.s32.totalorder %s32, 1
          %s505 = scalar_select %p504, %s32, 1
          %s506 = smul.addr %s505, 2
          %s507 = smul.addr %s506, 8
          %s508 = scalar_lea.vmem %s7, %s507
        $region48: #{lbanp_forward.6} parent=19 // pred_fallthru
          _
        // Predicated region
        $region49: #{lbanp_forward.6} parent=19 // pred_check
          %p509 = pneg %p259
        $region50: #{lbanp_forward.6} parent=19 // pred_check_branch
          %511 = sbr.rel (%p509) target = $region52
        $region51: #{lbanp_forward.6} parent=19 // pred_region
          %p512 = scmp.lt.s32.totalorder %s32, 1
          %s513 = scalar_select %p512, %s32, 1
          %s514 = smul.addr %s513, 4
          %s515 = smul.addr %s514, 4
          %s516 = scalar_lea.vmem %s8, %s515
        $region52: #{lbanp_forward.6} parent=19 // pred_fallthru
          _
        // Predicated region
        $region53: #{lbanp_forward.6} parent=19 // pred_check
          %p517 = pneg %p285
        $region54: #{lbanp_forward.6} parent=19 // pred_check_branch
          %519 = sbr.rel (%p517) target = $region56
        $region55: #{lbanp_forward.6} parent=19 // pred_region
          %p520 = scmp.lt.s32.totalorder %s32, 1
          %s521 = scalar_select %p520, %s32, 1
          %s522 = smul.addr %s521, 4
          %s523 = smul.addr %s522, 4
          %s524 = scalar_lea.vmem %s9, %s523
        $region56: #{lbanp_forward.6} parent=19 // pred_fallthru
          _
        // Predicated region
        $region57: #{lbanp_forward.6} parent=19 // pred_check
          %p525 = pneg %p311
        $region58: #{lbanp_forward.6} parent=19 // pred_check_branch
          %527 = sbr.rel (%p525) target = $region60
        $region59: #{lbanp_forward.6} parent=19 // pred_region
          %s528 = sand.u32 %s24, 1
          %s529 = scalar_lea.sflag [#allocation6], %s528
          %s530 = sand.u32 %s301, 1
          %s531 = smul.addr %s530, 16
          %s532 = scalar_lea.vmem [#allocation5], %s531
          %534 = vsyncadd %s529, 0
          %s535 = smul.addr %s32, 4
          %s536 = smul.addr %s535, 4
          %s537 = scalar_lea.hbm %s10, %s536
          %s538 = sshll.u32 %s537, 4
          %s539 = int_to_ptr.hbm [resolvable:$true] %s538
          %s540 = sshll.u32 %s532, 4
          %s541 = int_to_ptr.vmem [resolvable:$true] %s540
          %546 = dma.hbm_to_vmem [thread:$0]  %s539, 256, %s541, %s529, 64, 64, 4
        $region60: #{lbanp_forward.6} parent=19 // pred_fallthru
          _
        // Predicated region
        $region61: #{lbanp_forward.6} parent=19 // pred_check
          %p547 = pneg %p337
        $region62: #{lbanp_forward.6} parent=19 // pred_check_branch
          %549 = sbr.rel (%p547) target = $region64
        $region63: #{lbanp_forward.6} parent=19 // pred_region
          %s550 = sand.u32 %s24, 1
          %s551 = scalar_lea.sflag [#allocation6], %s550
          %s552 = sand.u32 %s327, 1
          %s553 = smul.addr %s552, 16
          %s554 = scalar_lea.vmem [#allocation7], %s553
          %556 = vsyncadd %s551, 0
          %s557 = smul.addr %s32, 4
          %s558 = smul.addr %s557, 4
          %s559 = scalar_lea.hbm %s11, %s558
          %s560 = sshll.u32 %s559, 4
          %s561 = int_to_ptr.hbm [resolvable:$true] %s560
          %s562 = sshll.u32 %s554, 4
          %s563 = int_to_ptr.vmem [resolvable:$true] %s562
          %568 = dma.hbm_to_vmem [thread:$0]  %s561, 256, %s563, %s551, 64, 64, 4
        $region64: #{lbanp_forward.6} parent=19 // pred_fallthru
          _
        // Predicated region
        $region65: #{lbanp_forward.6} parent=19 // pred_check
          %p569 = pneg %p363
        $region66: #{lbanp_forward.6} parent=19 // pred_check_branch
          %571 = sbr.rel (%p569) target = $region68
        $region67: #{lbanp_forward.6} parent=19 // pred_region
          %p572 = scmp.lt.s32.totalorder %s32, 1
          %s573 = scalar_select %p572, %s32, 1
          %s574 = smul.addr %s573, 8
          %s575 = smul.addr %s574, 4
          %s576 = scalar_lea.vmem %s12, %s575
        $region68: #{lbanp_forward.6} parent=19 // pred_fallthru
          _
        // Predicated region
        $region69: #{lbanp_forward.6} parent=19 // pred_check
          %p577 = pneg %p389
        $region70: #{lbanp_forward.6} parent=19 // pred_check_branch
          %579 = sbr.rel (%p577) target = $region72
        $region71: #{lbanp_forward.6} parent=19 // pred_region
          %p580 = scmp.lt.s32.totalorder %s32, 1
          %s581 = scalar_select %p580, %s32, 1
          %s582 = smul.addr %s581, 2
          %s583 = smul.addr %s582, 8
          %s584 = scalar_lea.vmem %s13, %s583
        $region72: #{lbanp_forward.6} parent=19 // pred_fallthru
          _
      $region20: #{lbanp_forward.6} parent=5 // pred_fallthru
        _
      %p585 = scmp.le.s32.totalorder 1, %s24
      %p586 = scmp.lt.s32.totalorder %s24, 5
      %p587 = pnand %p585, %p586
      %p588 = pneg %p587
      // Predicated region
      $region73: #{lbanp_forward.6} parent=5 // pred_check
        _
      $region74: #{lbanp_forward.6} parent=5 // pred_check_branch
        %590 = sbr.rel (%p587) target = $region76
      $region75: #{lbanp_forward.6} parent=5 // pred_region
        %s591 = ssub.s32 %s24, 1
        // Predicated region
        $region77: #{lbanp_forward.6} parent=75 // pred_check
          %p592 = pneg %p57
        $region78: #{lbanp_forward.6} parent=75 // pred_check_branch
          %594 = sbr.rel (%p592) target = $region80
        $region79: #{lbanp_forward.6} parent=75 // pred_region
          %596 = dma.done [#allocation4], 128
        $region80: #{lbanp_forward.6} parent=75 // pred_fallthru
          _
        %s597 = sand.u32 %s29, 1
        %s598 = scalar_lea.sflag [#allocation6], %s597
        %s599 = sand.u32 %s304, 1
        %s600 = smul.addr %s599, 16
        %s601 = scalar_lea.vmem [#allocation5], %s600
        // Predicated region
        $region81: #{lbanp_forward.6} parent=75 // pred_check
          %p602 = pneg %p317
        $region82: #{lbanp_forward.6} parent=75 // pred_check_branch
          %604 = sbr.rel (%p602) target = $region84
        $region83: #{lbanp_forward.6} parent=75 // pred_region
          %606 = dma.done %s598, 256
        $region84: #{lbanp_forward.6} parent=75 // pred_fallthru
          _
        %s607 = sand.u32 %s29, 1
        %s608 = scalar_lea.sflag [#allocation6], %s607
        %s609 = sand.u32 %s330, 1
        %s610 = smul.addr %s609, 16
        %s611 = scalar_lea.vmem [#allocation7], %s610
        // Predicated region
        $region85: #{lbanp_forward.6} parent=75 // pred_check
          %p612 = pneg %p343
        $region86: #{lbanp_forward.6} parent=75 // pred_check_branch
          %614 = sbr.rel (%p612) target = $region88
        $region87: #{lbanp_forward.6} parent=75 // pred_region
          %616 = dma.done %s608, 256
        $region88: #{lbanp_forward.6} parent=75 // pred_fallthru
          _
        %p617 = pneg %p57
        %p618 = pneg %p54
        %p619 = scmp.lt.s32.totalorder %s33, 1
        %s620 = scalar_select %p619, %s33, 1
        %s621 = smul.addr %s620, 4
        %s622 = scalar_lea.vmem %s1, %s621
        %p623 = pneg %p83
        %p624 = pneg %p80
        %p625 = scmp.lt.s32.totalorder %s34, 1
        %s626 = scalar_select %p625, %s34, 1
        %s627 = smul.addr %s626, 4
        %s628 = smul.addr %s627, 4
        %s629 = scalar_lea.vmem %s2, %s628
        %p630 = pneg %p109
        %p631 = pneg %p106
        %p632 = scmp.lt.s32.totalorder %s34, 1
        %s633 = scalar_select %p632, %s34, 1
        %s634 = smul.addr %s633, 4
        %s635 = smul.addr %s634, 4
        %s636 = scalar_lea.vmem %s3, %s635
        %p637 = pneg %p135
        %p638 = pneg %p132
        %p639 = scmp.lt.s32.totalorder %s34, 1
        %s640 = scalar_select %p639, %s34, 1
        %s641 = smul.addr %s640, 4
        %s642 = smul.addr %s641, 4
        %s643 = scalar_lea.vmem %s4, %s642
        %p644 = pneg %p161
        %p645 = pneg %p158
        %p646 = scmp.lt.s32.totalorder %s34, 1
        %s647 = scalar_select %p646, %s34, 1
        %s648 = smul.addr %s647, 4
        %s649 = smul.addr %s648, 4
        %s650 = scalar_lea.vmem %s5, %s649
        %p651 = pneg %p187
        %p652 = pneg %p184
        %p653 = scmp.lt.s32.totalorder %s34, 1
        %s654 = scalar_select %p653, %s34, 1
        %s655 = smul.addr %s654, 8
        %s656 = smul.addr %s655, 4
        %s657 = scalar_lea.vmem %s6, %s656
        %p658 = pneg %p213
        %p659 = pneg %p210
        %p660 = scmp.lt.s32.totalorder %s34, 1
        %s661 = scalar_select %p660, %s34, 1
        %s662 = smul.addr %s661, 2
        %s663 = smul.addr %s662, 8
        %s664 = scalar_lea.vmem %s7, %s663
        %p665 = pneg %p239
        %p666 = pneg %p236
        %p667 = scmp.lt.s32.totalorder %s34, 1
        %s668 = scalar_select %p667, %s34, 1
        %s669 = smul.addr %s668, 4
        %s670 = smul.addr %s669, 4
        %s671 = scalar_lea.vmem %s8, %s670
        %p672 = pneg %p265
        %p673 = pneg %p262
        %p674 = scmp.lt.s32.totalorder %s34, 1
        %s675 = scalar_select %p674, %s34, 1
        %s676 = smul.addr %s675, 4
        %s677 = smul.addr %s676, 4
        %s678 = scalar_lea.vmem %s9, %s677
        %p679 = pneg %p291
        %p680 = pneg %p288
        %s681 = sand.u32 %s29, 1
        %s682 = scalar_lea.sflag [#allocation6], %s681
        %s683 = sand.u32 %s304, 1
        %s684 = smul.addr %s683, 16
        %s685 = scalar_lea.vmem [#allocation5], %s684
        %p686 = pneg %p317
        %p687 = pneg %p314
        %s688 = sand.u32 %s29, 1
        %s689 = scalar_lea.sflag [#allocation6], %s688
        %s690 = sand.u32 %s330, 1
        %s691 = smul.addr %s690, 16
        %s692 = scalar_lea.vmem [#allocation7], %s691
        %p693 = pneg %p343
        %p694 = pneg %p340
        %p695 = scmp.lt.s32.totalorder %s34, 1
        %s696 = scalar_select %p695, %s34, 1
        %s697 = smul.addr %s696, 8
        %s698 = smul.addr %s697, 4
        %s699 = scalar_lea.vmem %s12, %s698
        %p700 = pneg %p369
        %p701 = pneg %p366
        %p702 = scmp.lt.s32.totalorder %s34, 1
        %s703 = scalar_select %p702, %s34, 1
        %s704 = smul.addr %s703, 2
        %s705 = smul.addr %s704, 8
        %s706 = scalar_lea.vmem %s13, %s705
        %p707 = pneg %p395
        %p708 = pneg %p392
        %p709 = pneg %p423
        %p710 = pneg %p420
        %p711 = scmp.lt.s32.totalorder %s33, 1
        %s712 = scalar_select %p711, %s33, 1
        %p713 = scmp.lt.s32.totalorder %s34, 1
        %s714 = scalar_select %p713, %s34, 1
        %s715 = smul.addr %s712, 2
        %s716 = sadd.s32 %s714, %s715
        %s717 = smul.addr %s716, 4
        %s718 = scalar_lea.vmem %s14, %s717
        %p719 = scmp.lt.s32.totalorder %s33, 1
        %s720 = scalar_select %p719, %s33, 1
        %s721 = smul.addr %s720, 4
        %s722 = scalar_lea.vmem %s1, %s721
        %p723 = scmp.lt.s32.totalorder %s34, 1
        %s724 = scalar_select %p723, %s34, 1
        %s725 = smul.addr %s724, 4
        %s726 = smul.addr %s725, 4
        %s727 = scalar_lea.vmem %s2, %s726
        %p728 = scmp.lt.s32.totalorder %s34, 1
        %s729 = scalar_select %p728, %s34, 1
        %s730 = smul.addr %s729, 4
        %s731 = smul.addr %s730, 4
        %s732 = scalar_lea.vmem %s3, %s731
        %p733 = scmp.lt.s32.totalorder %s34, 1
        %s734 = scalar_select %p733, %s34, 1
        %s735 = smul.addr %s734, 4
        %s736 = smul.addr %s735, 4
        %s737 = scalar_lea.vmem %s4, %s736
        %p738 = scmp.lt.s32.totalorder %s34, 1
        %s739 = scalar_select %p738, %s34, 1
        %s740 = smul.addr %s739, 4
        %s741 = smul.addr %s740, 4
        %s742 = scalar_lea.vmem %s5, %s741
        %p743 = scmp.lt.s32.totalorder %s34, 1
        %s744 = scalar_select %p743, %s34, 1
        %s745 = smul.addr %s744, 8
        %s746 = smul.addr %s745, 4
        %s747 = scalar_lea.vmem %s6, %s746
        %p748 = scmp.lt.s32.totalorder %s34, 1
        %s749 = scalar_select %p748, %s34, 1
        %s750 = smul.addr %s749, 2
        %s751 = smul.addr %s750, 8
        %s752 = scalar_lea.vmem %s7, %s751
        %p753 = scmp.lt.s32.totalorder %s34, 1
        %s754 = scalar_select %p753, %s34, 1
        %s755 = smul.addr %s754, 4
        %s756 = smul.addr %s755, 4
        %s757 = scalar_lea.vmem %s8, %s756
        %p758 = scmp.lt.s32.totalorder %s34, 1
        %s759 = scalar_select %p758, %s34, 1
        %s760 = smul.addr %s759, 4
        %s761 = smul.addr %s760, 4
        %s762 = scalar_lea.vmem %s9, %s761
        %p763 = scmp.lt.s32.totalorder %s34, 1
        %s764 = scalar_select %p763, %s34, 1
        %s765 = smul.addr %s764, 8
        %s766 = smul.addr %s765, 4
        %s767 = scalar_lea.vmem %s12, %s766
        %p768 = scmp.lt.s32.totalorder %s34, 1
        %s769 = scalar_select %p768, %s34, 1
        %s770 = smul.addr %s769, 2
        %s771 = smul.addr %s770, 8
        %s772 = scalar_lea.vmem %s13, %s771
        %p773 = scmp.lt.s32.totalorder %s33, 1
        %s774 = scalar_select %p773, %s33, 1
        %p775 = scmp.lt.s32.totalorder %s34, 1
        %s776 = scalar_select %p775, %s34, 1
        %s777 = smul.addr %s774, 2
        %s778 = sadd.s32 %s776, %s777
        %s779 = smul.addr %s778, 4
        %s780 = scalar_lea.vmem %s14, %s779
        %p782 = scmp.eq.s32.totalorder %s34, 0
        // Predicated region
        $region89: #{lbanp_forward.6} parent=75 // pred_check
          %p783 = pneg %p782
        $region90: #{lbanp_forward.6} parent=75 // pred_check_branch
          %785 = sbr.rel (%p783) target = $region92
        $region91: #{lbanp_forward.6} parent=75 // pred_region
          %v786 = vld [vmem:[#allocation3] sm:$0xff]
          %vm787 = vcmask 261120
          %788 = vst.msk [vmem:[#allocation2] sm:$0xff] %vm787, %v786
        $region92: #{lbanp_forward.6} parent=75 // pred_fallthru
          _
        %v789 = vld [vmem:[#allocation2] sm:$0xff]
        %v790 = vld [vmem:[%s722] sm:$0xf]
        %v791 = vld [vmem:[%s727] sm:$0xf]
        %v792 = vld [vmem:[%s727 + $0x4] sm:$0xf]
        %v793 = vld [vmem:[%s727 + $0x8] sm:$0xf]
        %v794 = vld [vmem:[%s727 + $0xc] sm:$0xf]
        %v795 = vld [vmem:[%s732] sm:$0xf]
        %v796 = vld [vmem:[%s732 + $0x4] sm:$0xf]
        %v797 = vld [vmem:[%s732 + $0x8] sm:$0xf]
        %v798 = vld [vmem:[%s732 + $0xc] sm:$0xf]
        %v799 = vld [vmem:[%s737] sm:$0xf]
        %v800 = vld [vmem:[%s737 + $0x4] sm:$0xf]
        %v801 = vld [vmem:[%s737 + $0x8] sm:$0xf]
        %v802 = vld [vmem:[%s737 + $0xc] sm:$0xf]
        %v803 = vld [vmem:[%s742] sm:$0xf]
        %v804 = vld [vmem:[%s742 + $0x4] sm:$0xf]
        %v805 = vld [vmem:[%s742 + $0x8] sm:$0xf]
        %v806 = vld [vmem:[%s742 + $0xc] sm:$0xf]
        %v807 = vld [vmem:[%s747] sm:$0xf]
        %v808 = vld [vmem:[%s747 + $0x4] sm:$0xf]
        %v809 = vld [vmem:[%s747 + $0x8] sm:$0xf]
        %v810 = vld [vmem:[%s747 + $0xc] sm:$0xf]
        %v811 = vld [vmem:[%s747 + $0x10] sm:$0xf]
        %v812 = vld [vmem:[%s747 + $0x14] sm:$0xf]
        %v813 = vld [vmem:[%s747 + $0x18] sm:$0xf]
        %v814 = vld [vmem:[%s747 + $0x1c] sm:$0xf]
        %v815 = vld [vmem:[%s752] sm:$0xff]
        %v816 = vld [vmem:[%s752 + $0x8] sm:$0x3]
        %vm817 = vcmask 261120
        %v818 = vsel %vm817, %v789, 0.0
        %819 = vadd.xlane.f32.xlu0 %v818
        %v820 = vpop.xlane.xlu0 %819
        %v821 = vrcp.pop 32.0
        %v822 = vmul.f32 32.0, %v821
        %v823 = vsub.f32 1.0, %v822
        %v824 = vmul.f32 %v821, %v823
        %v825 = vadd.f32 %v821, %v824
        %vm826 = vweird.f32 %v821
        %v827 = vsel %vm826, %v821, %v825
        %v828 = vmul.f32 %v820, %v827
        %v829 = vsub.f32 %v789, %v828
        %v830 = vmul.f32 %v829, %v829
        %v831 = vsel %vm817, %v830, 0.0
        %832 = vadd.xlane.f32.xlu0 %v831
        %v833 = vpop.xlane.xlu0 %832
        %v834 = vmul.f32 %v833, %v827
        %v835 = vadd.f32 %v834, 1e-05
        %v836 = vrsqrt.pop %v835
        %v837 = vmul.f32 %v836, %v835
        %v838 = vmul.f32 %v837, %v836
        %v839 = vmul.f32 0.5, %v838
        %v840 = vsub.f32 1.5, %v839
        %v841 = vmul.f32 %v836, %v840
        %vm842 = vweird.f32 %v835
        %vm843 = vweird.f32 %v836
        %vm844 = vmor %vm842, %vm843
        %v845 = vsel %vm844, %v836, %v841
        %v846 = vmul.f32 %v829, %v845
        %v847 = vperm.slane %v815, 0
        %v848 = vmul.f32 %v846, %v847
        %v849 = vperm.slane %v815, 1
        %v850 = vadd.f32 %v848, %v849
        %v851 = vpack.c.bf16 %v850, %v850
        %v852 = vperm.slane %v815, 4
        %v857 = vunpack.c.l.b16 %v791
        %v858 = vunpack.c.l.b16 %v792
        %v859 = vunpack.c.l.b16 %v793
        %v860 = vunpack.c.l.b16 %v794
        %v861 = vpack.c.b16 %v858, %v857
        %v862 = vpack.c.b16 %v860, %v859
        %v866 = vsel %vm817, %v851, 0
        %868 = vmatpush.bf16.msra.mxu0 0
        %869 = vmatpush.bf16.msra.mxu0 0
        %870 = vmatpush.bf16.msra.mxu0 0
        %871 = vmatpush.bf16.msra.mxu0 0
        %872 = vmatpush.bf16.msra.mxu0 0
        %873 = vmatpush.bf16.msra.mxu0 0
        %874 = vmatpush.bf16.msra.mxu0 %v862
        %875 = vmatpush.bf16.msra.mxu0 %v861
        %876 = vmatmul.bf16.gmra.mxu0 %v866
        %v877 = vpop.f32.mrf.mxu0
        %v878 = vadd.f32 %v852, %v877
        %v879 = vpop.f32.mrf.mxu0
        %880 = vdwg.mxu0
        %v885 = vunpack.c.l.b16 %v795
        %v886 = vunpack.c.l.b16 %v796
        %v887 = vunpack.c.l.b16 %v797
        %v888 = vunpack.c.l.b16 %v798
        %v889 = vpack.c.b16 %v886, %v885
        %v890 = vpack.c.b16 %v888, %v887
        %v894 = vsel %vm817, %v790, 0
        %896 = vmatpush.bf16.msra.mxu0 0
        %897 = vmatpush.bf16.msra.mxu0 0
        %898 = vmatpush.bf16.msra.mxu0 0
        %899 = vmatpush.bf16.msra.mxu0 0
        %900 = vmatpush.bf16.msra.mxu0 0
        %901 = vmatpush.bf16.msra.mxu0 0
        %902 = vmatpush.bf16.msra.mxu0 %v890
        %903 = vmatpush.bf16.msra.mxu0 %v889
        %904 = vmatmul.bf16.gmra.mxu0 %v894
        %v905 = vpop.f32.mrf.mxu0
        %v906 = vadd.f32 0.0, %v905
        %v907 = vpop.f32.mrf.mxu0
        %908 = vdwg.mxu0
        %v909 = vperm.slane %v815, 5
        %v910 = vadd.f32 %v906, %v909
        %v911 = vperm.slane %v815, 6
        %913 = vrot.lane.b32.xlu0 %v911, 32
        %v914 = vpop.permute.xlu0 %913
        %v916 = vadd.f32 %v906, %v914
        %v917 = vpack.c.bf16 %v878, %v878
        %919 = vrot.lane.b32.xlu0 %v917, 120
        %v920 = vpop.permute.xlu0 %919
        %921 = vrot.lane.b32.xlu0 %v917, 112
        %v922 = vpop.permute.xlu0 %921
        %923 = vrot.lane.b32.xlu0 %v917, 104
        %v924 = vpop.permute.xlu0 %923
        %v925 = vpack.c.bf16 %v910, %v910
        %927 = vrot.lane.b32.xlu0 %v925, 120
        %v928 = vpop.permute.xlu0 %927
        %929 = vrot.lane.b32.xlu0 %v925, 112
        %v930 = vpop.permute.xlu0 %929
        %931 = vrot.lane.b32.xlu0 %v925, 104
        %v932 = vpop.permute.xlu0 %931
        %v933 = vpack.c.bf16 %v916, %v916
        %935 = vrot.lane.b32.xlu0 %v933, 120
        %v936 = vpop.permute.xlu0 %935
        %937 = vrot.lane.b32.xlu0 %v933, 112
        %v938 = vpop.permute.xlu0 %937
        %939 = vrot.lane.b32.xlu0 %v933, 104
        %v940 = vpop.permute.xlu0 %939
        %vm941 = vcmask 64512
        %v943 = vsel %vm941, %v917, 0
        %v946 = vsel %vm941, %v925, 0
        %948 = vmatpush.bf16.xpose.msra.mxu0 0
        %949 = vmatpush.bf16.xpose.msra.mxu0 0
        %950 = vmatpush.bf16.xpose.msra.mxu0 0
        %951 = vmatpush.bf16.xpose.msra.mxu0 0
        %952 = vmatpush.bf16.xpose.msra.mxu0 0
        %953 = vmatpush.bf16.xpose.msra.mxu0 0
        %954 = vmatpush.bf16.xpose.msra.mxu0 0
        %955 = vmatpush.bf16.xpose.msra.mxu0 %v946
        %956 = vmatmul.bf16.gmra.mxu0 %v943
        %v957 = vpop.f32.mrf.mxu0
        %v958 = vadd.f32 0.0, %v957
        %v959 = vpop.f32.mrf.mxu0
        %960 = vdwg.mxu0
        %v962 = vsel %vm941, %v920, 0
        %v965 = vsel %vm941, %v928, 0
        %967 = vmatpush.bf16.xpose.msra.mxu0 0
        %968 = vmatpush.bf16.xpose.msra.mxu0 0
        %969 = vmatpush.bf16.xpose.msra.mxu0 0
        %970 = vmatpush.bf16.xpose.msra.mxu0 0
        %971 = vmatpush.bf16.xpose.msra.mxu0 0
        %972 = vmatpush.bf16.xpose.msra.mxu0 0
        %973 = vmatpush.bf16.xpose.msra.mxu0 0
        %974 = vmatpush.bf16.xpose.msra.mxu0 %v965
        %975 = vmatmul.bf16.gmra.mxu0 %v962
        %v976 = vpop.f32.mrf.mxu0
        %v977 = vadd.f32 0.0, %v976
        %v978 = vpop.f32.mrf.mxu0
        %979 = vdwg.mxu0
        %v981 = vsel %vm941, %v922, 0
        %v984 = vsel %vm941, %v930, 0
        %986 = vmatpush.bf16.xpose.msra.mxu0 0
        %987 = vmatpush.bf16.xpose.msra.mxu0 0
        %988 = vmatpush.bf16.xpose.msra.mxu0 0
        %989 = vmatpush.bf16.xpose.msra.mxu0 0
        %990 = vmatpush.bf16.xpose.msra.mxu0 0
        %991 = vmatpush.bf16.xpose.msra.mxu0 0
        %992 = vmatpush.bf16.xpose.msra.mxu0 0
        %993 = vmatpush.bf16.xpose.msra.mxu0 %v984
        %994 = vmatmul.bf16.gmra.mxu0 %v981
        %v995 = vpop.f32.mrf.mxu0
        %v996 = vadd.f32 0.0, %v995
        %v997 = vpop.f32.mrf.mxu0
        %998 = vdwg.mxu0
        %v1000 = vsel %vm941, %v924, 0
        %v1003 = vsel %vm941, %v932, 0
        %1005 = vmatpush.bf16.xpose.msra.mxu0 0
        %1006 = vmatpush.bf16.xpose.msra.mxu0 0
        %1007 = vmatpush.bf16.xpose.msra.mxu0 0
        %1008 = vmatpush.bf16.xpose.msra.mxu0 0
        %1009 = vmatpush.bf16.xpose.msra.mxu0 0
        %1010 = vmatpush.bf16.xpose.msra.mxu0 0
        %1011 = vmatpush.bf16.xpose.msra.mxu0 0
        %1012 = vmatpush.bf16.xpose.msra.mxu0 %v1003
        %1013 = vmatmul.bf16.gmra.mxu0 %v1000
        %v1014 = vpop.f32.mrf.mxu0
        %v1015 = vadd.f32 0.0, %v1014
        %v1016 = vpop.f32.mrf.mxu0
        %1017 = vdwg.mxu0
        %v1018 = vmul.f32 %v958, 0.35355338
        %v1019 = vmul.f32 %v977, 0.35355338
        %v1020 = vmul.f32 %v996, 0.35355338
        %v1021 = vmul.f32 %v1015, 0.35355338
        %v1022 = vsel %vm941, %v1018, -inf
        %1023 = vmax.xlane.f32.xlu0 %v1022
        %v1024 = vpop.xlane.xlu0 %1023
        %v1025 = vsel %vm941, %v1019, -inf
        %1026 = vmax.xlane.f32.xlu0 %v1025
        %v1027 = vpop.xlane.xlu0 %1026
        %v1028 = vsel %vm941, %v1020, -inf
        %1029 = vmax.xlane.f32.xlu0 %v1028
        %v1030 = vpop.xlane.xlu0 %1029
        %v1031 = vsel %vm941, %v1021, -inf
        %1032 = vmax.xlane.f32.xlu0 %v1031
        %v1033 = vpop.xlane.xlu0 %1032
        %v1034 = vsub.f32 %v1018, %v1024
        %v1035 = vsub.f32 %v1019, %v1027
        %v1036 = vsub.f32 %v1020, %v1030
        %v1037 = vsub.f32 %v1021, %v1033
        %v1038 = vmul.f32 %v1034, 1.442695
        %v1039 = vpow.pop %v1038
        %v1040 = vmul.f32 %v1035, 1.442695
        %v1041 = vpow.pop %v1040
        %v1042 = vmul.f32 %v1036, 1.442695
        %v1043 = vpow.pop %v1042
        %v1044 = vmul.f32 %v1037, 1.442695
        %v1045 = vpow.pop %v1044
        %v1046 = vsel %vm941, %v1039, 0.0
        %1047 = vadd.xlane.f32.xlu0 %v1046
        %v1048 = vpop.xlane.xlu0 %1047
        %v1049 = vsel %vm941, %v1041, 0.0
        %1050 = vadd.xlane.f32.xlu0 %v1049
        %v1051 = vpop.xlane.xlu0 %1050
        %v1052 = vsel %vm941, %v1043, 0.0
        %1053 = vadd.xlane.f32.xlu0 %v1052
        %v1054 = vpop.xlane.xlu0 %1053
        %v1055 = vsel %vm941, %v1045, 0.0
        %1056 = vadd.xlane.f32.xlu0 %v1055
        %v1057 = vpop.xlane.xlu0 %1056
        %v1058 = vrcp.pop %v1048
        %v1059 = vrcp.pop %v1051
        %v1060 = vrcp.pop %v1054
        %v1061 = vrcp.pop %v1057
        %v1062 = vmul.f32 %v1039, %v1058
        %v1063 = vmul.f32 %v1041, %v1059
        %v1064 = vmul.f32 %v1043, %v1060
        %v1065 = vmul.f32 %v1045, %v1061
        %v1066 = vpack.c.bf16 %v1062, %v1062
        %v1067 = vpack.c.bf16 %v1063, %v1063
        %v1068 = vpack.c.bf16 %v1064, %v1064
        %v1069 = vpack.c.bf16 %v1065, %v1065
        %v1070 = vunpack.c.l.b16 %v933
        %v1071 = vpack.c.b16 %v1070, %v1070
        %1072 = vrot.lane.b32.xlu0 %v1071, 96
        %v1073 = vpop.permute.xlu0 %1072
        %v1075 = vsel %vm941, %v1066, 0
        %vm1077 = vcmask 1043456
        %v1079 = vsel %vm1077, %v1073, 0
        %1081 = vmatpush.bf16.msra.mxu0 0
        %1082 = vmatpush.bf16.msra.mxu0 0
        %1083 = vmatpush.bf16.msra.mxu0 0
        %1084 = vmatpush.bf16.msra.mxu0 0
        %1085 = vmatpush.bf16.msra.mxu0 0
        %1086 = vmatpush.bf16.msra.mxu0 0
        %1087 = vmatpush.bf16.msra.mxu0 0
        %1088 = vmatpush.bf16.msra.mxu0 %v1079
        %1089 = vmatmul.bf16.gmra.mxu0 %v1075
        %v1090 = vpop.f32.mrf.mxu0
        %v1091 = vadd.f32 0.0, %v1090
        %v1092 = vpop.f32.mrf.mxu0
        %1093 = vdwg.mxu0
        %v1094 = vunpack.c.l.b16 %v936
        %v1095 = vpack.c.b16 %v1094, %v1094
        %1096 = vrot.lane.b32.xlu0 %v1095, 96
        %v1097 = vpop.permute.xlu0 %1096
        %v1099 = vsel %vm941, %v1067, 0
        %v1102 = vsel %vm1077, %v1097, 0
        %1104 = vmatpush.bf16.msra.mxu0 0
        %1105 = vmatpush.bf16.msra.mxu0 0
        %1106 = vmatpush.bf16.msra.mxu0 0
        %1107 = vmatpush.bf16.msra.mxu0 0
        %1108 = vmatpush.bf16.msra.mxu0 0
        %1109 = vmatpush.bf16.msra.mxu0 0
        %1110 = vmatpush.bf16.msra.mxu0 0
        %1111 = vmatpush.bf16.msra.mxu0 %v1102
        %1112 = vmatmul.bf16.gmra.mxu0 %v1099
        %v1113 = vpop.f32.mrf.mxu0
        %v1114 = vadd.f32 0.0, %v1113
        %v1115 = vpop.f32.mrf.mxu0
        %1116 = vdwg.mxu0
        %v1117 = vunpack.c.l.b16 %v938
        %v1118 = vpack.c.b16 %v1117, %v1117
        %1119 = vrot.lane.b32.xlu0 %v1118, 96
        %v1120 = vpop.permute.xlu0 %1119
        %v1122 = vsel %vm941, %v1068, 0
        %v1125 = vsel %vm1077, %v1120, 0
        %1127 = vmatpush.bf16.msra.mxu0 0
        %1128 = vmatpush.bf16.msra.mxu0 0
        %1129 = vmatpush.bf16.msra.mxu0 0
        %1130 = vmatpush.bf16.msra.mxu0 0
        %1131 = vmatpush.bf16.msra.mxu0 0
        %1132 = vmatpush.bf16.msra.mxu0 0
        %1133 = vmatpush.bf16.msra.mxu0 0
        %1134 = vmatpush.bf16.msra.mxu0 %v1125
        %1135 = vmatmul.bf16.gmra.mxu0 %v1122
        %v1136 = vpop.f32.mrf.mxu0
        %v1137 = vadd.f32 0.0, %v1136
        %v1138 = vpop.f32.mrf.mxu0
        %1139 = vdwg.mxu0
        %v1140 = vunpack.c.l.b16 %v940
        %v1141 = vpack.c.b16 %v1140, %v1140
        %1142 = vrot.lane.b32.xlu0 %v1141, 96
        %v1143 = vpop.permute.xlu0 %1142
        %v1145 = vsel %vm941, %v1069, 0
        %v1148 = vsel %vm1077, %v1143, 0
        %1150 = vmatpush.bf16.msra.mxu0 0
        %1151 = vmatpush.bf16.msra.mxu0 0
        %1152 = vmatpush.bf16.msra.mxu0 0
        %1153 = vmatpush.bf16.msra.mxu0 0
        %1154 = vmatpush.bf16.msra.mxu0 0
        %1155 = vmatpush.bf16.msra.mxu0 0
        %1156 = vmatpush.bf16.msra.mxu0 0
        %1157 = vmatpush.bf16.msra.mxu0 %v1148
        %1158 = vmatmul.bf16.gmra.mxu0 %v1145
        %v1159 = vpop.f32.mrf.mxu0
        %v1160 = vadd.f32 0.0, %v1159
        %v1161 = vpop.f32.mrf.mxu0
        %1162 = vdwg.mxu0
        %1164 = vrot.lane.b32.xlu0 %v1114, 8
        %v1165 = vpop.permute.xlu0 %1164
        %1168 = vrot.lane.b32.xlu0 %v1137, 16
        %v1169 = vpop.permute.xlu0 %1168
        %1172 = vrot.lane.b32.xlu0 %v1160, 24
        %v1173 = vpop.permute.xlu0 %1172
        %v1175 = vsel %vm941, %v1091, %v1165
        %vm1176 = vcmask 130048
        %v1177 = vsel %vm1176, %v1175, %v1169
        %vm1178 = vcmask 195584
        %v1179 = vsel %vm1178, %v1177, %v1173
        %v1180 = vpack.c.bf16 %v1179, %v1179
        %v1181 = vperm.slane %v815, 7
        %v1186 = vunpack.c.l.b16 %v799
        %v1187 = vunpack.c.l.b16 %v800
        %v1188 = vunpack.c.l.b16 %v801
        %v1189 = vunpack.c.l.b16 %v802
        %v1190 = vpack.c.b16 %v1187, %v1186
        %v1191 = vpack.c.b16 %v1189, %v1188
        %v1195 = vsel %vm817, %v1180, 0
        %1197 = vmatpush.bf16.msra.mxu0 0
        %1198 = vmatpush.bf16.msra.mxu0 0
        %1199 = vmatpush.bf16.msra.mxu0 0
        %1200 = vmatpush.bf16.msra.mxu0 0
        %1201 = vmatpush.bf16.msra.mxu0 0
        %1202 = vmatpush.bf16.msra.mxu0 0
        %1203 = vmatpush.bf16.msra.mxu0 %v1191
        %1204 = vmatpush.bf16.msra.mxu0 %v1190
        %1205 = vmatmul.bf16.gmra.mxu0 %v1195
        %v1206 = vpop.f32.mrf.mxu0
        %v1207 = vadd.f32 %v1181, %v1206
        %v1208 = vpop.f32.mrf.mxu0
        %1209 = vdwg.mxu0
        %v1210 = vadd.f32 %v789, %v1207
        %v1211 = vsel %vm817, %v1210, 0.0
        %1212 = vadd.xlane.f32.xlu0 %v1211
        %v1213 = vpop.xlane.xlu0 %1212
        %v1214 = vmul.f32 %v1213, %v827
        %v1215 = vsub.f32 %v1210, %v1214
        %v1216 = vmul.f32 %v1215, %v1215
        %v1217 = vsel %vm817, %v1216, 0.0
        %1218 = vadd.xlane.f32.xlu0 %v1217
        %v1219 = vpop.xlane.xlu0 %1218
        %v1220 = vmul.f32 %v1219, %v827
        %v1221 = vadd.f32 %v1220, 1e-05
        %v1222 = vrsqrt.pop %v1221
        %v1223 = vmul.f32 %v1222, %v1221
        %v1224 = vmul.f32 %v1223, %v1222
        %v1225 = vmul.f32 0.5, %v1224
        %v1226 = vsub.f32 1.5, %v1225
        %v1227 = vmul.f32 %v1222, %v1226
        %vm1228 = vweird.f32 %v1221
        %vm1229 = vweird.f32 %v1222
        %vm1230 = vmor %vm1228, %vm1229
        %v1231 = vsel %vm1230, %v1222, %v1227
        %v1232 = vmul.f32 %v1215, %v1231
        %v1233 = vperm.slane %v815, 2
        %v1234 = vmul.f32 %v1232, %v1233
        %v1235 = vperm.slane %v815, 3
        %v1236 = vadd.f32 %v1234, %v1235
        %v1237 = vpack.c.bf16 %v1236, %v1236
        %v1238 = vperm.slane %v816, 1
        %v1243 = vunpack.c.l.b16 %v803
        %v1244 = vunpack.c.l.b16 %v804
        %v1245 = vunpack.c.l.b16 %v805
        %v1246 = vunpack.c.l.b16 %v806
        %v1247 = vpack.c.b16 %v1244, %v1243
        %v1248 = vpack.c.b16 %v1246, %v1245
        %v1252 = vsel %vm817, %v1237, 0
        %1254 = vmatpush.bf16.msra.mxu0 0
        %1255 = vmatpush.bf16.msra.mxu0 0
        %1256 = vmatpush.bf16.msra.mxu0 0
        %1257 = vmatpush.bf16.msra.mxu0 0
        %1258 = vmatpush.bf16.msra.mxu0 0
        %1259 = vmatpush.bf16.msra.mxu0 0
        %1260 = vmatpush.bf16.msra.mxu0 %v1248
        %1261 = vmatpush.bf16.msra.mxu0 %v1247
        %1262 = vmatmul.bf16.gmra.mxu0 %v1252
        %v1263 = vpop.f32.mrf.mxu0
        %v1264 = vadd.f32 %v1238, %v1263
        %v1265 = vpop.f32.mrf.mxu0
        %1266 = vdwg.mxu0
        %v1267 = vmax.f32 %v1264, 0.0
        %v1268 = vpack.c.bf16 %v1267, %v1267
        %v1269 = vperm.slane %v816, 0
        %v1278 = vunpack.c.l.b16 %v807
        %v1279 = vunpack.c.l.b16 %v808
        %v1280 = vunpack.c.l.b16 %v809
        %v1281 = vunpack.c.l.b16 %v810
        %v1282 = vunpack.c.l.b16 %v811
        %v1283 = vunpack.c.l.b16 %v812
        %v1284 = vunpack.c.l.b16 %v813
        %v1285 = vunpack.c.l.b16 %v814
        %v1286 = vpack.c.b16 %v1279, %v1278
        %v1287 = vpack.c.b16 %v1281, %v1280
        %v1288 = vpack.c.b16 %v1283, %v1282
        %v1289 = vpack.c.b16 %v1285, %v1284
        %vm1294 = vcmask 523264
        %v1296 = vsel %vm1294, %v1268, 0
        %1298 = vmatpush.bf16.msra.mxu0 0
        %1299 = vmatpush.bf16.msra.mxu0 0
        %1300 = vmatpush.bf16.msra.mxu0 0
        %1301 = vmatpush.bf16.msra.mxu0 0
        %1302 = vmatpush.bf16.msra.mxu0 %v1289
        %1303 = vmatpush.bf16.msra.mxu0 %v1288
        %1304 = vmatpush.bf16.msra.mxu0 %v1287
        %1305 = vmatpush.bf16.msra.mxu0 %v1286
        %1306 = vmatmul.bf16.gmra.mxu0 %v1296
        %v1307 = vpop.f32.mrf.mxu0
        %v1308 = vadd.f32 %v1269, %v1307
        %v1309 = vpop.f32.mrf.mxu0
        %1310 = vdwg.mxu0
        %v1311 = vadd.f32 %v1210, %v1308
        %v1312 = vld [vmem:[%s757] sm:$0xf]
        %v1313 = vld [vmem:[%s757 + $0x4] sm:$0xf]
        %v1314 = vld [vmem:[%s757 + $0x8] sm:$0xf]
        %v1315 = vld [vmem:[%s757 + $0xc] sm:$0xf]
        %v1316 = vld [vmem:[%s762] sm:$0xf]
        %v1317 = vld [vmem:[%s762 + $0x4] sm:$0xf]
        %v1318 = vld [vmem:[%s762 + $0x8] sm:$0xf]
        %v1319 = vld [vmem:[%s762 + $0xc] sm:$0xf]
        %v1320 = vld [vmem:[%s601] sm:$0xf]
        %v1321 = vld [vmem:[%s601 + $0x4] sm:$0xf]
        %v1322 = vld [vmem:[%s601 + $0x8] sm:$0xf]
        %v1323 = vld [vmem:[%s601 + $0xc] sm:$0xf]
        %v1324 = vld [vmem:[%s611] sm:$0xf]
        %v1325 = vld [vmem:[%s611 + $0x4] sm:$0xf]
        %v1326 = vld [vmem:[%s611 + $0x8] sm:$0xf]
        %v1327 = vld [vmem:[%s611 + $0xc] sm:$0xf]
        %v1328 = vld [vmem:[%s767] sm:$0xf]
        %v1329 = vld [vmem:[%s767 + $0x4] sm:$0xf]
        %v1330 = vld [vmem:[%s767 + $0x8] sm:$0xf]
        %v1331 = vld [vmem:[%s767 + $0xc] sm:$0xf]
        %v1332 = vld [vmem:[%s767 + $0x10] sm:$0xf]
        %v1333 = vld [vmem:[%s767 + $0x14] sm:$0xf]
        %v1334 = vld [vmem:[%s767 + $0x18] sm:$0xf]
        %v1335 = vld [vmem:[%s767 + $0x1c] sm:$0xf]
        %v1336 = vld [vmem:[%s772] sm:$0xff]
        %v1337 = vld [vmem:[%s772 + $0x8] sm:$0x3]
        %v1338 = vsel %vm817, %v1311, 0.0
        %1339 = vadd.xlane.f32.xlu0 %v1338
        %v1340 = vpop.xlane.xlu0 %1339
        %v1341 = vmul.f32 %v1340, %v827
        %v1342 = vsub.f32 %v1311, %v1341
        %v1343 = vmul.f32 %v1342, %v1342
        %v1344 = vsel %vm817, %v1343, 0.0
        %1345 = vadd.xlane.f32.xlu0 %v1344
        %v1346 = vpop.xlane.xlu0 %1345
        %v1347 = vmul.f32 %v1346, %v827
        %v1348 = vadd.f32 %v1347, 1e-05
        %v1349 = vrsqrt.pop %v1348
        %v1350 = vmul.f32 %v1349, %v1348
        %v1351 = vmul.f32 %v1350, %v1349
        %v1352 = vmul.f32 0.5, %v1351
        %v1353 = vsub.f32 1.5, %v1352
        %v1354 = vmul.f32 %v1349, %v1353
        %vm1355 = vweird.f32 %v1348
        %vm1356 = vweird.f32 %v1349
        %vm1357 = vmor %vm1355, %vm1356
        %v1358 = vsel %vm1357, %v1349, %v1354
        %v1359 = vmul.f32 %v1342, %v1358
        %v1360 = vperm.slane %v1336, 0
        %v1361 = vmul.f32 %v1359, %v1360
        %v1362 = vperm.slane %v1336, 1
        %v1363 = vadd.f32 %v1361, %v1362
        %v1364 = vpack.c.bf16 %v1363, %v1363
        %v1365 = vperm.slane %v1336, 4
        %v1370 = vunpack.c.l.b16 %v1312
        %v1371 = vunpack.c.l.b16 %v1313
        %v1372 = vunpack.c.l.b16 %v1314
        %v1373 = vunpack.c.l.b16 %v1315
        %v1374 = vpack.c.b16 %v1371, %v1370
        %v1375 = vpack.c.b16 %v1373, %v1372
        %v1379 = vsel %vm817, %v1364, 0
        %1381 = vmatpush.bf16.msra.mxu0 0
        %1382 = vmatpush.bf16.msra.mxu0 0
        %1383 = vmatpush.bf16.msra.mxu0 0
        %1384 = vmatpush.bf16.msra.mxu0 0
        %1385 = vmatpush.bf16.msra.mxu0 0
        %1386 = vmatpush.bf16.msra.mxu0 0
        %1387 = vmatpush.bf16.msra.mxu0 %v1375
        %1388 = vmatpush.bf16.msra.mxu0 %v1374
        %1389 = vmatmul.bf16.gmra.mxu0 %v1379
        %v1390 = vpop.f32.mrf.mxu0
        %v1391 = vadd.f32 %v1365, %v1390
        %v1392 = vpop.f32.mrf.mxu0
        %1393 = vdwg.mxu0
        %v1398 = vunpack.c.l.b16 %v1316
        %v1399 = vunpack.c.l.b16 %v1317
        %v1400 = vunpack.c.l.b16 %v1318
        %v1401 = vunpack.c.l.b16 %v1319
        %v1402 = vpack.c.b16 %v1399, %v1398
        %v1403 = vpack.c.b16 %v1401, %v1400
        %1406 = vmatpush.bf16.msra.mxu0 0
        %1407 = vmatpush.bf16.msra.mxu0 0
        %1408 = vmatpush.bf16.msra.mxu0 0
        %1409 = vmatpush.bf16.msra.mxu0 0
        %1410 = vmatpush.bf16.msra.mxu0 0
        %1411 = vmatpush.bf16.msra.mxu0 0
        %1412 = vmatpush.bf16.msra.mxu0 %v1403
        %1413 = vmatpush.bf16.msra.mxu0 %v1402
        %1414 = vmatmul.bf16.gmra.mxu0 %v1379
        %v1415 = vpop.f32.mrf.mxu0
        %v1416 = vadd.f32 0.0, %v1415
        %v1417 = vpop.f32.mrf.mxu0
        %1418 = vdwg.mxu0
        %v1419 = vperm.slane %v1336, 5
        %v1420 = vadd.f32 %v1416, %v1419
        %v1421 = vperm.slane %v1336, 6
        %1423 = vrot.lane.b32.xlu0 %v1421, 32
        %v1424 = vpop.permute.xlu0 %1423
        %v1426 = vadd.f32 %v1416, %v1424
        %v1427 = vpack.c.bf16 %v1391, %v1391
        %1429 = vrot.lane.b32.xlu0 %v1427, 120
        %v1430 = vpop.permute.xlu0 %1429
        %1431 = vrot.lane.b32.xlu0 %v1427, 112
        %v1432 = vpop.permute.xlu0 %1431
        %1433 = vrot.lane.b32.xlu0 %v1427, 104
        %v1434 = vpop.permute.xlu0 %1433
        %v1435 = vpack.c.bf16 %v1420, %v1420
        %1437 = vrot.lane.b32.xlu0 %v1435, 120
        %v1438 = vpop.permute.xlu0 %1437
        %1439 = vrot.lane.b32.xlu0 %v1435, 112
        %v1440 = vpop.permute.xlu0 %1439
        %1441 = vrot.lane.b32.xlu0 %v1435, 104
        %v1442 = vpop.permute.xlu0 %1441
        %v1443 = vpack.c.bf16 %v1426, %v1426
        %1445 = vrot.lane.b32.xlu0 %v1443, 120
        %v1446 = vpop.permute.xlu0 %1445
        %1447 = vrot.lane.b32.xlu0 %v1443, 112
        %v1448 = vpop.permute.xlu0 %1447
        %1449 = vrot.lane.b32.xlu0 %v1443, 104
        %v1450 = vpop.permute.xlu0 %1449
        %v1452 = vsel %vm941, %v1427, 0
        %v1455 = vsel %vm941, %v1435, 0
        %1457 = vmatpush.bf16.xpose.msra.mxu0 0
        %1458 = vmatpush.bf16.xpose.msra.mxu0 0
        %1459 = vmatpush.bf16.xpose.msra.mxu0 0
        %1460 = vmatpush.bf16.xpose.msra.mxu0 0
        %1461 = vmatpush.bf16.xpose.msra.mxu0 0
        %1462 = vmatpush.bf16.xpose.msra.mxu0 0
        %1463 = vmatpush.bf16.xpose.msra.mxu0 0
        %1464 = vmatpush.bf16.xpose.msra.mxu0 %v1455
        %1465 = vmatmul.bf16.gmra.mxu0 %v1452
        %v1466 = vpop.f32.mrf.mxu0
        %v1467 = vadd.f32 0.0, %v1466
        %v1468 = vpop.f32.mrf.mxu0
        %1469 = vdwg.mxu0
        %v1471 = vsel %vm941, %v1430, 0
        %v1474 = vsel %vm941, %v1438, 0
        %1476 = vmatpush.bf16.xpose.msra.mxu0 0
        %1477 = vmatpush.bf16.xpose.msra.mxu0 0
        %1478 = vmatpush.bf16.xpose.msra.mxu0 0
        %1479 = vmatpush.bf16.xpose.msra.mxu0 0
        %1480 = vmatpush.bf16.xpose.msra.mxu0 0
        %1481 = vmatpush.bf16.xpose.msra.mxu0 0
        %1482 = vmatpush.bf16.xpose.msra.mxu0 0
        %1483 = vmatpush.bf16.xpose.msra.mxu0 %v1474
        %1484 = vmatmul.bf16.gmra.mxu0 %v1471
        %v1485 = vpop.f32.mrf.mxu0
        %v1486 = vadd.f32 0.0, %v1485
        %v1487 = vpop.f32.mrf.mxu0
        %1488 = vdwg.mxu0
        %v1490 = vsel %vm941, %v1432, 0
        %v1493 = vsel %vm941, %v1440, 0
        %1495 = vmatpush.bf16.xpose.msra.mxu0 0
        %1496 = vmatpush.bf16.xpose.msra.mxu0 0
        %1497 = vmatpush.bf16.xpose.msra.mxu0 0
        %1498 = vmatpush.bf16.xpose.msra.mxu0 0
        %1499 = vmatpush.bf16.xpose.msra.mxu0 0
        %1500 = vmatpush.bf16.xpose.msra.mxu0 0
        %1501 = vmatpush.bf16.xpose.msra.mxu0 0
        %1502 = vmatpush.bf16.xpose.msra.mxu0 %v1493
        %1503 = vmatmul.bf16.gmra.mxu0 %v1490
        %v1504 = vpop.f32.mrf.mxu0
        %v1505 = vadd.f32 0.0, %v1504
        %v1506 = vpop.f32.mrf.mxu0
        %1507 = vdwg.mxu0
        %v1509 = vsel %vm941, %v1434, 0
        %v1512 = vsel %vm941, %v1442, 0
        %1514 = vmatpush.bf16.xpose.msra.mxu0 0
        %1515 = vmatpush.bf16.xpose.msra.mxu0 0
        %1516 = vmatpush.bf16.xpose.msra.mxu0 0
        %1517 = vmatpush.bf16.xpose.msra.mxu0 0
        %1518 = vmatpush.bf16.xpose.msra.mxu0 0
        %1519 = vmatpush.bf16.xpose.msra.mxu0 0
        %1520 = vmatpush.bf16.xpose.msra.mxu0 0
        %1521 = vmatpush.bf16.xpose.msra.mxu0 %v1512
        %1522 = vmatmul.bf16.gmra.mxu0 %v1509
        %v1523 = vpop.f32.mrf.mxu0
        %v1524 = vadd.f32 0.0, %v1523
        %v1525 = vpop.f32.mrf.mxu0
        %1526 = vdwg.mxu0
        %v1527 = vmul.f32 %v1467, 0.35355338
        %v1528 = vmul.f32 %v1486, 0.35355338
        %v1529 = vmul.f32 %v1505, 0.35355338
        %v1530 = vmul.f32 %v1524, 0.35355338
        %v1531 = vsel %vm941, %v1527, -inf
        %1532 = vmax.xlane.f32.xlu0 %v1531
        %v1533 = vpop.xlane.xlu0 %1532
        %v1534 = vsel %vm941, %v1528, -inf
        %1535 = vmax.xlane.f32.xlu0 %v1534
        %v1536 = vpop.xlane.xlu0 %1535
        %v1537 = vsel %vm941, %v1529, -inf
        %1538 = vmax.xlane.f32.xlu0 %v1537
        %v1539 = vpop.xlane.xlu0 %1538
        %v1540 = vsel %vm941, %v1530, -inf
        %1541 = vmax.xlane.f32.xlu0 %v1540
        %v1542 = vpop.xlane.xlu0 %1541
        %v1543 = vsub.f32 %v1527, %v1533
        %v1544 = vsub.f32 %v1528, %v1536
        %v1545 = vsub.f32 %v1529, %v1539
        %v1546 = vsub.f32 %v1530, %v1542
        %v1547 = vmul.f32 %v1543, 1.442695
        %v1548 = vpow.pop %v1547
        %v1549 = vmul.f32 %v1544, 1.442695
        %v1550 = vpow.pop %v1549
        %v1551 = vmul.f32 %v1545, 1.442695
        %v1552 = vpow.pop %v1551
        %v1553 = vmul.f32 %v1546, 1.442695
        %v1554 = vpow.pop %v1553
        %v1555 = vsel %vm941, %v1548, 0.0
        %1556 = vadd.xlane.f32.xlu0 %v1555
        %v1557 = vpop.xlane.xlu0 %1556
        %v1558 = vsel %vm941, %v1550, 0.0
        %1559 = vadd.xlane.f32.xlu0 %v1558
        %v1560 = vpop.xlane.xlu0 %1559
        %v1561 = vsel %vm941, %v1552, 0.0
        %1562 = vadd.xlane.f32.xlu0 %v1561
        %v1563 = vpop.xlane.xlu0 %1562
        %v1564 = vsel %vm941, %v1554, 0.0
        %1565 = vadd.xlane.f32.xlu0 %v1564
        %v1566 = vpop.xlane.xlu0 %1565
        %v1567 = vrcp.pop %v1557
        %v1568 = vrcp.pop %v1560
        %v1569 = vrcp.pop %v1563
        %v1570 = vrcp.pop %v1566
        %v1571 = vmul.f32 %v1548, %v1567
        %v1572 = vmul.f32 %v1550, %v1568
        %v1573 = vmul.f32 %v1552, %v1569
        %v1574 = vmul.f32 %v1554, %v1570
        %v1575 = vpack.c.bf16 %v1571, %v1571
        %v1576 = vpack.c.bf16 %v1572, %v1572
        %v1577 = vpack.c.bf16 %v1573, %v1573
        %v1578 = vpack.c.bf16 %v1574, %v1574
        %v1579 = vunpack.c.l.b16 %v1443
        %v1580 = vpack.c.b16 %v1579, %v1579
        %1581 = vrot.lane.b32.xlu0 %v1580, 96
        %v1582 = vpop.permute.xlu0 %1581
        %v1584 = vsel %vm941, %v1575, 0
        %v1587 = vsel %vm1077, %v1582, 0
        %1589 = vmatpush.bf16.msra.mxu0 0
        %1590 = vmatpush.bf16.msra.mxu0 0
        %1591 = vmatpush.bf16.msra.mxu0 0
        %1592 = vmatpush.bf16.msra.mxu0 0
        %1593 = vmatpush.bf16.msra.mxu0 0
        %1594 = vmatpush.bf16.msra.mxu0 0
        %1595 = vmatpush.bf16.msra.mxu0 0
        %1596 = vmatpush.bf16.msra.mxu0 %v1587
        %1597 = vmatmul.bf16.gmra.mxu0 %v1584
        %v1598 = vpop.f32.mrf.mxu0
        %v1599 = vadd.f32 0.0, %v1598
        %v1600 = vpop.f32.mrf.mxu0
        %1601 = vdwg.mxu0
        %v1602 = vunpack.c.l.b16 %v1446
        %v1603 = vpack.c.b16 %v1602, %v1602
        %1604 = vrot.lane.b32.xlu0 %v1603, 96
        %v1605 = vpop.permute.xlu0 %1604
        %v1607 = vsel %vm941, %v1576, 0
        %v1610 = vsel %vm1077, %v1605, 0
        %1612 = vmatpush.bf16.msra.mxu0 0
        %1613 = vmatpush.bf16.msra.mxu0 0
        %1614 = vmatpush.bf16.msra.mxu0 0
        %1615 = vmatpush.bf16.msra.mxu0 0
        %1616 = vmatpush.bf16.msra.mxu0 0
        %1617 = vmatpush.bf16.msra.mxu0 0
        %1618 = vmatpush.bf16.msra.mxu0 0
        %1619 = vmatpush.bf16.msra.mxu0 %v1610
        %1620 = vmatmul.bf16.gmra.mxu0 %v1607
        %v1621 = vpop.f32.mrf.mxu0
        %v1622 = vadd.f32 0.0, %v1621
        %v1623 = vpop.f32.mrf.mxu0
        %1624 = vdwg.mxu0
        %v1625 = vunpack.c.l.b16 %v1448
        %v1626 = vpack.c.b16 %v1625, %v1625
        %1627 = vrot.lane.b32.xlu0 %v1626, 96
        %v1628 = vpop.permute.xlu0 %1627
        %v1630 = vsel %vm941, %v1577, 0
        %v1633 = vsel %vm1077, %v1628, 0
        %1635 = vmatpush.bf16.msra.mxu0 0
        %1636 = vmatpush.bf16.msra.mxu0 0
        %1637 = vmatpush.bf16.msra.mxu0 0
        %1638 = vmatpush.bf16.msra.mxu0 0
        %1639 = vmatpush.bf16.msra.mxu0 0
        %1640 = vmatpush.bf16.msra.mxu0 0
        %1641 = vmatpush.bf16.msra.mxu0 0
        %1642 = vmatpush.bf16.msra.mxu0 %v1633
        %1643 = vmatmul.bf16.gmra.mxu0 %v1630
        %v1644 = vpop.f32.mrf.mxu0
        %v1645 = vadd.f32 0.0, %v1644
        %v1646 = vpop.f32.mrf.mxu0
        %1647 = vdwg.mxu0
        %v1648 = vunpack.c.l.b16 %v1450
        %v1649 = vpack.c.b16 %v1648, %v1648
        %1650 = vrot.lane.b32.xlu0 %v1649, 96
        %v1651 = vpop.permute.xlu0 %1650
        %v1653 = vsel %vm941, %v1578, 0
        %v1656 = vsel %vm1077, %v1651, 0
        %1658 = vmatpush.bf16.msra.mxu0 0
        %1659 = vmatpush.bf16.msra.mxu0 0
        %1660 = vmatpush.bf16.msra.mxu0 0
        %1661 = vmatpush.bf16.msra.mxu0 0
        %1662 = vmatpush.bf16.msra.mxu0 0
        %1663 = vmatpush.bf16.msra.mxu0 0
        %1664 = vmatpush.bf16.msra.mxu0 0
        %1665 = vmatpush.bf16.msra.mxu0 %v1656
        %1666 = vmatmul.bf16.gmra.mxu0 %v1653
        %v1667 = vpop.f32.mrf.mxu0
        %v1668 = vadd.f32 0.0, %v1667
        %v1669 = vpop.f32.mrf.mxu0
        %1670 = vdwg.mxu0
        %1672 = vrot.lane.b32.xlu0 %v1622, 8
        %v1673 = vpop.permute.xlu0 %1672
        %1676 = vrot.lane.b32.xlu0 %v1645, 16
        %v1677 = vpop.permute.xlu0 %1676
        %1680 = vrot.lane.b32.xlu0 %v1668, 24
        %v1681 = vpop.permute.xlu0 %1680
        %v1683 = vsel %vm941, %v1599, %v1673
        %v1684 = vsel %vm1176, %v1683, %v1677
        %v1685 = vsel %vm1178, %v1684, %v1681
        %v1686 = vpack.c.bf16 %v1685, %v1685
        %v1687 = vperm.slane %v1336, 7
        %v1692 = vunpack.c.l.b16 %v1320
        %v1693 = vunpack.c.l.b16 %v1321
        %v1694 = vunpack.c.l.b16 %v1322
        %v1695 = vunpack.c.l.b16 %v1323
        %v1696 = vpack.c.b16 %v1693, %v1692
        %v1697 = vpack.c.b16 %v1695, %v1694
        %v1701 = vsel %vm817, %v1686, 0
        %1703 = vmatpush.bf16.msra.mxu0 0
        %1704 = vmatpush.bf16.msra.mxu0 0
        %1705 = vmatpush.bf16.msra.mxu0 0
        %1706 = vmatpush.bf16.msra.mxu0 0
        %1707 = vmatpush.bf16.msra.mxu0 0
        %1708 = vmatpush.bf16.msra.mxu0 0
        %1709 = vmatpush.bf16.msra.mxu0 %v1697
        %1710 = vmatpush.bf16.msra.mxu0 %v1696
        %1711 = vmatmul.bf16.gmra.mxu0 %v1701
        %v1712 = vpop.f32.mrf.mxu0
        %v1713 = vadd.f32 %v1687, %v1712
        %v1714 = vpop.f32.mrf.mxu0
        %1715 = vdwg.mxu0
        %v1716 = vadd.f32 %v1311, %v1713
        %v1717 = vsel %vm817, %v1716, 0.0
        %1718 = vadd.xlane.f32.xlu0 %v1717
        %v1719 = vpop.xlane.xlu0 %1718
        %v1720 = vmul.f32 %v1719, %v827
        %v1721 = vsub.f32 %v1716, %v1720
        %v1722 = vmul.f32 %v1721, %v1721
        %v1723 = vsel %vm817, %v1722, 0.0
        %1724 = vadd.xlane.f32.xlu0 %v1723
        %v1725 = vpop.xlane.xlu0 %1724
        %v1726 = vmul.f32 %v1725, %v827
        %v1727 = vadd.f32 %v1726, 1e-05
        %v1728 = vrsqrt.pop %v1727
        %v1729 = vmul.f32 %v1728, %v1727
        %v1730 = vmul.f32 %v1729, %v1728
        %v1731 = vmul.f32 0.5, %v1730
        %v1732 = vsub.f32 1.5, %v1731
        %v1733 = vmul.f32 %v1728, %v1732
        %vm1734 = vweird.f32 %v1727
        %vm1735 = vweird.f32 %v1728
        %vm1736 = vmor %vm1734, %vm1735
        %v1737 = vsel %vm1736, %v1728, %v1733
        %v1738 = vmul.f32 %v1721, %v1737
        %v1739 = vperm.slane %v1336, 2
        %v1740 = vmul.f32 %v1738, %v1739
        %v1741 = vperm.slane %v1336, 3
        %v1742 = vadd.f32 %v1740, %v1741
        %v1743 = vpack.c.bf16 %v1742, %v1742
        %v1744 = vperm.slane %v1337, 1
        %v1749 = vunpack.c.l.b16 %v1324
        %v1750 = vunpack.c.l.b16 %v1325
        %v1751 = vunpack.c.l.b16 %v1326
        %v1752 = vunpack.c.l.b16 %v1327
        %v1753 = vpack.c.b16 %v1750, %v1749
        %v1754 = vpack.c.b16 %v1752, %v1751
        %v1758 = vsel %vm817, %v1743, 0
        %1760 = vmatpush.bf16.msra.mxu0 0
        %1761 = vmatpush.bf16.msra.mxu0 0
        %1762 = vmatpush.bf16.msra.mxu0 0
        %1763 = vmatpush.bf16.msra.mxu0 0
        %1764 = vmatpush.bf16.msra.mxu0 0
        %1765 = vmatpush.bf16.msra.mxu0 0
        %1766 = vmatpush.bf16.msra.mxu0 %v1754
        %1767 = vmatpush.bf16.msra.mxu0 %v1753
        %1768 = vmatmul.bf16.gmra.mxu0 %v1758
        %v1769 = vpop.f32.mrf.mxu0
        %v1770 = vadd.f32 %v1744, %v1769
        %v1771 = vpop.f32.mrf.mxu0
        %1772 = vdwg.mxu0
        %v1773 = vmax.f32 %v1770, 0.0
        %v1774 = vpack.c.bf16 %v1773, %v1773
        %v1775 = vperm.slane %v1337, 0
        %v1784 = vunpack.c.l.b16 %v1328
        %v1785 = vunpack.c.l.b16 %v1329
        %v1786 = vunpack.c.l.b16 %v1330
        %v1787 = vunpack.c.l.b16 %v1331
        %v1788 = vunpack.c.l.b16 %v1332
        %v1789 = vunpack.c.l.b16 %v1333
        %v1790 = vunpack.c.l.b16 %v1334
        %v1791 = vunpack.c.l.b16 %v1335
        %v1792 = vpack.c.b16 %v1785, %v1784
        %v1793 = vpack.c.b16 %v1787, %v1786
        %v1794 = vpack.c.b16 %v1789, %v1788
        %v1795 = vpack.c.b16 %v1791, %v1790
        %v1801 = vsel %vm1294, %v1774, 0
        %1803 = vmatpush.bf16.msra.mxu0 0
        %1804 = vmatpush.bf16.msra.mxu0 0
        %1805 = vmatpush.bf16.msra.mxu0 0
        %1806 = vmatpush.bf16.msra.mxu0 0
        %1807 = vmatpush.bf16.msra.mxu0 %v1795
        %1808 = vmatpush.bf16.msra.mxu0 %v1794
        %1809 = vmatpush.bf16.msra.mxu0 %v1793
        %1810 = vmatpush.bf16.msra.mxu0 %v1792
        %1811 = vmatmul.bf16.gmra.mxu0 %v1801
        %v1812 = vpop.f32.mrf.mxu0
        %v1813 = vadd.f32 %v1775, %v1812
        %v1814 = vpop.f32.mrf.mxu0
        %1815 = vdwg.mxu0
        %v1816 = vadd.f32 %v1716, %v1813
        %1817 = vst.msk [vmem:[#allocation2] sm:$0xff] %vm817, %v1816
        %v1818 = vpack.c.bf16 %v1816, %v1816
        %vm1819 = vcmask 257024
        %1820 = vst.msk [vmem:[%s780] sm:$0xf] %vm1819, %v1818
        %p1821 = scmp.lt.s32.totalorder %s33, 1
        %s1822 = scalar_select %p1821, %s33, 1
        %p1823 = scmp.lt.s32.totalorder %s34, 1
        %s1824 = scalar_select %p1823, %s34, 1
        %s1825 = smul.addr %s1822, 2
        %s1826 = sadd.s32 %s1824, %s1825
        %s1827 = smul.addr %s1826, 4
        %s1828 = scalar_lea.vmem %s14, %s1827
        // Predicated region
        $region93: #{lbanp_forward.6} parent=75 // pred_check
          %p1829 = pneg %p420
        $region94: #{lbanp_forward.6} parent=75 // pred_check_branch
          %1831 = sbr.rel (%p1829) target = $region96
        $region95: #{lbanp_forward.6} parent=75 // pred_region
          _
        $region96: #{lbanp_forward.6} parent=75 // pred_fallthru
          _
      $region76: #{lbanp_forward.6} parent=5 // pred_fallthru
        _
      %p1832 = scmp.le.s32.totalorder 2, %s24
      // Predicated region
      $region97: #{lbanp_forward.6} parent=5 // pred_check
        %p1833 = pneg %p1832
      $region98: #{lbanp_forward.6} parent=5 // pred_check_branch
        %1835 = sbr.rel (%p1833) target = $region100
      $region99: #{lbanp_forward.6} parent=5 // pred_region
        %s1836 = ssub.s32 %s24, 2
        // Predicated region
        $region101: #{lbanp_forward.6} parent=99 // pred_check
          %p1837 = pneg %p426
        $region102: #{lbanp_forward.6} parent=99 // pred_check_branch
          %1839 = sbr.rel (%p1837) target = $region104
        $region103: #{lbanp_forward.6} parent=99 // pred_region
          %p1840 = scmp.lt.s32.totalorder %s35, 1
          %s1841 = scalar_select %p1840, %s35, 1
          %p1842 = scmp.lt.s32.totalorder %s36, 1
          %s1843 = scalar_select %p1842, %s36, 1
          %s1844 = smul.addr %s1841, 2
          %s1845 = sadd.s32 %s1843, %s1844
          %s1846 = smul.addr %s1845, 4
          %s1847 = scalar_lea.vmem %s14, %s1846
        $region104: #{lbanp_forward.6} parent=99 // pred_fallthru
          _
      $region100: #{lbanp_forward.6} parent=5 // pred_fallthru
        _
    $region6: #{lbanp_forward.6} parent=1 // loop_footer
      %s28 = sadd.s32 1, %s24
    $region7: #{lbanp_forward.6} parent=1 // loop_footer_branch
      %23 = sbr.rel target = $region3
    $region8: #{lbanp_forward.6} parent=1 // loop_exit
      _
    %1848 = vsyncpa [#allocation4], 1
    %s1849 = scalar_lea.sflag [#allocation4], 1
    %1850 = vsyncpa %s1849, 1
    %1851 = vsyncpa [#allocation6], 1
    %s1852 = scalar_lea.sflag [#allocation6], 1
    %1853 = vsyncpa %s1852, 1

</llo_original>
